<compile_context>
chip_gen: v6e
topology: v6e:2x2x1
jax: 0.10.0
libtpu: 0.0.40
codegen_flags: <defaults>
</compile_context>

<pallas_src>
import functools

import jax
import jax.numpy as jnp
from jax.experimental import pallas as pl
from jax.experimental.pallas import tpu as pltpu

N_BLOCKS = 3      # stack of 3 CVResblocks (same as previously validated kernel)
EPS = 1e-5        # nn.LayerNorm default eps


# ----------------------------- Pallas kernel -----------------------------
def cv_resblock_stack_kernel(theta_ref,            # scalar prefetch: (N_BLOCKS, 2) SMEM
                             x_ref,                # (2F, TB)  VMEM  [real rows | imag rows]
                             wc_ref,               # (N_BLOCKS, 2, 2F, 2F) VMEM combined weights
                             g_ref, b_ref,         # (N_BLOCKS, 2, 2F, 1)  VMEM LN gamma/beta
                             o_ref):               # (2F, TB)  VMEM output
    f2 = x_ref.shape[0]
    f = f2 // 2

    def layernorm_half(y):
        # LayerNorm over the feature axis (sublanes), per batch column (lanes).
        mu = jnp.mean(y, axis=0, keepdims=True)
        var = jnp.mean((y - mu) * (y - mu), axis=0, keepdims=True)
        return (y - mu) * jax.lax.rsqrt(var + EPS)

    def cv_layernorm(y, gamma, beta):
        nr = layernorm_half(y[0:f])
        ni = layernorm_half(y[f:f2])
        n = jnp.concatenate([nr, ni], axis=0)
        return n * gamma + beta                    # gamma/beta: (2F, 1) broadcast over lanes

    def cv_soft_threshold(y, theta):
        yr = y[0:f]
        yi = y[f:f2]
        s = yr * yr + yi * yi
        inv = jax.lax.rsqrt(s + 1e-30)             # eps guard: |x|=0 -> scale 0 (no NaN)
        mag = s * inv                              # ~ |x|
        scale = jnp.maximum(mag - theta, 0.0) * inv
        return jnp.concatenate([yr * scale, yi * scale], axis=0)

    x = x_ref[...]
    # N_BLOCKS is small and static -> fully unrolled; LLO scheduler sees everything.
    for blk in range(N_BLOCKS):
        identity = x
        # CVLinear 1 (fused complex matmul: one real 2Fx2F dot on the MXU)
        y = jnp.dot(wc_ref[blk, 0], x, preferred_element_type=jnp.float32)
        # CVLayerNorm 1
        y = cv_layernorm(y, g_ref[blk, 0], b_ref[blk, 0])
        # inner CVSoftThreshold
        y = cv_soft_threshold(y, theta_ref[blk, 0])
        # CVLinear 2
        y = jnp.dot(wc_ref[blk, 1], y, preferred_element_type=jnp.float32)
        # CVLayerNorm 2
        y = cv_layernorm(y, g_ref[blk, 1], b_ref[blk, 1])
        # residual add + outer CVSoftThreshold
        y = y + identity
        x = cv_soft_threshold(y, theta_ref[blk, 1])

    o_ref[...] = x


# ----------------------------- wrapper -----------------------------
@functools.partial(jax.jit, static_argnames=("tile_b",))
def cv_resblock_stack_pallas(x_r, x_i, w_r, w_i, gamma, beta, theta, *, tile_b=512):
    """x_r, x_i: (N, F) float32.  Returns (out_r, out_i): (N, F) float32."""
    n, f = x_r.shape
    nb = w_r.shape[0]
    f2 = 2 * f
    assert tile_b % 128 == 0, "tile_b must be a multiple of 128 (lane width)"

    # ---- layout plumbing (done once, outside the kernel) ----
    # Lane-dense slab: (2F, N_pad), real features on top, imag features below.
    n_pad = ((n + tile_b - 1) // tile_b) * tile_b
    x = jnp.concatenate([x_r.T, x_i.T], axis=0)                      # (2F, N)
    if n_pad != n:
        x = jnp.pad(x, ((0, 0), (0, n_pad - n)))

    # Combined complex->real weights for Y = Wc @ X  (X = [xr^T; xi^T]):
    #   Wc = [[Wr, -Wi], [Wi, Wr]]   =>  yr^T = Wr xr^T - Wi xi^T, yi^T = Wi xr^T + Wr xi^T
    top = jnp.concatenate([w_r, -w_i], axis=-1)                      # (nb, 2, F, 2F)
    bot = jnp.concatenate([w_i, w_r], axis=-1)                       # (nb, 2, F, 2F)
    wc = jnp.concatenate([top, bot], axis=-2)                        # (nb, 2, 2F, 2F)

    # LN affine packed as (nb, 2, 2F, 1): [gamma_real; gamma_imag] column vectors.
    g_cat = gamma.reshape(nb, 2, f2)[..., None]
    b_cat = beta.reshape(nb, 2, f2)[..., None]

    grid = (n_pad // tile_b,)

    slab_spec = pl.BlockSpec((f2, tile_b), lambda i, theta_ref: (0, i))
    wc_spec = pl.BlockSpec((nb, 2, f2, f2), lambda i, theta_ref: (0, 0, 0, 0))
    ln_spec = pl.BlockSpec((nb, 2, f2, 1), lambda i, theta_ref: (0, 0, 0, 0))

    flops = 2 * nb * 2 * f2 * f2 * n_pad                     # 2 fused matmuls per block
    transcendentals = nb * (2 * f + 4) * n_pad               # rsqrt in soft-thresh + LN
    bytes_accessed = 4 * (2 * f2 * n_pad + wc.size + g_cat.size + b_cat.size + theta.size)

    out = pl.pallas_call(
        cv_resblock_stack_kernel,
        out_shape=jax.ShapeDtypeStruct((f2, n_pad), jnp.float32),
        grid_spec=pltpu.PrefetchScalarGridSpec(
            num_scalar_prefetch=1,
            grid=grid,
            in_specs=[slab_spec, wc_spec, ln_spec, ln_spec],
            out_specs=slab_spec,
        ),
        compiler_params=pltpu.CompilerParams(
            dimension_semantics=("parallel",)),
        cost_estimate=pl.CostEstimate(
            flops=int(flops),
            transcendentals=int(transcendentals),
            bytes_accessed=int(bytes_accessed)),
    )(theta, x, wc, g_cat, b_cat)

    out = out[:, :n]
    return out[0:f].T, out[f:f2].T


# ----------------------------- pure-JAX reference -----------------------------
def cv_resblock_stack_ref(x_r, x_i, w_r, w_i, gamma, beta, theta):
    def cvlinear(ar, ai, wr, wi):
        ac = jnp.dot(ar, wr.T)
        bd = jnp.dot(ai, wi.T)
        ad = jnp.dot(ar, wi.T)
        bc = jnp.dot(ai, wr.T)
        return ac - bd, ad + bc

    def layernorm(v, g, b):
        mu = jnp.mean(v, axis=-1, keepdims=True)
        var = jnp.mean((v - mu) ** 2, axis=-1, keepdims=True)
        return (v - mu) / jnp.sqrt(var + EPS) * g + b

    def soft_threshold(ar, ai, th):
        a = jnp.sqrt(ar * ar + ai * ai)
        bmax = jnp.maximum(a - th, 0.0)
        return ar / a * bmax, ai / a * bmax

    xr, xi = x_r, x_i
    for blk in range(w_r.shape[0]):
        id_r, id_i = xr, xi
        yr, yi = cvlinear(xr, xi, w_r[blk, 0], w_i[blk, 0])
        yr = layernorm(yr, gamma[blk, 0, 0], beta[blk, 0, 0])
        yi = layernorm(yi, gamma[blk, 0, 1], beta[blk, 0, 1])
        yr, yi = soft_threshold(yr, yi, theta[blk, 0])
        yr, yi = cvlinear(yr, yi, w_r[blk, 1], w_i[blk, 1])
        yr = layernorm(yr, gamma[blk, 1, 0], beta[blk, 1, 0])
        yi = layernorm(yi, gamma[blk, 1, 1], beta[blk, 1, 1])
        xr, xi = soft_threshold(yr + id_r, yi + id_i, theta[blk, 1])
    return xr, xi


if __name__ == "__main__":
    IN_FEATURES = 32   # CVResblock(in_features=32)
    BATCH = 1024       # small demo batch; tile_b=512 -> 2 grid steps

    key = jax.random.PRNGKey(0)
    k_x, k_wr, k_wi, k_g, k_b, k_t = jax.random.split(key, 6)

    # complex input, split into real / imag float32 planes, natural (N, F) layout
    x_r = jax.random.normal(k_x, (BATCH, IN_FEATURES), jnp.float32)
    x_i = jax.random.normal(jax.random.fold_in(k_x, 1), (BATCH, IN_FEATURES), jnp.float32)

    # parameters (synthetic init matching module parameter shapes)
    # weights: (block, linear_index, out_features, in_features)
    w_r = 0.2 * jax.random.normal(k_wr, (N_BLOCKS, 2, IN_FEATURES, IN_FEATURES), jnp.float32)
    w_i = 0.2 * jax.random.normal(k_wi, (N_BLOCKS, 2, IN_FEATURES, IN_FEATURES), jnp.float32)
    # layernorm affine: (block, ln_index, {real, imag}, features)
    gamma = 1.0 + 0.1 * jax.random.normal(k_g, (N_BLOCKS, 2, 2, IN_FEATURES), jnp.float32)
    beta = 0.1 * jax.random.normal(k_b, (N_BLOCKS, 2, 2, IN_FEATURES), jnp.float32)
    # soft-threshold theta: (block, {inner, outer})
    theta = 0.05 * jax.random.uniform(k_t, (N_BLOCKS, 2), jnp.float32)

    out_r, out_i = cv_resblock_stack_pallas(x_r, x_i, w_r, w_i, gamma, beta, theta, tile_b=512)
    jax.block_until_ready((out_r, out_i))

    ref_r, ref_i = cv_resblock_stack_ref(x_r, x_i, w_r, w_i, gamma, beta, theta)
    # Tolerance accounts for the fused 64-wide matmul grouping (vs 4x32 in the
    # reference) and rsqrt-based soft-threshold/LN formulation.
    assert jnp.allclose(out_r, ref_r, atol=1e-3, rtol=1e-3)
    assert jnp.allclose(out_i, ref_i, atol=1e-3, rtol=1e-3)

    print("KERNEL_OK")
</pallas_src>

<mosaic_0001>
module attributes {stable_mosaic.version = 11 : i64} {
  func.func @cv_resblock_stack_kernel(%arg0: i32, %arg1: memref<3x2xf32, #tpu.memory_space<smem>>, %arg2: memref<64x512xf32, #tpu.memory_space<vmem>>, %arg3: memref<3x2x64x64xf32, #tpu.memory_space<vmem>>, %arg4: memref<3x2x64x1xf32, #tpu.memory_space<vmem>>, %arg5: memref<3x2x64x1xf32, #tpu.memory_space<vmem>>, %arg6: memref<64x512xf32, #tpu.memory_space<vmem>>) attributes {dimension_semantics = [#tpu.dimension_semantics<parallel>], iteration_bounds = array<i64: 2>, scalar_prefetch = 1 : i64, scratch_operands = 0 : i64, tpu.core_type = #tpu.core_type<tc>, window_params = [{transform_indices = @transform_0, window_bounds = array<i64: 64, 512>}, {pipeline_mode = #tpu.pipeline_mode<synchronous>, transform_indices = @transform_1, window_bounds = array<i64: 3, 2, 64, 64>}, {pipeline_mode = #tpu.pipeline_mode<synchronous>, transform_indices = @transform_2, window_bounds = array<i64: 3, 2, 64, 1>}, {pipeline_mode = #tpu.pipeline_mode<synchronous>, transform_indices = @transform_3, window_bounds = array<i64: 3, 2, 64, 1>}, {transform_indices = @transform_4, window_bounds = array<i64: 64, 512>}]} {
    %c0 = arith.constant 0 : index
    %c0_0 = arith.constant 0 : index
    %0 = vector.load %arg2[%c0, %c0_0] : memref<64x512xf32, #tpu.memory_space<vmem>>, vector<64x512xf32>
    %c0_1 = arith.constant 0 : index
    %c0_2 = arith.constant 0 : index
    %c0_3 = arith.constant 0 : index
    %c0_4 = arith.constant 0 : index
    %1 = vector.load %arg3[%c0_1, %c0_2, %c0_3, %c0_4] : memref<3x2x64x64xf32, #tpu.memory_space<vmem>>, vector<1x1x64x64xf32>
    %2 = vector.shape_cast %1 : vector<1x1x64x64xf32> to vector<64x64xf32>
    %cst = arith.constant dense<0.000000e+00> : vector<64x512xf32>
    %3 = tpu.matmul %2, %0, %cst {dimension_numbers = #tpu.dot_dimension_numbers<[1], [0], [0], [1], [0, 0, 1, 1], [], []>} : vector<64x64xf32>, vector<64x512xf32>, vector<64x512xf32> -> vector<64x512xf32>
    %c0_5 = arith.constant 0 : index
    %c0_6 = arith.constant 0 : index
    %c0_7 = arith.constant 0 : index
    %c0_8 = arith.constant 0 : index
    %4 = vector.load %arg4[%c0_5, %c0_6, %c0_7, %c0_8] : memref<3x2x64x1xf32, #tpu.memory_space<vmem>>, vector<1x1x64x1xf32>
    %5 = vector.shape_cast %4 : vector<1x1x64x1xf32> to vector<64x1xf32>
    %c0_9 = arith.constant 0 : index
    %c0_10 = arith.constant 0 : index
    %c0_11 = arith.constant 0 : index
    %c0_12 = arith.constant 0 : index
    %6 = vector.load %arg5[%c0_9, %c0_10, %c0_11, %c0_12] : memref<3x2x64x1xf32, #tpu.memory_space<vmem>>, vector<1x1x64x1xf32>
    %7 = vector.shape_cast %6 : vector<1x1x64x1xf32> to vector<64x1xf32>
    %8 = vector.extract_strided_slice %3 {offsets = [0, 0], sizes = [32, 512], strides = [1, 1]} : vector<64x512xf32> to vector<32x512xf32>
    %cst_13 = arith.constant dense<0.000000e+00> : vector<512xf32>
    %9 = vector.multi_reduction <add>, %8, %cst_13 [0] : vector<32x512xf32> to vector<512xf32>
    %10 = vector.shape_cast %9 : vector<512xf32> to vector<1x512xf32>
    %cst_14 = arith.constant 3.200000e+01 : f32
    %11 = vector.broadcast %cst_14 : f32 to vector<1x512xf32>
    %12 = arith.divf %10, %11 : vector<1x512xf32>
    %13 = vector.broadcast %12 : vector<1x512xf32> to vector<32x512xf32>
    %14 = arith.subf %8, %13 : vector<32x512xf32>
    %15 = vector.broadcast %12 : vector<1x512xf32> to vector<32x512xf32>
    %16 = arith.subf %8, %15 : vector<32x512xf32>
    %17 = arith.mulf %14, %16 : vector<32x512xf32>
    %cst_15 = arith.constant dense<0.000000e+00> : vector<512xf32>
    %18 = vector.multi_reduction <add>, %17, %cst_15 [0] : vector<32x512xf32> to vector<512xf32>
    %19 = vector.shape_cast %18 : vector<512xf32> to vector<1x512xf32>
    %cst_16 = arith.constant 3.200000e+01 : f32
    %20 = vector.broadcast %cst_16 : f32 to vector<1x512xf32>
    %21 = arith.divf %19, %20 : vector<1x512xf32>
    %22 = vector.broadcast %12 : vector<1x512xf32> to vector<32x512xf32>
    %23 = arith.subf %8, %22 : vector<32x512xf32>
    %cst_17 = arith.constant 9.99999974E-6 : f32
    %24 = vector.broadcast %cst_17 : f32 to vector<1x512xf32>
    %25 = arith.addf %21, %24 : vector<1x512xf32>
    %26 = math.rsqrt %25 : vector<1x512xf32>
    %27 = vector.broadcast %26 : vector<1x512xf32> to vector<32x512xf32>
    %28 = arith.mulf %23, %27 : vector<32x512xf32>
    %29 = vector.extract_strided_slice %3 {offsets = [32, 0], sizes = [32, 512], strides = [1, 1]} : vector<64x512xf32> to vector<32x512xf32>
    %cst_18 = arith.constant dense<0.000000e+00> : vector<512xf32>
    %30 = vector.multi_reduction <add>, %29, %cst_18 [0] : vector<32x512xf32> to vector<512xf32>
    %31 = vector.shape_cast %30 : vector<512xf32> to vector<1x512xf32>
    %cst_19 = arith.constant 3.200000e+01 : f32
    %32 = vector.broadcast %cst_19 : f32 to vector<1x512xf32>
    %33 = arith.divf %31, %32 : vector<1x512xf32>
    %34 = vector.broadcast %33 : vector<1x512xf32> to vector<32x512xf32>
    %35 = arith.subf %29, %34 : vector<32x512xf32>
    %36 = vector.broadcast %33 : vector<1x512xf32> to vector<32x512xf32>
    %37 = arith.subf %29, %36 : vector<32x512xf32>
    %38 = arith.mulf %35, %37 : vector<32x512xf32>
    %cst_20 = arith.constant dense<0.000000e+00> : vector<512xf32>
    %39 = vector.multi_reduction <add>, %38, %cst_20 [0] : vector<32x512xf32> to vector<512xf32>
    %40 = vector.shape_cast %39 : vector<512xf32> to vector<1x512xf32>
    %cst_21 = arith.constant 3.200000e+01 : f32
    %41 = vector.broadcast %cst_21 : f32 to vector<1x512xf32>
    %42 = arith.divf %40, %41 : vector<1x512xf32>
    %43 = vector.broadcast %33 : vector<1x512xf32> to vector<32x512xf32>
    %44 = arith.subf %29, %43 : vector<32x512xf32>
    %cst_22 = arith.constant 9.99999974E-6 : f32
    %45 = vector.broadcast %cst_22 : f32 to vector<1x512xf32>
    %46 = arith.addf %42, %45 : vector<1x512xf32>
    %47 = math.rsqrt %46 : vector<1x512xf32>
    %48 = vector.broadcast %47 : vector<1x512xf32> to vector<32x512xf32>
    %49 = arith.mulf %44, %48 : vector<32x512xf32>
    %50 = tpu.concatenate %28, %49 in 0 : vector<32x512xf32>, vector<32x512xf32> -> vector<64x512xf32>
    %51 = vector.broadcast %5 : vector<64x1xf32> to vector<64x512xf32>
    %52 = arith.mulf %50, %51 : vector<64x512xf32>
    %53 = vector.broadcast %7 : vector<64x1xf32> to vector<64x512xf32>
    %54 = arith.addf %52, %53 : vector<64x512xf32>
    %c0_23 = arith.constant 0 : index
    %c0_24 = arith.constant 0 : index
    %55 = memref.load %arg1[%c0_23, %c0_24] : memref<3x2xf32, #tpu.memory_space<smem>>
    %56 = vector.extract_strided_slice %54 {offsets = [0, 0], sizes = [32, 512], strides = [1, 1]} : vector<64x512xf32> to vector<32x512xf32>
    %57 = vector.extract_strided_slice %54 {offsets = [32, 0], sizes = [32, 512], strides = [1, 1]} : vector<64x512xf32> to vector<32x512xf32>
    %58 = arith.mulf %56, %56 : vector<32x512xf32>
    %59 = arith.mulf %57, %57 : vector<32x512xf32>
    %60 = arith.addf %58, %59 : vector<32x512xf32>
    %cst_25 = arith.constant 1.000000e-30 : f32
    %61 = vector.broadcast %cst_25 : f32 to vector<32x512xf32>
    %62 = arith.addf %60, %61 : vector<32x512xf32>
    %63 = math.rsqrt %62 : vector<32x512xf32>
    %64 = arith.mulf %60, %63 : vector<32x512xf32>
    %65 = vector.broadcast %55 : f32 to vector<32x512xf32>
    %66 = arith.subf %64, %65 : vector<32x512xf32>
    %cst_26 = arith.constant 0.000000e+00 : f32
    %67 = vector.broadcast %cst_26 : f32 to vector<32x512xf32>
    %68 = arith.maximumf %66, %67 : vector<32x512xf32>
    %69 = arith.mulf %68, %63 : vector<32x512xf32>
    %70 = arith.mulf %56, %69 : vector<32x512xf32>
    %71 = arith.mulf %57, %69 : vector<32x512xf32>
    %72 = tpu.concatenate %70, %71 in 0 : vector<32x512xf32>, vector<32x512xf32> -> vector<64x512xf32>
    %c0_27 = arith.constant 0 : index
    %c1 = arith.constant 1 : index
    %c0_28 = arith.constant 0 : index
    %c0_29 = arith.constant 0 : index
    %73 = vector.load %arg3[%c0_27, %c1, %c0_28, %c0_29] : memref<3x2x64x64xf32, #tpu.memory_space<vmem>>, vector<1x1x64x64xf32>
    %74 = vector.shape_cast %73 : vector<1x1x64x64xf32> to vector<64x64xf32>
    %cst_30 = arith.constant dense<0.000000e+00> : vector<64x512xf32>
    %75 = tpu.matmul %74, %72, %cst_30 {dimension_numbers = #tpu.dot_dimension_numbers<[1], [0], [0], [1], [0, 0, 1, 1], [], []>} : vector<64x64xf32>, vector<64x512xf32>, vector<64x512xf32> -> vector<64x512xf32>
    %c0_31 = arith.constant 0 : index
    %c1_32 = arith.constant 1 : index
    %c0_33 = arith.constant 0 : index
    %c0_34 = arith.constant 0 : index
    %76 = vector.load %arg4[%c0_31, %c1_32, %c0_33, %c0_34] : memref<3x2x64x1xf32, #tpu.memory_space<vmem>>, vector<1x1x64x1xf32>
    %77 = vector.shape_cast %76 : vector<1x1x64x1xf32> to vector<64x1xf32>
    %c0_35 = arith.constant 0 : index
    %c1_36 = arith.constant 1 : index
    %c0_37 = arith.constant 0 : index
    %c0_38 = arith.constant 0 : index
    %78 = vector.load %arg5[%c0_35, %c1_36, %c0_37, %c0_38] : memref<3x2x64x1xf32, #tpu.memory_space<vmem>>, vector<1x1x64x1xf32>
    %79 = vector.shape_cast %78 : vector<1x1x64x1xf32> to vector<64x1xf32>
    %80 = vector.extract_strided_slice %75 {offsets = [0, 0], sizes = [32, 512], strides = [1, 1]} : vector<64x512xf32> to vector<32x512xf32>
    %cst_39 = arith.constant dense<0.000000e+00> : vector<512xf32>
    %81 = vector.multi_reduction <add>, %80, %cst_39 [0] : vector<32x512xf32> to vector<512xf32>
    %82 = vector.shape_cast %81 : vector<512xf32> to vector<1x512xf32>
    %cst_40 = arith.constant 3.200000e+01 : f32
    %83 = vector.broadcast %cst_40 : f32 to vector<1x512xf32>
    %84 = arith.divf %82, %83 : vector<1x512xf32>
    %85 = vector.broadcast %84 : vector<1x512xf32> to vector<32x512xf32>
    %86 = arith.subf %80, %85 : vector<32x512xf32>
    %87 = vector.broadcast %84 : vector<1x512xf32> to vector<32x512xf32>
    %88 = arith.subf %80, %87 : vector<32x512xf32>
    %89 = arith.mulf %86, %88 : vector<32x512xf32>
    %cst_41 = arith.constant dense<0.000000e+00> : vector<512xf32>
    %90 = vector.multi_reduction <add>, %89, %cst_41 [0] : vector<32x512xf32> to vector<512xf32>
    %91 = vector.shape_cast %90 : vector<512xf32> to vector<1x512xf32>
    %cst_42 = arith.constant 3.200000e+01 : f32
    %92 = vector.broadcast %cst_42 : f32 to vector<1x512xf32>
    %93 = arith.divf %91, %92 : vector<1x512xf32>
    %94 = vector.broadcast %84 : vector<1x512xf32> to vector<32x512xf32>
    %95 = arith.subf %80, %94 : vector<32x512xf32>
    %cst_43 = arith.constant 9.99999974E-6 : f32
    %96 = vector.broadcast %cst_43 : f32 to vector<1x512xf32>
    %97 = arith.addf %93, %96 : vector<1x512xf32>
    %98 = math.rsqrt %97 : vector<1x512xf32>
    %99 = vector.broadcast %98 : vector<1x512xf32> to vector<32x512xf32>
    %100 = arith.mulf %95, %99 : vector<32x512xf32>
    %101 = vector.extract_strided_slice %75 {offsets = [32, 0], sizes = [32, 512], strides = [1, 1]} : vector<64x512xf32> to vector<32x512xf32>
    %cst_44 = arith.constant dense<0.000000e+00> : vector<512xf32>
    %102 = vector.multi_reduction <add>, %101, %cst_44 [0] : vector<32x512xf32> to vector<512xf32>
    %103 = vector.shape_cast %102 : vector<512xf32> to vector<1x512xf32>
    %cst_45 = arith.constant 3.200000e+01 : f32
    %104 = vector.broadcast %cst_45 : f32 to vector<1x512xf32>
    %105 = arith.divf %103, %104 : vector<1x512xf32>
    %106 = vector.broadcast %105 : vector<1x512xf32> to vector<32x512xf32>
    %107 = arith.subf %101, %106 : vector<32x512xf32>
    %108 = vector.broadcast %105 : vector<1x512xf32> to vector<32x512xf32>
    %109 = arith.subf %101, %108 : vector<32x512xf32>
    %110 = arith.mulf %107, %109 : vector<32x512xf32>
    %cst_46 = arith.constant dense<0.000000e+00> : vector<512xf32>
    %111 = vector.multi_reduction <add>, %110, %cst_46 [0] : vector<32x512xf32> to vector<512xf32>
    %112 = vector.shape_cast %111 : vector<512xf32> to vector<1x512xf32>
    %cst_47 = arith.constant 3.200000e+01 : f32
    %113 = vector.broadcast %cst_47 : f32 to vector<1x512xf32>
    %114 = arith.divf %112, %113 : vector<1x512xf32>
    %115 = vector.broadcast %105 : vector<1x512xf32> to vector<32x512xf32>
    %116 = arith.subf %101, %115 : vector<32x512xf32>
    %cst_48 = arith.constant 9.99999974E-6 : f32
    %117 = vector.broadcast %cst_48 : f32 to vector<1x512xf32>
    %118 = arith.addf %114, %117 : vector<1x512xf32>
    %119 = math.rsqrt %118 : vector<1x512xf32>
    %120 = vector.broadcast %119 : vector<1x512xf32> to vector<32x512xf32>
    %121 = arith.mulf %116, %120 : vector<32x512xf32>
    %122 = tpu.concatenate %100, %121 in 0 : vector<32x512xf32>, vector<32x512xf32> -> vector<64x512xf32>
    %123 = vector.broadcast %77 : vector<64x1xf32> to vector<64x512xf32>
    %124 = arith.mulf %122, %123 : vector<64x512xf32>
    %125 = vector.broadcast %79 : vector<64x1xf32> to vector<64x512xf32>
    %126 = arith.addf %124, %125 : vector<64x512xf32>
    %127 = arith.addf %126, %0 : vector<64x512xf32>
    %c0_49 = arith.constant 0 : index
    %c1_50 = arith.constant 1 : index
    %128 = memref.load %arg1[%c0_49, %c1_50] : memref<3x2xf32, #tpu.memory_space<smem>>
    %129 = vector.extract_strided_slice %127 {offsets = [0, 0], sizes = [32, 512], strides = [1, 1]} : vector<64x512xf32> to vector<32x512xf32>
    %130 = vector.extract_strided_slice %127 {offsets = [32, 0], sizes = [32, 512], strides = [1, 1]} : vector<64x512xf32> to vector<32x512xf32>
    %131 = arith.mulf %129, %129 : vector<32x512xf32>
    %132 = arith.mulf %130, %130 : vector<32x512xf32>
    %133 = arith.addf %131, %132 : vector<32x512xf32>
    %cst_51 = arith.constant 1.000000e-30 : f32
    %134 = vector.broadcast %cst_51 : f32 to vector<32x512xf32>
    %135 = arith.addf %133, %134 : vector<32x512xf32>
    %136 = math.rsqrt %135 : vector<32x512xf32>
    %137 = arith.mulf %133, %136 : vector<32x512xf32>
    %138 = vector.broadcast %128 : f32 to vector<32x512xf32>
    %139 = arith.subf %137, %138 : vector<32x512xf32>
    %cst_52 = arith.constant 0.000000e+00 : f32
    %140 = vector.broadcast %cst_52 : f32 to vector<32x512xf32>
    %141 = arith.maximumf %139, %140 : vector<32x512xf32>
    %142 = arith.mulf %141, %136 : vector<32x512xf32>
    %143 = arith.mulf %129, %142 : vector<32x512xf32>
    %144 = arith.mulf %130, %142 : vector<32x512xf32>
    %145 = tpu.concatenate %143, %144 in 0 : vector<32x512xf32>, vector<32x512xf32> -> vector<64x512xf32>
    %c1_53 = arith.constant 1 : index
    %c0_54 = arith.constant 0 : index
    %c0_55 = arith.constant 0 : index
    %c0_56 = arith.constant 0 : index
    %146 = vector.load %arg3[%c1_53, %c0_54, %c0_55, %c0_56] : memref<3x2x64x64xf32, #tpu.memory_space<vmem>>, vector<1x1x64x64xf32>
    %147 = vector.shape_cast %146 : vector<1x1x64x64xf32> to vector<64x64xf32>
    %cst_57 = arith.constant dense<0.000000e+00> : vector<64x512xf32>
    %148 = tpu.matmul %147, %145, %cst_57 {dimension_numbers = #tpu.dot_dimension_numbers<[1], [0], [0], [1], [0, 0, 1, 1], [], []>} : vector<64x64xf32>, vector<64x512xf32>, vector<64x512xf32> -> vector<64x512xf32>
    %c1_58 = arith.constant 1 : index
    %c0_59 = arith.constant 0 : index
    %c0_60 = arith.constant 0 : index
    %c0_61 = arith.constant 0 : index
    %149 = vector.load %arg4[%c1_58, %c0_59, %c0_60, %c0_61] : memref<3x2x64x1xf32, #tpu.memory_space<vmem>>, vector<1x1x64x1xf32>
    %150 = vector.shape_cast %149 : vector<1x1x64x1xf32> to vector<64x1xf32>
    %c1_62 = arith.constant 1 : index
    %c0_63 = arith.constant 0 : index
    %c0_64 = arith.constant 0 : index
    %c0_65 = arith.constant 0 : index
    %151 = vector.load %arg5[%c1_62, %c0_63, %c0_64, %c0_65] : memref<3x2x64x1xf32, #tpu.memory_space<vmem>>, vector<1x1x64x1xf32>
    %152 = vector.shape_cast %151 : vector<1x1x64x1xf32> to vector<64x1xf32>
    %153 = vector.extract_strided_slice %148 {offsets = [0, 0], sizes = [32, 512], strides = [1, 1]} : vector<64x512xf32> to vector<32x512xf32>
    %cst_66 = arith.constant dense<0.000000e+00> : vector<512xf32>
    %154 = vector.multi_reduction <add>, %153, %cst_66 [0] : vector<32x512xf32> to vector<512xf32>
    %155 = vector.shape_cast %154 : vector<512xf32> to vector<1x512xf32>
    %cst_67 = arith.constant 3.200000e+01 : f32
    %156 = vector.broadcast %cst_67 : f32 to vector<1x512xf32>
    %157 = arith.divf %155, %156 : vector<1x512xf32>
    %158 = vector.broadcast %157 : vector<1x512xf32> to vector<32x512xf32>
    %159 = arith.subf %153, %158 : vector<32x512xf32>
    %160 = vector.broadcast %157 : vector<1x512xf32> to vector<32x512xf32>
    %161 = arith.subf %153, %160 : vector<32x512xf32>
    %162 = arith.mulf %159, %161 : vector<32x512xf32>
    %cst_68 = arith.constant dense<0.000000e+00> : vector<512xf32>
    %163 = vector.multi_reduction <add>, %162, %cst_68 [0] : vector<32x512xf32> to vector<512xf32>
    %164 = vector.shape_cast %163 : vector<512xf32> to vector<1x512xf32>
    %cst_69 = arith.constant 3.200000e+01 : f32
    %165 = vector.broadcast %cst_69 : f32 to vector<1x512xf32>
    %166 = arith.divf %164, %165 : vector<1x512xf32>
    %167 = vector.broadcast %157 : vector<1x512xf32> to vector<32x512xf32>
    %168 = arith.subf %153, %167 : vector<32x512xf32>
    %cst_70 = arith.constant 9.99999974E-6 : f32
    %169 = vector.broadcast %cst_70 : f32 to vector<1x512xf32>
    %170 = arith.addf %166, %169 : vector<1x512xf32>
    %171 = math.rsqrt %170 : vector<1x512xf32>
    %172 = vector.broadcast %171 : vector<1x512xf32> to vector<32x512xf32>
    %173 = arith.mulf %168, %172 : vector<32x512xf32>
    %174 = vector.extract_strided_slice %148 {offsets = [32, 0], sizes = [32, 512], strides = [1, 1]} : vector<64x512xf32> to vector<32x512xf32>
    %cst_71 = arith.constant dense<0.000000e+00> : vector<512xf32>
    %175 = vector.multi_reduction <add>, %174, %cst_71 [0] : vector<32x512xf32> to vector<512xf32>
    %176 = vector.shape_cast %175 : vector<512xf32> to vector<1x512xf32>
    %cst_72 = arith.constant 3.200000e+01 : f32
    %177 = vector.broadcast %cst_72 : f32 to vector<1x512xf32>
    %178 = arith.divf %176, %177 : vector<1x512xf32>
    %179 = vector.broadcast %178 : vector<1x512xf32> to vector<32x512xf32>
    %180 = arith.subf %174, %179 : vector<32x512xf32>
    %181 = vector.broadcast %178 : vector<1x512xf32> to vector<32x512xf32>
    %182 = arith.subf %174, %181 : vector<32x512xf32>
    %183 = arith.mulf %180, %182 : vector<32x512xf32>
    %cst_73 = arith.constant dense<0.000000e+00> : vector<512xf32>
    %184 = vector.multi_reduction <add>, %183, %cst_73 [0] : vector<32x512xf32> to vector<512xf32>
    %185 = vector.shape_cast %184 : vector<512xf32> to vector<1x512xf32>
    %cst_74 = arith.constant 3.200000e+01 : f32
    %186 = vector.broadcast %cst_74 : f32 to vector<1x512xf32>
    %187 = arith.divf %185, %186 : vector<1x512xf32>
    %188 = vector.broadcast %178 : vector<1x512xf32> to vector<32x512xf32>
    %189 = arith.subf %174, %188 : vector<32x512xf32>
    %cst_75 = arith.constant 9.99999974E-6 : f32
    %190 = vector.broadcast %cst_75 : f32 to vector<1x512xf32>
    %191 = arith.addf %187, %190 : vector<1x512xf32>
    %192 = math.rsqrt %191 : vector<1x512xf32>
    %193 = vector.broadcast %192 : vector<1x512xf32> to vector<32x512xf32>
    %194 = arith.mulf %189, %193 : vector<32x512xf32>
    %195 = tpu.concatenate %173, %194 in 0 : vector<32x512xf32>, vector<32x512xf32> -> vector<64x512xf32>
    %196 = vector.broadcast %150 : vector<64x1xf32> to vector<64x512xf32>
    %197 = arith.mulf %195, %196 : vector<64x512xf32>
    %198 = vector.broadcast %152 : vector<64x1xf32> to vector<64x512xf32>
    %199 = arith.addf %197, %198 : vector<64x512xf32>
    %c1_76 = arith.constant 1 : index
    %c0_77 = arith.constant 0 : index
    %200 = memref.load %arg1[%c1_76, %c0_77] : memref<3x2xf32, #tpu.memory_space<smem>>
    %201 = vector.extract_strided_slice %199 {offsets = [0, 0], sizes = [32, 512], strides = [1, 1]} : vector<64x512xf32> to vector<32x512xf32>
    %202 = vector.extract_strided_slice %199 {offsets = [32, 0], sizes = [32, 512], strides = [1, 1]} : vector<64x512xf32> to vector<32x512xf32>
    %203 = arith.mulf %201, %201 : vector<32x512xf32>
    %204 = arith.mulf %202, %202 : vector<32x512xf32>
    %205 = arith.addf %203, %204 : vector<32x512xf32>
    %cst_78 = arith.constant 1.000000e-30 : f32
    %206 = vector.broadcast %cst_78 : f32 to vector<32x512xf32>
    %207 = arith.addf %205, %206 : vector<32x512xf32>
    %208 = math.rsqrt %207 : vector<32x512xf32>
    %209 = arith.mulf %205, %208 : vector<32x512xf32>
    %210 = vector.broadcast %200 : f32 to vector<32x512xf32>
    %211 = arith.subf %209, %210 : vector<32x512xf32>
    %cst_79 = arith.constant 0.000000e+00 : f32
    %212 = vector.broadcast %cst_79 : f32 to vector<32x512xf32>
    %213 = arith.maximumf %211, %212 : vector<32x512xf32>
    %214 = arith.mulf %213, %208 : vector<32x512xf32>
    %215 = arith.mulf %201, %214 : vector<32x512xf32>
    %216 = arith.mulf %202, %214 : vector<32x512xf32>
    %217 = tpu.concatenate %215, %216 in 0 : vector<32x512xf32>, vector<32x512xf32> -> vector<64x512xf32>
    %c1_80 = arith.constant 1 : index
    %c1_81 = arith.constant 1 : index
    %c0_82 = arith.constant 0 : index
    %c0_83 = arith.constant 0 : index
    %218 = vector.load %arg3[%c1_80, %c1_81, %c0_82, %c0_83] : memref<3x2x64x64xf32, #tpu.memory_space<vmem>>, vector<1x1x64x64xf32>
    %219 = vector.shape_cast %218 : vector<1x1x64x64xf32> to vector<64x64xf32>
    %cst_84 = arith.constant dense<0.000000e+00> : vector<64x512xf32>
    %220 = tpu.matmul %219, %217, %cst_84 {dimension_numbers = #tpu.dot_dimension_numbers<[1], [0], [0], [1], [0, 0, 1, 1], [], []>} : vector<64x64xf32>, vector<64x512xf32>, vector<64x512xf32> -> vector<64x512xf32>
    %c1_85 = arith.constant 1 : index
    %c1_86 = arith.constant 1 : index
    %c0_87 = arith.constant 0 : index
    %c0_88 = arith.constant 0 : index
    %221 = vector.load %arg4[%c1_85, %c1_86, %c0_87, %c0_88] : memref<3x2x64x1xf32, #tpu.memory_space<vmem>>, vector<1x1x64x1xf32>
    %222 = vector.shape_cast %221 : vector<1x1x64x1xf32> to vector<64x1xf32>
    %c1_89 = arith.constant 1 : index
    %c1_90 = arith.constant 1 : index
    %c0_91 = arith.constant 0 : index
    %c0_92 = arith.constant 0 : index
    %223 = vector.load %arg5[%c1_89, %c1_90, %c0_91, %c0_92] : memref<3x2x64x1xf32, #tpu.memory_space<vmem>>, vector<1x1x64x1xf32>
    %224 = vector.shape_cast %223 : vector<1x1x64x1xf32> to vector<64x1xf32>
    %225 = vector.extract_strided_slice %220 {offsets = [0, 0], sizes = [32, 512], strides = [1, 1]} : vector<64x512xf32> to vector<32x512xf32>
    %cst_93 = arith.constant dense<0.000000e+00> : vector<512xf32>
    %226 = vector.multi_reduction <add>, %225, %cst_93 [0] : vector<32x512xf32> to vector<512xf32>
    %227 = vector.shape_cast %226 : vector<512xf32> to vector<1x512xf32>
    %cst_94 = arith.constant 3.200000e+01 : f32
    %228 = vector.broadcast %cst_94 : f32 to vector<1x512xf32>
    %229 = arith.divf %227, %228 : vector<1x512xf32>
    %230 = vector.broadcast %229 : vector<1x512xf32> to vector<32x512xf32>
    %231 = arith.subf %225, %230 : vector<32x512xf32>
    %232 = vector.broadcast %229 : vector<1x512xf32> to vector<32x512xf32>
    %233 = arith.subf %225, %232 : vector<32x512xf32>
    %234 = arith.mulf %231, %233 : vector<32x512xf32>
    %cst_95 = arith.constant dense<0.000000e+00> : vector<512xf32>
    %235 = vector.multi_reduction <add>, %234, %cst_95 [0] : vector<32x512xf32> to vector<512xf32>
    %236 = vector.shape_cast %235 : vector<512xf32> to vector<1x512xf32>
    %cst_96 = arith.constant 3.200000e+01 : f32
    %237 = vector.broadcast %cst_96 : f32 to vector<1x512xf32>
    %238 = arith.divf %236, %237 : vector<1x512xf32>
    %239 = vector.broadcast %229 : vector<1x512xf32> to vector<32x512xf32>
    %240 = arith.subf %225, %239 : vector<32x512xf32>
    %cst_97 = arith.constant 9.99999974E-6 : f32
    %241 = vector.broadcast %cst_97 : f32 to vector<1x512xf32>
    %242 = arith.addf %238, %241 : vector<1x512xf32>
    %243 = math.rsqrt %242 : vector<1x512xf32>
    %244 = vector.broadcast %243 : vector<1x512xf32> to vector<32x512xf32>
    %245 = arith.mulf %240, %244 : vector<32x512xf32>
    %246 = vector.extract_strided_slice %220 {offsets = [32, 0], sizes = [32, 512], strides = [1, 1]} : vector<64x512xf32> to vector<32x512xf32>
    %cst_98 = arith.constant dense<0.000000e+00> : vector<512xf32>
    %247 = vector.multi_reduction <add>, %246, %cst_98 [0] : vector<32x512xf32> to vector<512xf32>
    %248 = vector.shape_cast %247 : vector<512xf32> to vector<1x512xf32>
    %cst_99 = arith.constant 3.200000e+01 : f32
    %249 = vector.broadcast %cst_99 : f32 to vector<1x512xf32>
    %250 = arith.divf %248, %249 : vector<1x512xf32>
    %251 = vector.broadcast %250 : vector<1x512xf32> to vector<32x512xf32>
    %252 = arith.subf %246, %251 : vector<32x512xf32>
    %253 = vector.broadcast %250 : vector<1x512xf32> to vector<32x512xf32>
    %254 = arith.subf %246, %253 : vector<32x512xf32>
    %255 = arith.mulf %252, %254 : vector<32x512xf32>
    %cst_100 = arith.constant dense<0.000000e+00> : vector<512xf32>
    %256 = vector.multi_reduction <add>, %255, %cst_100 [0] : vector<32x512xf32> to vector<512xf32>
    %257 = vector.shape_cast %256 : vector<512xf32> to vector<1x512xf32>
    %cst_101 = arith.constant 3.200000e+01 : f32
    %258 = vector.broadcast %cst_101 : f32 to vector<1x512xf32>
    %259 = arith.divf %257, %258 : vector<1x512xf32>
    %260 = vector.broadcast %250 : vector<1x512xf32> to vector<32x512xf32>
    %261 = arith.subf %246, %260 : vector<32x512xf32>
    %cst_102 = arith.constant 9.99999974E-6 : f32
    %262 = vector.broadcast %cst_102 : f32 to vector<1x512xf32>
    %263 = arith.addf %259, %262 : vector<1x512xf32>
    %264 = math.rsqrt %263 : vector<1x512xf32>
    %265 = vector.broadcast %264 : vector<1x512xf32> to vector<32x512xf32>
    %266 = arith.mulf %261, %265 : vector<32x512xf32>
    %267 = tpu.concatenate %245, %266 in 0 : vector<32x512xf32>, vector<32x512xf32> -> vector<64x512xf32>
    %268 = vector.broadcast %222 : vector<64x1xf32> to vector<64x512xf32>
    %269 = arith.mulf %267, %268 : vector<64x512xf32>
    %270 = vector.broadcast %224 : vector<64x1xf32> to vector<64x512xf32>
    %271 = arith.addf %269, %270 : vector<64x512xf32>
    %272 = arith.addf %271, %145 : vector<64x512xf32>
    %c1_103 = arith.constant 1 : index
    %c1_104 = arith.constant 1 : index
    %273 = memref.load %arg1[%c1_103, %c1_104] : memref<3x2xf32, #tpu.memory_space<smem>>
    %274 = vector.extract_strided_slice %272 {offsets = [0, 0], sizes = [32, 512], strides = [1, 1]} : vector<64x512xf32> to vector<32x512xf32>
    %275 = vector.extract_strided_slice %272 {offsets = [32, 0], sizes = [32, 512], strides = [1, 1]} : vector<64x512xf32> to vector<32x512xf32>
    %276 = arith.mulf %274, %274 : vector<32x512xf32>
    %277 = arith.mulf %275, %275 : vector<32x512xf32>
    %278 = arith.addf %276, %277 : vector<32x512xf32>
    %cst_105 = arith.constant 1.000000e-30 : f32
    %279 = vector.broadcast %cst_105 : f32 to vector<32x512xf32>
    %280 = arith.addf %278, %279 : vector<32x512xf32>
    %281 = math.rsqrt %280 : vector<32x512xf32>
    %282 = arith.mulf %278, %281 : vector<32x512xf32>
    %283 = vector.broadcast %273 : f32 to vector<32x512xf32>
    %284 = arith.subf %282, %283 : vector<32x512xf32>
    %cst_106 = arith.constant 0.000000e+00 : f32
    %285 = vector.broadcast %cst_106 : f32 to vector<32x512xf32>
    %286 = arith.maximumf %284, %285 : vector<32x512xf32>
    %287 = arith.mulf %286, %281 : vector<32x512xf32>
    %288 = arith.mulf %274, %287 : vector<32x512xf32>
    %289 = arith.mulf %275, %287 : vector<32x512xf32>
    %290 = tpu.concatenate %288, %289 in 0 : vector<32x512xf32>, vector<32x512xf32> -> vector<64x512xf32>
    %c2 = arith.constant 2 : index
    %c0_107 = arith.constant 0 : index
    %c0_108 = arith.constant 0 : index
    %c0_109 = arith.constant 0 : index
    %291 = vector.load %arg3[%c2, %c0_107, %c0_108, %c0_109] : memref<3x2x64x64xf32, #tpu.memory_space<vmem>>, vector<1x1x64x64xf32>
    %292 = vector.shape_cast %291 : vector<1x1x64x64xf32> to vector<64x64xf32>
    %cst_110 = arith.constant dense<0.000000e+00> : vector<64x512xf32>
    %293 = tpu.matmul %292, %290, %cst_110 {dimension_numbers = #tpu.dot_dimension_numbers<[1], [0], [0], [1], [0, 0, 1, 1], [], []>} : vector<64x64xf32>, vector<64x512xf32>, vector<64x512xf32> -> vector<64x512xf32>
    %c2_111 = arith.constant 2 : index
    %c0_112 = arith.constant 0 : index
    %c0_113 = arith.constant 0 : index
    %c0_114 = arith.constant 0 : index
    %294 = vector.load %arg4[%c2_111, %c0_112, %c0_113, %c0_114] : memref<3x2x64x1xf32, #tpu.memory_space<vmem>>, vector<1x1x64x1xf32>
    %295 = vector.shape_cast %294 : vector<1x1x64x1xf32> to vector<64x1xf32>
    %c2_115 = arith.constant 2 : index
    %c0_116 = arith.constant 0 : index
    %c0_117 = arith.constant 0 : index
    %c0_118 = arith.constant 0 : index
    %296 = vector.load %arg5[%c2_115, %c0_116, %c0_117, %c0_118] : memref<3x2x64x1xf32, #tpu.memory_space<vmem>>, vector<1x1x64x1xf32>
    %297 = vector.shape_cast %296 : vector<1x1x64x1xf32> to vector<64x1xf32>
    %298 = vector.extract_strided_slice %293 {offsets = [0, 0], sizes = [32, 512], strides = [1, 1]} : vector<64x512xf32> to vector<32x512xf32>
    %cst_119 = arith.constant dense<0.000000e+00> : vector<512xf32>
    %299 = vector.multi_reduction <add>, %298, %cst_119 [0] : vector<32x512xf32> to vector<512xf32>
    %300 = vector.shape_cast %299 : vector<512xf32> to vector<1x512xf32>
    %cst_120 = arith.constant 3.200000e+01 : f32
    %301 = vector.broadcast %cst_120 : f32 to vector<1x512xf32>
    %302 = arith.divf %300, %301 : vector<1x512xf32>
    %303 = vector.broadcast %302 : vector<1x512xf32> to vector<32x512xf32>
    %304 = arith.subf %298, %303 : vector<32x512xf32>
    %305 = vector.broadcast %302 : vector<1x512xf32> to vector<32x512xf32>
    %306 = arith.subf %298, %305 : vector<32x512xf32>
    %307 = arith.mulf %304, %306 : vector<32x512xf32>
    %cst_121 = arith.constant dense<0.000000e+00> : vector<512xf32>
    %308 = vector.multi_reduction <add>, %307, %cst_121 [0] : vector<32x512xf32> to vector<512xf32>
    %309 = vector.shape_cast %308 : vector<512xf32> to vector<1x512xf32>
    %cst_122 = arith.constant 3.200000e+01 : f32
    %310 = vector.broadcast %cst_122 : f32 to vector<1x512xf32>
    %311 = arith.divf %309, %310 : vector<1x512xf32>
    %312 = vector.broadcast %302 : vector<1x512xf32> to vector<32x512xf32>
    %313 = arith.subf %298, %312 : vector<32x512xf32>
    %cst_123 = arith.constant 9.99999974E-6 : f32
    %314 = vector.broadcast %cst_123 : f32 to vector<1x512xf32>
    %315 = arith.addf %311, %314 : vector<1x512xf32>
    %316 = math.rsqrt %315 : vector<1x512xf32>
    %317 = vector.broadcast %316 : vector<1x512xf32> to vector<32x512xf32>
    %318 = arith.mulf %313, %317 : vector<32x512xf32>
    %319 = vector.extract_strided_slice %293 {offsets = [32, 0], sizes = [32, 512], strides = [1, 1]} : vector<64x512xf32> to vector<32x512xf32>
    %cst_124 = arith.constant dense<0.000000e+00> : vector<512xf32>
    %320 = vector.multi_reduction <add>, %319, %cst_124 [0] : vector<32x512xf32> to vector<512xf32>
    %321 = vector.shape_cast %320 : vector<512xf32> to vector<1x512xf32>
    %cst_125 = arith.constant 3.200000e+01 : f32
    %322 = vector.broadcast %cst_125 : f32 to vector<1x512xf32>
    %323 = arith.divf %321, %322 : vector<1x512xf32>
    %324 = vector.broadcast %323 : vector<1x512xf32> to vector<32x512xf32>
    %325 = arith.subf %319, %324 : vector<32x512xf32>
    %326 = vector.broadcast %323 : vector<1x512xf32> to vector<32x512xf32>
    %327 = arith.subf %319, %326 : vector<32x512xf32>
    %328 = arith.mulf %325, %327 : vector<32x512xf32>
    %cst_126 = arith.constant dense<0.000000e+00> : vector<512xf32>
    %329 = vector.multi_reduction <add>, %328, %cst_126 [0] : vector<32x512xf32> to vector<512xf32>
    %330 = vector.shape_cast %329 : vector<512xf32> to vector<1x512xf32>
    %cst_127 = arith.constant 3.200000e+01 : f32
    %331 = vector.broadcast %cst_127 : f32 to vector<1x512xf32>
    %332 = arith.divf %330, %331 : vector<1x512xf32>
    %333 = vector.broadcast %323 : vector<1x512xf32> to vector<32x512xf32>
    %334 = arith.subf %319, %333 : vector<32x512xf32>
    %cst_128 = arith.constant 9.99999974E-6 : f32
    %335 = vector.broadcast %cst_128 : f32 to vector<1x512xf32>
    %336 = arith.addf %332, %335 : vector<1x512xf32>
    %337 = math.rsqrt %336 : vector<1x512xf32>
    %338 = vector.broadcast %337 : vector<1x512xf32> to vector<32x512xf32>
    %339 = arith.mulf %334, %338 : vector<32x512xf32>
    %340 = tpu.concatenate %318, %339 in 0 : vector<32x512xf32>, vector<32x512xf32> -> vector<64x512xf32>
    %341 = vector.broadcast %295 : vector<64x1xf32> to vector<64x512xf32>
    %342 = arith.mulf %340, %341 : vector<64x512xf32>
    %343 = vector.broadcast %297 : vector<64x1xf32> to vector<64x512xf32>
    %344 = arith.addf %342, %343 : vector<64x512xf32>
    %c2_129 = arith.constant 2 : index
    %c0_130 = arith.constant 0 : index
    %345 = memref.load %arg1[%c2_129, %c0_130] : memref<3x2xf32, #tpu.memory_space<smem>>
    %346 = vector.extract_strided_slice %344 {offsets = [0, 0], sizes = [32, 512], strides = [1, 1]} : vector<64x512xf32> to vector<32x512xf32>
    %347 = vector.extract_strided_slice %344 {offsets = [32, 0], sizes = [32, 512], strides = [1, 1]} : vector<64x512xf32> to vector<32x512xf32>
    %348 = arith.mulf %346, %346 : vector<32x512xf32>
    %349 = arith.mulf %347, %347 : vector<32x512xf32>
    %350 = arith.addf %348, %349 : vector<32x512xf32>
    %cst_131 = arith.constant 1.000000e-30 : f32
    %351 = vector.broadcast %cst_131 : f32 to vector<32x512xf32>
    %352 = arith.addf %350, %351 : vector<32x512xf32>
    %353 = math.rsqrt %352 : vector<32x512xf32>
    %354 = arith.mulf %350, %353 : vector<32x512xf32>
    %355 = vector.broadcast %345 : f32 to vector<32x512xf32>
    %356 = arith.subf %354, %355 : vector<32x512xf32>
    %cst_132 = arith.constant 0.000000e+00 : f32
    %357 = vector.broadcast %cst_132 : f32 to vector<32x512xf32>
    %358 = arith.maximumf %356, %357 : vector<32x512xf32>
    %359 = arith.mulf %358, %353 : vector<32x512xf32>
    %360 = arith.mulf %346, %359 : vector<32x512xf32>
    %361 = arith.mulf %347, %359 : vector<32x512xf32>
    %362 = tpu.concatenate %360, %361 in 0 : vector<32x512xf32>, vector<32x512xf32> -> vector<64x512xf32>
    %c2_133 = arith.constant 2 : index
    %c1_134 = arith.constant 1 : index
    %c0_135 = arith.constant 0 : index
    %c0_136 = arith.constant 0 : index
    %363 = vector.load %arg3[%c2_133, %c1_134, %c0_135, %c0_136] : memref<3x2x64x64xf32, #tpu.memory_space<vmem>>, vector<1x1x64x64xf32>
    %364 = vector.shape_cast %363 : vector<1x1x64x64xf32> to vector<64x64xf32>
    %cst_137 = arith.constant dense<0.000000e+00> : vector<64x512xf32>
    %365 = tpu.matmul %364, %362, %cst_137 {dimension_numbers = #tpu.dot_dimension_numbers<[1], [0], [0], [1], [0, 0, 1, 1], [], []>} : vector<64x64xf32>, vector<64x512xf32>, vector<64x512xf32> -> vector<64x512xf32>
    %c2_138 = arith.constant 2 : index
    %c1_139 = arith.constant 1 : index
    %c0_140 = arith.constant 0 : index
    %c0_141 = arith.constant 0 : index
    %366 = vector.load %arg4[%c2_138, %c1_139, %c0_140, %c0_141] : memref<3x2x64x1xf32, #tpu.memory_space<vmem>>, vector<1x1x64x1xf32>
    %367 = vector.shape_cast %366 : vector<1x1x64x1xf32> to vector<64x1xf32>
    %c2_142 = arith.constant 2 : index
    %c1_143 = arith.constant 1 : index
    %c0_144 = arith.constant 0 : index
    %c0_145 = arith.constant 0 : index
    %368 = vector.load %arg5[%c2_142, %c1_143, %c0_144, %c0_145] : memref<3x2x64x1xf32, #tpu.memory_space<vmem>>, vector<1x1x64x1xf32>
    %369 = vector.shape_cast %368 : vector<1x1x64x1xf32> to vector<64x1xf32>
    %370 = vector.extract_strided_slice %365 {offsets = [0, 0], sizes = [32, 512], strides = [1, 1]} : vector<64x512xf32> to vector<32x512xf32>
    %cst_146 = arith.constant dense<0.000000e+00> : vector<512xf32>
    %371 = vector.multi_reduction <add>, %370, %cst_146 [0] : vector<32x512xf32> to vector<512xf32>
    %372 = vector.shape_cast %371 : vector<512xf32> to vector<1x512xf32>
    %cst_147 = arith.constant 3.200000e+01 : f32
    %373 = vector.broadcast %cst_147 : f32 to vector<1x512xf32>
    %374 = arith.divf %372, %373 : vector<1x512xf32>
    %375 = vector.broadcast %374 : vector<1x512xf32> to vector<32x512xf32>
    %376 = arith.subf %370, %375 : vector<32x512xf32>
    %377 = vector.broadcast %374 : vector<1x512xf32> to vector<32x512xf32>
    %378 = arith.subf %370, %377 : vector<32x512xf32>
    %379 = arith.mulf %376, %378 : vector<32x512xf32>
    %cst_148 = arith.constant dense<0.000000e+00> : vector<512xf32>
    %380 = vector.multi_reduction <add>, %379, %cst_148 [0] : vector<32x512xf32> to vector<512xf32>
    %381 = vector.shape_cast %380 : vector<512xf32> to vector<1x512xf32>
    %cst_149 = arith.constant 3.200000e+01 : f32
    %382 = vector.broadcast %cst_149 : f32 to vector<1x512xf32>
    %383 = arith.divf %381, %382 : vector<1x512xf32>
    %384 = vector.broadcast %374 : vector<1x512xf32> to vector<32x512xf32>
    %385 = arith.subf %370, %384 : vector<32x512xf32>
    %cst_150 = arith.constant 9.99999974E-6 : f32
    %386 = vector.broadcast %cst_150 : f32 to vector<1x512xf32>
    %387 = arith.addf %383, %386 : vector<1x512xf32>
    %388 = math.rsqrt %387 : vector<1x512xf32>
    %389 = vector.broadcast %388 : vector<1x512xf32> to vector<32x512xf32>
    %390 = arith.mulf %385, %389 : vector<32x512xf32>
    %391 = vector.extract_strided_slice %365 {offsets = [32, 0], sizes = [32, 512], strides = [1, 1]} : vector<64x512xf32> to vector<32x512xf32>
    %cst_151 = arith.constant dense<0.000000e+00> : vector<512xf32>
    %392 = vector.multi_reduction <add>, %391, %cst_151 [0] : vector<32x512xf32> to vector<512xf32>
    %393 = vector.shape_cast %392 : vector<512xf32> to vector<1x512xf32>
    %cst_152 = arith.constant 3.200000e+01 : f32
    %394 = vector.broadcast %cst_152 : f32 to vector<1x512xf32>
    %395 = arith.divf %393, %394 : vector<1x512xf32>
    %396 = vector.broadcast %395 : vector<1x512xf32> to vector<32x512xf32>
    %397 = arith.subf %391, %396 : vector<32x512xf32>
    %398 = vector.broadcast %395 : vector<1x512xf32> to vector<32x512xf32>
    %399 = arith.subf %391, %398 : vector<32x512xf32>
    %400 = arith.mulf %397, %399 : vector<32x512xf32>
    %cst_153 = arith.constant dense<0.000000e+00> : vector<512xf32>
    %401 = vector.multi_reduction <add>, %400, %cst_153 [0] : vector<32x512xf32> to vector<512xf32>
    %402 = vector.shape_cast %401 : vector<512xf32> to vector<1x512xf32>
    %cst_154 = arith.constant 3.200000e+01 : f32
    %403 = vector.broadcast %cst_154 : f32 to vector<1x512xf32>
    %404 = arith.divf %402, %403 : vector<1x512xf32>
    %405 = vector.broadcast %395 : vector<1x512xf32> to vector<32x512xf32>
    %406 = arith.subf %391, %405 : vector<32x512xf32>
    %cst_155 = arith.constant 9.99999974E-6 : f32
    %407 = vector.broadcast %cst_155 : f32 to vector<1x512xf32>
    %408 = arith.addf %404, %407 : vector<1x512xf32>
    %409 = math.rsqrt %408 : vector<1x512xf32>
    %410 = vector.broadcast %409 : vector<1x512xf32> to vector<32x512xf32>
    %411 = arith.mulf %406, %410 : vector<32x512xf32>
    %412 = tpu.concatenate %390, %411 in 0 : vector<32x512xf32>, vector<32x512xf32> -> vector<64x512xf32>
    %413 = vector.broadcast %367 : vector<64x1xf32> to vector<64x512xf32>
    %414 = arith.mulf %412, %413 : vector<64x512xf32>
    %415 = vector.broadcast %369 : vector<64x1xf32> to vector<64x512xf32>
    %416 = arith.addf %414, %415 : vector<64x512xf32>
    %417 = arith.addf %416, %290 : vector<64x512xf32>
    %c2_156 = arith.constant 2 : index
    %c1_157 = arith.constant 1 : index
    %418 = memref.load %arg1[%c2_156, %c1_157] : memref<3x2xf32, #tpu.memory_space<smem>>
    %419 = vector.extract_strided_slice %417 {offsets = [0, 0], sizes = [32, 512], strides = [1, 1]} : vector<64x512xf32> to vector<32x512xf32>
    %420 = vector.extract_strided_slice %417 {offsets = [32, 0], sizes = [32, 512], strides = [1, 1]} : vector<64x512xf32> to vector<32x512xf32>
    %421 = arith.mulf %419, %419 : vector<32x512xf32>
    %422 = arith.mulf %420, %420 : vector<32x512xf32>
    %423 = arith.addf %421, %422 : vector<32x512xf32>
    %cst_158 = arith.constant 1.000000e-30 : f32
    %424 = vector.broadcast %cst_158 : f32 to vector<32x512xf32>
    %425 = arith.addf %423, %424 : vector<32x512xf32>
    %426 = math.rsqrt %425 : vector<32x512xf32>
    %427 = arith.mulf %423, %426 : vector<32x512xf32>
    %428 = vector.broadcast %418 : f32 to vector<32x512xf32>
    %429 = arith.subf %427, %428 : vector<32x512xf32>
    %cst_159 = arith.constant 0.000000e+00 : f32
    %430 = vector.broadcast %cst_159 : f32 to vector<32x512xf32>
    %431 = arith.maximumf %429, %430 : vector<32x512xf32>
    %432 = arith.mulf %431, %426 : vector<32x512xf32>
    %433 = arith.mulf %419, %432 : vector<32x512xf32>
    %434 = arith.mulf %420, %432 : vector<32x512xf32>
    %435 = tpu.concatenate %433, %434 in 0 : vector<32x512xf32>, vector<32x512xf32> -> vector<64x512xf32>
    %c0_160 = arith.constant 0 : index
    %c0_161 = arith.constant 0 : index
    %436 = vector.load %arg6[%c0_160, %c0_161] : memref<64x512xf32, #tpu.memory_space<vmem>>, vector<64x512xf32>
    tpu.vector_store %arg6[%c0_160, %c0_161], %435 {strides = array<i32>} : memref<64x512xf32, #tpu.memory_space<vmem>>, vector<64x512xf32>,
    return
  }
  func.func @transform_0(%arg0: i32, %arg1: memref<3x2xf32, #tpu.memory_space<smem>>) -> (i32, i32) {
    %c0_i32 = arith.constant 0 : i32
    %c0_i32_0 = arith.constant 0 : i32
    return %c0_i32, %arg0 : i32, i32
  }
  func.func @transform_1(%arg0: i32, %arg1: memref<3x2xf32, #tpu.memory_space<smem>>) -> (i32, i32, i32, i32) {
    %c0_i32 = arith.constant 0 : i32
    %c0_i32_0 = arith.constant 0 : i32
    %c0_i32_1 = arith.constant 0 : i32
    %c0_i32_2 = arith.constant 0 : i32
    %c0_i32_3 = arith.constant 0 : i32
    return %c0_i32, %c0_i32_0, %c0_i32_1, %c0_i32_2 : i32, i32, i32, i32
  }
  func.func @transform_2(%arg0: i32, %arg1: memref<3x2xf32, #tpu.memory_space<smem>>) -> (i32, i32, i32, i32) {
    %c0_i32 = arith.constant 0 : i32
    %c0_i32_0 = arith.constant 0 : i32
    %c0_i32_1 = arith.constant 0 : i32
    %c0_i32_2 = arith.constant 0 : i32
    %c0_i32_3 = arith.constant 0 : i32
    return %c0_i32, %c0_i32_0, %c0_i32_1, %c0_i32_2 : i32, i32, i32, i32
  }
  func.func @transform_3(%arg0: i32, %arg1: memref<3x2xf32, #tpu.memory_space<smem>>) -> (i32, i32, i32, i32) {
    %c0_i32 = arith.constant 0 : i32
    %c0_i32_0 = arith.constant 0 : i32
    %c0_i32_1 = arith.constant 0 : i32
    %c0_i32_2 = arith.constant 0 : i32
    %c0_i32_3 = arith.constant 0 : i32
    return %c0_i32, %c0_i32_0, %c0_i32_1, %c0_i32_2 : i32, i32, i32, i32
  }
  func.func @transform_4(%arg0: i32, %arg1: memref<3x2xf32, #tpu.memory_space<smem>>) -> (i32, i32) {
    %c0_i32 = arith.constant 0 : i32
    %c0_i32_0 = arith.constant 0 : i32
    return %c0_i32, %arg0 : i32, i32
  }
}

</mosaic_0001>

<llo_original>
// kernel: neg.1
$region0: #{neg.1}
  #allocation2 [shape = 's32[1]{0}', space=sflag, size = 0x4, scoped, tag = 'scoped memory for neg.1']
  %s0 = inlined_call_operand.hbm [shape: f32[3,2,32,32], index: 0, kind: input, shape index: {}]
  %s1 = inlined_call_operand.vmem [shape: f32[3,2,32,32], index: 1, kind: output, shape index: {}]
  $region1: #{neg.1} parent=0
    #allocation0 [shape = 'u8[98304]{0}', space=vmem, size = 0x18000, scoped, tag = 'operand span for operand 0']
    #allocation1 [shape = 's32[1]{0}', space=sflag, size = 0x4, scoped, tag = 'scoped memory for neg.1']
    %2 = vsyncpa [#allocation1], 0
    %s4 = ssub.s32 3072, 3072
    %5 = vsyncadd [#allocation1], %s4
    %s6 = sshll.u32 [#allocation0], 4
    %s7 = int_to_ptr.vmem [resolvable:$true] %s6
    %12 = dma.hbm_to_vmem [thread:$0]  %s0, 3072, %s7, [#allocation1], 128, 128, 8
    %13 = dma.done [#allocation1], 3072
    %v14 = vld [vmem:[#allocation0] sm:$0xff]
    %15 = xla_tuple %v14
    %16 = xla_tuple %15
    %v17 = vxor.u32 %v14, 2147483648
    %18 = xla_tuple %v17
    %19 = vst [vmem:[%s1] sm:$0xff] %v17
    %s20 = scalar_lea.vmem [#allocation0], 64
    %v21 = vld [vmem:[%s20] sm:$0xff]
    %22 = xla_tuple %v21
    %23 = xla_tuple %22
    %v24 = vxor.u32 %v21, 2147483648
    %25 = xla_tuple %v24
    %s26 = scalar_lea.vmem %s1, 64
    %27 = vst [vmem:[%s26] sm:$0xff] %v24
    %s28 = scalar_lea.vmem [#allocation0], 128
    %v29 = vld [vmem:[%s28] sm:$0xff]
    %30 = xla_tuple %v29
    %31 = xla_tuple %30
    %v32 = vxor.u32 %v29, 2147483648
    %33 = xla_tuple %v32
    %s34 = scalar_lea.vmem %s1, 128
    %35 = vst [vmem:[%s34] sm:$0xff] %v32
    %s36 = scalar_lea.vmem [#allocation0], 32
    %v37 = vld [vmem:[%s36] sm:$0xff]
    %38 = xla_tuple %v37
    %39 = xla_tuple %38
    %v40 = vxor.u32 %v37, 2147483648
    %41 = xla_tuple %v40
    %s42 = scalar_lea.vmem %s1, 32
    %43 = vst [vmem:[%s42] sm:$0xff] %v40
    %s44 = scalar_lea.vmem [#allocation0], 96
    %v45 = vld [vmem:[%s44] sm:$0xff]
    %46 = xla_tuple %v45
    %47 = xla_tuple %46
    %v48 = vxor.u32 %v45, 2147483648
    %49 = xla_tuple %v48
    %s50 = scalar_lea.vmem %s1, 96
    %51 = vst [vmem:[%s50] sm:$0xff] %v48
    %s52 = scalar_lea.vmem [#allocation0], 160
    %v53 = vld [vmem:[%s52] sm:$0xff]
    %54 = xla_tuple %v53
    %55 = xla_tuple %54
    %v56 = vxor.u32 %v53, 2147483648
    %57 = xla_tuple %v56
    %s58 = scalar_lea.vmem %s1, 160
    %59 = vst [vmem:[%s58] sm:$0xff] %v56
    %s60 = scalar_lea.vmem [#allocation0], 8
    %v61 = vld [vmem:[%s60] sm:$0xff]
    %62 = xla_tuple %v61
    %63 = xla_tuple %62
    %v64 = vxor.u32 %v61, 2147483648
    %65 = xla_tuple %v64
    %s66 = scalar_lea.vmem %s1, 8
    %67 = vst [vmem:[%s66] sm:$0xff] %v64
    %s68 = scalar_lea.vmem [#allocation0], 72
    %v69 = vld [vmem:[%s68] sm:$0xff]
    %70 = xla_tuple %v69
    %71 = xla_tuple %70
    %v72 = vxor.u32 %v69, 2147483648
    %73 = xla_tuple %v72
    %s74 = scalar_lea.vmem %s1, 72
    %75 = vst [vmem:[%s74] sm:$0xff] %v72
    %s76 = scalar_lea.vmem [#allocation0], 136
    %v77 = vld [vmem:[%s76] sm:$0xff]
    %78 = xla_tuple %v77
    %79 = xla_tuple %78
    %v80 = vxor.u32 %v77, 2147483648
    %81 = xla_tuple %v80
    %s82 = scalar_lea.vmem %s1, 136
    %83 = vst [vmem:[%s82] sm:$0xff] %v80
    %s84 = scalar_lea.vmem [#allocation0], 40
    %v85 = vld [vmem:[%s84] sm:$0xff]
    %86 = xla_tuple %v85
    %87 = xla_tuple %86
    %v88 = vxor.u32 %v85, 2147483648
    %89 = xla_tuple %v88
    %s90 = scalar_lea.vmem %s1, 40
    %91 = vst [vmem:[%s90] sm:$0xff] %v88
    %s92 = scalar_lea.vmem [#allocation0], 104
    %v93 = vld [vmem:[%s92] sm:$0xff]
    %94 = xla_tuple %v93
    %95 = xla_tuple %94
    %v96 = vxor.u32 %v93, 2147483648
    %97 = xla_tuple %v96
    %s98 = scalar_lea.vmem %s1, 104
    %99 = vst [vmem:[%s98] sm:$0xff] %v96
    %s100 = scalar_lea.vmem [#allocation0], 168
    %v101 = vld [vmem:[%s100] sm:$0xff]
    %102 = xla_tuple %v101
    %103 = xla_tuple %102
    %v104 = vxor.u32 %v101, 2147483648
    %105 = xla_tuple %v104
    %s106 = scalar_lea.vmem %s1, 168
    %107 = vst [vmem:[%s106] sm:$0xff] %v104
    %s108 = scalar_lea.vmem [#allocation0], 16
    %v109 = vld [vmem:[%s108] sm:$0xff]
    %110 = xla_tuple %v109
    %111 = xla_tuple %110
    %v112 = vxor.u32 %v109, 2147483648
    %113 = xla_tuple %v112
    %s114 = scalar_lea.vmem %s1, 16
    %115 = vst [vmem:[%s114] sm:$0xff] %v112
    %s116 = scalar_lea.vmem [#allocation0], 80
    %v117 = vld [vmem:[%s116] sm:$0xff]
    %118 = xla_tuple %v117
    %119 = xla_tuple %118
    %v120 = vxor.u32 %v117, 2147483648
    %121 = xla_tuple %v120
    %s122 = scalar_lea.vmem %s1, 80
    %123 = vst [vmem:[%s122] sm:$0xff] %v120
    %s124 = scalar_lea.vmem [#allocation0], 144
    %v125 = vld [vmem:[%s124] sm:$0xff]
    %126 = xla_tuple %v125
    %127 = xla_tuple %126
    %v128 = vxor.u32 %v125, 2147483648
    %129 = xla_tuple %v128
    %s130 = scalar_lea.vmem %s1, 144
    %131 = vst [vmem:[%s130] sm:$0xff] %v128
    %s132 = scalar_lea.vmem [#allocation0], 48
    %v133 = vld [vmem:[%s132] sm:$0xff]
    %134 = xla_tuple %v133
    %135 = xla_tuple %134
    %v136 = vxor.u32 %v133, 2147483648
    %137 = xla_tuple %v136
    %s138 = scalar_lea.vmem %s1, 48
    %139 = vst [vmem:[%s138] sm:$0xff] %v136
    %s140 = scalar_lea.vmem [#allocation0], 112
    %v141 = vld [vmem:[%s140] sm:$0xff]
    %142 = xla_tuple %v141
    %143 = xla_tuple %142
    %v144 = vxor.u32 %v141, 2147483648
    %145 = xla_tuple %v144
    %s146 = scalar_lea.vmem %s1, 112
    %147 = vst [vmem:[%s146] sm:$0xff] %v144
    %s148 = scalar_lea.vmem [#allocation0], 176
    %v149 = vld [vmem:[%s148] sm:$0xff]
    %150 = xla_tuple %v149
    %151 = xla_tuple %150
    %v152 = vxor.u32 %v149, 2147483648
    %153 = xla_tuple %v152
    %s154 = scalar_lea.vmem %s1, 176
    %155 = vst [vmem:[%s154] sm:$0xff] %v152
    %s156 = scalar_lea.vmem [#allocation0], 24
    %v157 = vld [vmem:[%s156] sm:$0xff]
    %158 = xla_tuple %v157
    %159 = xla_tuple %158
    %v160 = vxor.u32 %v157, 2147483648
    %161 = xla_tuple %v160
    %s162 = scalar_lea.vmem %s1, 24
    %163 = vst [vmem:[%s162] sm:$0xff] %v160
    %s164 = scalar_lea.vmem [#allocation0], 88
    %v165 = vld [vmem:[%s164] sm:$0xff]
    %166 = xla_tuple %v165
    %167 = xla_tuple %166
    %v168 = vxor.u32 %v165, 2147483648
    %169 = xla_tuple %v168
    %s170 = scalar_lea.vmem %s1, 88
    %171 = vst [vmem:[%s170] sm:$0xff] %v168
    %s172 = scalar_lea.vmem [#allocation0], 152
    %v173 = vld [vmem:[%s172] sm:$0xff]
    %174 = xla_tuple %v173
    %175 = xla_tuple %174
    %v176 = vxor.u32 %v173, 2147483648
    %177 = xla_tuple %v176
    %s178 = scalar_lea.vmem %s1, 152
    %179 = vst [vmem:[%s178] sm:$0xff] %v176
    %s180 = scalar_lea.vmem [#allocation0], 56
    %v181 = vld [vmem:[%s180] sm:$0xff]
    %182 = xla_tuple %v181
    %183 = xla_tuple %182
    %v184 = vxor.u32 %v181, 2147483648
    %185 = xla_tuple %v184
    %s186 = scalar_lea.vmem %s1, 56
    %187 = vst [vmem:[%s186] sm:$0xff] %v184
    %s188 = scalar_lea.vmem [#allocation0], 120
    %v189 = vld [vmem:[%s188] sm:$0xff]
    %190 = xla_tuple %v189
    %191 = xla_tuple %190
    %v192 = vxor.u32 %v189, 2147483648
    %193 = xla_tuple %v192
    %s194 = scalar_lea.vmem %s1, 120
    %195 = vst [vmem:[%s194] sm:$0xff] %v192
    %s196 = scalar_lea.vmem [#allocation0], 184
    %v197 = vld [vmem:[%s196] sm:$0xff]
    %198 = xla_tuple %v197
    %199 = xla_tuple %198
    %v200 = vxor.u32 %v197, 2147483648
    %201 = xla_tuple %v200
    %s202 = scalar_lea.vmem %s1, 184
    %203 = vst [vmem:[%s202] sm:$0xff] %v200
    %204 = vsyncpa [#allocation1], 1

// kernel: cv_resblock_stack_pallas.1
$region0: #{cv_resblock_stack_pallas.1}
  #allocation0 [shape = 'u32[]', space=smem, size = 0x4, offset = 0x4, fixed_abs, tag = 'smem constant byte address 0x4 - core index']
  #allocation1 [shape = 'u32[144,128]{1,0:T(1,128)}', space=vmem, size = 0x12000, scoped, tag = 'internal scratch']
  #allocation2 [shape = 's32[1]{0}', space=sflag, size = 0x4, scoped, tag = 'scoped memory for cv_resblock_stack_pallas.1']
  #allocation3 [shape = 'u8[2048]{0}', space=smem, size = 0x800, scoped, tag = 'prefetched SMEM operand 0']
  %s0 = inlined_call_operand.vmem [shape: f32[3,2], index: 0, kind: input, shape index: {}]
  %s1 = inlined_call_operand.vmem [shape: f32[64,1024], index: 1, kind: input, shape index: {}]
  %s2 = inlined_call_operand.vmem [shape: f32[3,2,64,64], index: 2, kind: input, shape index: {}]
  %s3 = inlined_call_operand.vmem [shape: f32[3,2,64,1], index: 3, kind: input, shape index: {}]
  %s4 = inlined_call_operand.vmem [shape: f32[3,2,64,1], index: 4, kind: input, shape index: {}]
  %s5 = inlined_call_operand.vmem [shape: f32[64,1024], index: 5, kind: output, shape index: {}]
  %s6 = sld [smem:[#allocation0]]
  $region91: #{cv_resblock_stack_pallas.1} parent=0
    _
  %s8 = ssub.s32 1, %s6
  %s9 = scalar_select 0, %s8, %s6
  %s10 = sshll.u32 %s0, 4
  %s11 = int_to_ptr.vmem [resolvable:$true] %s10
  %13 = dma.vmem_to_smem %s11, 64, [#allocation3], [#allocation2]
  %14 = dma.done [#allocation2], 64
  %15 = sfence
  $region1: #{cv_resblock_stack_pallas.1} parent=0
    #allocation4 [shape = 'u8[262144]{0}', space=vmem, size = 0x40000, scoped, tag = 'input window, operand 1']
    #allocation5 [shape = 'u8[262144]{0}', space=vmem, size = 0x40000, scoped, tag = 'output window, operand 0']
    loop: start=0, step=1, limit=4
    $region2: #{cv_resblock_stack_pallas.1} parent=1 // loop_pre_header
      _
    $region3: #{cv_resblock_stack_pallas.1} parent=1 // loop_header
      %s17 = sphi 0, %s21
      %p18 = scmp.ge.s32.totalorder %s17, 4
      %s27 = sphi 0, %s29
      %s30 = sphi 0, %s27
      %s31 = sphi 0, %s30
      %s47 = sphi 0, %s31
      %s51 = sphi 0, %s51
      %s53 = sphi 0, %s51
      %s54 = sphi 0, %s53
      %s68 = sphi 0, %s54
      %s72 = sphi 0, %s72
      %s74 = sphi 0, %s72
      %s75 = sphi 0, %s74
      %s89 = sphi 0, %s75
      %s93 = sphi 0, %s93
      %s95 = sphi 0, %s93
      %s96 = sphi 0, %s95
      %s110 = sphi 0, %s96
      %s116 = sphi 0, %s118
      %s119 = sphi 0, %s116
      %s120 = sphi 0, %s119
      %s136 = sphi 0, %s120
    $region4: #{cv_resblock_stack_pallas.1} parent=1 // loop_header_branch
      %20 = sbr.rel (%p18) target = $region8
    $region5: #{cv_resblock_stack_pallas.1} parent=1 // loop_body
      %s22 = ssub.s32 %s17, 1
      %s23 = ssub.s32 %s17, 2
      %s24 = sadd.s32 %s17, 1
      %s25 = ssub.s32 %s17, %s24
      %p26 = scmp.eq.s32.totalorder %s25, 0
      %s28 = sadd.s32 %s27, 1
      %s29 = scalar_select %p26, %s27, %s28
      %p32 = pneg %p26
      %p33 = scmp.eq.s32.totalorder %s17, 1
      %p34 = por %p32, %p33
      %p35 = scmp.ne.s32.totalorder %s27, %s30
      %p36 = scmp.eq.s32.totalorder %s17, 0
      %p37 = por %p35, %p36
      %p38 = scmp.ne.s32.totalorder %s27, %s30
      %p39 = scmp.eq.s32.totalorder %s22, 1
      %p40 = por %p38, %p39
      %p41 = scmp.ne.s32.totalorder %s30, %s31
      %p42 = scmp.eq.s32.totalorder %s22, 0
      %p43 = por %p41, %p42
      %p44 = scmp.ne.s32.totalorder %s30, %s31
      %p45 = scmp.eq.s32.totalorder %s23, 1
      %p46 = por %p44, %p45
      %p48 = scmp.ne.s32.totalorder %s31, %s47
      %p49 = scmp.eq.s32.totalorder %s23, 0
      %p50 = por %p48, %p49
      %s52 = sadd.s32 %s51, 1
      %p55 = scmp.eq.s32.totalorder %s17, 1
      %p56 = scmp.ne.s32.totalorder %s51, %s53
      %p57 = scmp.eq.s32.totalorder %s17, 0
      %p58 = por %p56, %p57
      %p59 = scmp.ne.s32.totalorder %s51, %s53
      %p60 = scmp.eq.s32.totalorder %s22, 1
      %p61 = por %p59, %p60
      %p62 = scmp.ne.s32.totalorder %s53, %s54
      %p63 = scmp.eq.s32.totalorder %s22, 0
      %p64 = por %p62, %p63
      %p65 = scmp.ne.s32.totalorder %s53, %s54
      %p66 = scmp.eq.s32.totalorder %s23, 1
      %p67 = por %p65, %p66
      %p69 = scmp.ne.s32.totalorder %s54, %s68
      %p70 = scmp.eq.s32.totalorder %s23, 0
      %p71 = por %p69, %p70
      %s73 = sadd.s32 %s72, 1
      %p76 = scmp.eq.s32.totalorder %s17, 1
      %p77 = scmp.ne.s32.totalorder %s72, %s74
      %p78 = scmp.eq.s32.totalorder %s17, 0
      %p79 = por %p77, %p78
      %p80 = scmp.ne.s32.totalorder %s72, %s74
      %p81 = scmp.eq.s32.totalorder %s22, 1
      %p82 = por %p80, %p81
      %p83 = scmp.ne.s32.totalorder %s74, %s75
      %p84 = scmp.eq.s32.totalorder %s22, 0
      %p85 = por %p83, %p84
      %p86 = scmp.ne.s32.totalorder %s74, %s75
      %p87 = scmp.eq.s32.totalorder %s23, 1
      %p88 = por %p86, %p87
      %p90 = scmp.ne.s32.totalorder %s75, %s89
      %p91 = scmp.eq.s32.totalorder %s23, 0
      %p92 = por %p90, %p91
      %s94 = sadd.s32 %s93, 1
      %p97 = scmp.eq.s32.totalorder %s17, 1
      %p98 = scmp.ne.s32.totalorder %s93, %s95
      %p99 = scmp.eq.s32.totalorder %s17, 0
      %p100 = por %p98, %p99
      %p101 = scmp.ne.s32.totalorder %s93, %s95
      %p102 = scmp.eq.s32.totalorder %s22, 1
      %p103 = por %p101, %p102
      %p104 = scmp.ne.s32.totalorder %s95, %s96
      %p105 = scmp.eq.s32.totalorder %s22, 0
      %p106 = por %p104, %p105
      %p107 = scmp.ne.s32.totalorder %s95, %s96
      %p108 = scmp.eq.s32.totalorder %s23, 1
      %p109 = por %p107, %p108
      %p111 = scmp.ne.s32.totalorder %s96, %s110
      %p112 = scmp.eq.s32.totalorder %s23, 0
      %p113 = por %p111, %p112
      %s114 = ssub.s32 %s17, %s24
      %p115 = scmp.eq.s32.totalorder %s114, 0
      %s117 = sadd.s32 %s116, 1
      %s118 = scalar_select %p115, %s116, %s117
      %p121 = pneg %p115
      %p122 = scmp.eq.s32.totalorder %s17, 1
      %p123 = por %p121, %p122
      %p124 = scmp.ne.s32.totalorder %s116, %s119
      %p125 = scmp.eq.s32.totalorder %s17, 0
      %p126 = por %p124, %p125
      %p127 = scmp.ne.s32.totalorder %s116, %s119
      %p128 = scmp.eq.s32.totalorder %s22, 1
      %p129 = por %p127, %p128
      %p130 = scmp.ne.s32.totalorder %s119, %s120
      %p131 = scmp.eq.s32.totalorder %s22, 0
      %p132 = por %p130, %p131
      %p133 = scmp.ne.s32.totalorder %s119, %s120
      %p134 = scmp.eq.s32.totalorder %s23, 1
      %p135 = por %p133, %p134
      %p137 = scmp.ne.s32.totalorder %s120, %s136
      %p138 = scmp.eq.s32.totalorder %s23, 0
      %p139 = por %p137, %p138
      %p140 = scmp.le.s32.totalorder 1, %s17
      %p141 = scmp.lt.s32.totalorder %s17, 3
      %p142 = pnand %p140, %p141
      %p143 = pneg %p142
      // Predicated region
      $region9: #{cv_resblock_stack_pallas.1} parent=5 // pred_check
        _
      $region10: #{cv_resblock_stack_pallas.1} parent=5 // pred_check_branch
        %145 = sbr.rel (%p142) target = $region12
      $region11: #{cv_resblock_stack_pallas.1} parent=5 // pred_region
        %s146 = ssub.s32 %s17, 1
        // Predicated region
        $region13: #{cv_resblock_stack_pallas.1} parent=11 // pred_check
          %p147 = pneg %p64
        $region14: #{cv_resblock_stack_pallas.1} parent=11 // pred_check_branch
          %149 = sbr.rel (%p147) target = $region16
        $region15: #{cv_resblock_stack_pallas.1} parent=11 // pred_region
          _
        $region16: #{cv_resblock_stack_pallas.1} parent=11 // pred_fallthru
          _
        // Predicated region
        $region17: #{cv_resblock_stack_pallas.1} parent=11 // pred_check
          %p150 = pneg %p85
        $region18: #{cv_resblock_stack_pallas.1} parent=11 // pred_check_branch
          %152 = sbr.rel (%p150) target = $region20
        $region19: #{cv_resblock_stack_pallas.1} parent=11 // pred_region
          _
        $region20: #{cv_resblock_stack_pallas.1} parent=11 // pred_fallthru
          _
        // Predicated region
        $region21: #{cv_resblock_stack_pallas.1} parent=11 // pred_check
          %p153 = pneg %p106
        $region22: #{cv_resblock_stack_pallas.1} parent=11 // pred_check_branch
          %155 = sbr.rel (%p153) target = $region24
        $region23: #{cv_resblock_stack_pallas.1} parent=11 // pred_region
          _
        $region24: #{cv_resblock_stack_pallas.1} parent=11 // pred_fallthru
          _
      $region12: #{cv_resblock_stack_pallas.1} parent=5 // pred_fallthru
        _
      %p156 = scmp.lt.s32.totalorder %s17, 2
      // Predicated region
      $region25: #{cv_resblock_stack_pallas.1} parent=5 // pred_check
        %p157 = pneg %p156
      $region26: #{cv_resblock_stack_pallas.1} parent=5 // pred_check_branch
        %159 = sbr.rel (%p157) target = $region28
      $region27: #{cv_resblock_stack_pallas.1} parent=5 // pred_region
        // Predicated region
        $region29: #{cv_resblock_stack_pallas.1} parent=27 // pred_check
          %p160 = pneg %p37
        $region30: #{cv_resblock_stack_pallas.1} parent=27 // pred_check_branch
          %162 = sbr.rel (%p160) target = $region32
        $region31: #{cv_resblock_stack_pallas.1} parent=27 // pred_region
          %s163 = sand.u32 %s27, 1
          %s164 = sand.u32 %s27, 1
          %s165 = smul.addr %s164, 256
          %s166 = scalar_lea.vmem [#allocation4], %s165
          %s167 = smul.u32 4, %s17
          %s168 = smul.addr %s167, 8
          %s169 = scalar_lea.vmem %s1, %s168
          // Predicated region
          $region33: #{cv_resblock_stack_pallas.1} parent=31 // pred_check
            _
          $region34: #{cv_resblock_stack_pallas.1} parent=31 // pred_check_branch
            %171 = sbr.rel (0) target = $region36
          $region35: #{cv_resblock_stack_pallas.1} parent=31 // pred_region
            // Predicated region
            $region37: #{cv_resblock_stack_pallas.1} parent=35 // pred_check
              _
            $region38: #{cv_resblock_stack_pallas.1} parent=35 // pred_check_branch
              %173 = sbr.rel (0) target = $region40
            $region39: #{cv_resblock_stack_pallas.1} parent=35 // pred_region
              loop: start=0, step=1, limit=1
              $region41: #{cv_resblock_stack_pallas.1} parent=39 // loop_pre_header
                _
              $region42: #{cv_resblock_stack_pallas.1} parent=39 // loop_header
                %s175 = sphi 0, %s179
                %p176 = scmp.ge.s32.totalorder %s175, 1
                %s180 = sphi %s169, %s169
                %s181 = sphi %s166, %s166
              $region43: #{cv_resblock_stack_pallas.1} parent=39 // loop_header_branch
                %178 = sbr.rel (%p176) target = $region47
              $region44: #{cv_resblock_stack_pallas.1} parent=39 // loop_body
                %v182 = vld [vmem:[%s180] sm:$0xff]
                %183 = vst [vmem:[%s181] sm:$0xff] %v182
                %v184 = vld [vmem:[%s180 + $0x8] sm:$0xff]
                %185 = vst [vmem:[%s181 + $0x8] sm:$0xff] %v184
                %v186 = vld [vmem:[%s180 + $0x10] sm:$0xff]
                %187 = vst [vmem:[%s181 + $0x10] sm:$0xff] %v186
                %v188 = vld [vmem:[%s180 + $0x18] sm:$0xff]
                %189 = vst [vmem:[%s181 + $0x18] sm:$0xff] %v188
                %v190 = vld [vmem:[%s180 + $0x40] sm:$0xff]
                %191 = vst [vmem:[%s181 + $0x20] sm:$0xff] %v190
                %v192 = vld [vmem:[%s180 + $0x48] sm:$0xff]
                %193 = vst [vmem:[%s181 + $0x28] sm:$0xff] %v192
                %v194 = vld [vmem:[%s180 + $0x50] sm:$0xff]
                %195 = vst [vmem:[%s181 + $0x30] sm:$0xff] %v194
                %v196 = vld [vmem:[%s180 + $0x58] sm:$0xff]
                %197 = vst [vmem:[%s181 + $0x38] sm:$0xff] %v196
                %v198 = vld [vmem:[%s180 + $0x80] sm:$0xff]
                %199 = vst [vmem:[%s181 + $0x40] sm:$0xff] %v198
                %v200 = vld [vmem:[%s180 + $0x88] sm:$0xff]
                %201 = vst [vmem:[%s181 + $0x48] sm:$0xff] %v200
                %v202 = vld [vmem:[%s180 + $0x90] sm:$0xff]
                %203 = vst [vmem:[%s181 + $0x50] sm:$0xff] %v202
                %v204 = vld [vmem:[%s180 + $0x98] sm:$0xff]
                %205 = vst [vmem:[%s181 + $0x58] sm:$0xff] %v204
                %v206 = vld [vmem:[%s180 + $0xc0] sm:$0xff]
                %207 = vst [vmem:[%s181 + $0x60] sm:$0xff] %v206
                %v208 = vld [vmem:[%s180 + $0xc8] sm:$0xff]
                %209 = vst [vmem:[%s181 + $0x68] sm:$0xff] %v208
                %v210 = vld [vmem:[%s180 + $0xd0] sm:$0xff]
                %211 = vst [vmem:[%s181 + $0x70] sm:$0xff] %v210
                %v212 = vld [vmem:[%s180 + $0xd8] sm:$0xff]
                %213 = vst [vmem:[%s181 + $0x78] sm:$0xff] %v212
                %v214 = vld [vmem:[%s180 + $0x100] sm:$0xff]
                %215 = vst [vmem:[%s181 + $0x80] sm:$0xff] %v214
                %v216 = vld [vmem:[%s180 + $0x108] sm:$0xff]
                %217 = vst [vmem:[%s181 + $0x88] sm:$0xff] %v216
                %v218 = vld [vmem:[%s180 + $0x110] sm:$0xff]
                %219 = vst [vmem:[%s181 + $0x90] sm:$0xff] %v218
                %v220 = vld [vmem:[%s180 + $0x118] sm:$0xff]
                %221 = vst [vmem:[%s181 + $0x98] sm:$0xff] %v220
                %v222 = vld [vmem:[%s180 + $0x140] sm:$0xff]
                %223 = vst [vmem:[%s181 + $0xa0] sm:$0xff] %v222
                %v224 = vld [vmem:[%s180 + $0x148] sm:$0xff]
                %225 = vst [vmem:[%s181 + $0xa8] sm:$0xff] %v224
                %v226 = vld [vmem:[%s180 + $0x150] sm:$0xff]
                %227 = vst [vmem:[%s181 + $0xb0] sm:$0xff] %v226
                %v228 = vld [vmem:[%s180 + $0x158] sm:$0xff]
                %229 = vst [vmem:[%s181 + $0xb8] sm:$0xff] %v228
                %v230 = vld [vmem:[%s180 + $0x180] sm:$0xff]
                %231 = vst [vmem:[%s181 + $0xc0] sm:$0xff] %v230
                %v232 = vld [vmem:[%s180 + $0x188] sm:$0xff]
                %233 = vst [vmem:[%s181 + $0xc8] sm:$0xff] %v232
                %v234 = vld [vmem:[%s180 + $0x190] sm:$0xff]
                %235 = vst [vmem:[%s181 + $0xd0] sm:$0xff] %v234
                %v236 = vld [vmem:[%s180 + $0x198] sm:$0xff]
                %237 = vst [vmem:[%s181 + $0xd8] sm:$0xff] %v236
                %v238 = vld [vmem:[%s180 + $0x1c0] sm:$0xff]
                %239 = vst [vmem:[%s181 + $0xe0] sm:$0xff] %v238
                %v240 = vld [vmem:[%s180 + $0x1c8] sm:$0xff]
                %241 = vst [vmem:[%s181 + $0xe8] sm:$0xff] %v240
                %v242 = vld [vmem:[%s180 + $0x1d0] sm:$0xff]
                %243 = vst [vmem:[%s181 + $0xf0] sm:$0xff] %v242
                %v244 = vld [vmem:[%s180 + $0x1d8] sm:$0xff]
                %245 = vst [vmem:[%s181 + $0xf8] sm:$0xff] %v244
              $region45: #{cv_resblock_stack_pallas.1} parent=39 // loop_footer
                %s179 = sadd.s32 1, %s175
              $region46: #{cv_resblock_stack_pallas.1} parent=39 // loop_footer_branch
                %174 = sbr.rel target = $region42
              $region47: #{cv_resblock_stack_pallas.1} parent=39 // loop_exit
                _
            $region40: #{cv_resblock_stack_pallas.1} parent=35 // pred_fallthru
              _
            // Predicated region
            $region48: #{cv_resblock_stack_pallas.1} parent=35 // pred_check
              _
            $region49: #{cv_resblock_stack_pallas.1} parent=35 // pred_check_branch
              %247 = sbr.rel target = $region51
            $region50: #{cv_resblock_stack_pallas.1} parent=35 // pred_region
              _
            $region51: #{cv_resblock_stack_pallas.1} parent=35 // pred_fallthru
              _
          $region36: #{cv_resblock_stack_pallas.1} parent=31 // pred_fallthru
            _
          %248 = vnop
        $region32: #{cv_resblock_stack_pallas.1} parent=27 // pred_fallthru
          _
      $region28: #{cv_resblock_stack_pallas.1} parent=5 // pred_fallthru
        _
      %p249 = scmp.le.s32.totalorder 1, %s17
      %p250 = scmp.lt.s32.totalorder %s17, 3
      %p251 = pnand %p249, %p250
      %p252 = pneg %p251
      // Predicated region
      $region52: #{cv_resblock_stack_pallas.1} parent=5 // pred_check
        _
      $region53: #{cv_resblock_stack_pallas.1} parent=5 // pred_check_branch
        %254 = sbr.rel (%p251) target = $region55
      $region54: #{cv_resblock_stack_pallas.1} parent=5 // pred_region
        %s255 = ssub.s32 %s17, 1
        %s256 = sand.u32 %s30, 1
        %s257 = sand.u32 %s30, 1
        %s258 = smul.addr %s257, 256
        %s259 = scalar_lea.vmem [#allocation4], %s258
        // Predicated region
        $region56: #{cv_resblock_stack_pallas.1} parent=54 // pred_check
          %p260 = pneg %p43
        $region57: #{cv_resblock_stack_pallas.1} parent=54 // pred_check_branch
          %262 = sbr.rel (%p260) target = $region59
        $region58: #{cv_resblock_stack_pallas.1} parent=54 // pred_region
          _
        $region59: #{cv_resblock_stack_pallas.1} parent=54 // pred_fallthru
          _
        %s263 = sand.u32 %s30, 1
        %s264 = sand.u32 %s30, 1
        %s265 = smul.addr %s264, 256
        %s266 = scalar_lea.vmem [#allocation4], %s265
        %p267 = pneg %p43
        %p268 = pneg %p40
        %p269 = pneg %p64
        %p270 = pneg %p61
        %p271 = pneg %p85
        %p272 = pneg %p82
        %p273 = pneg %p106
        %p274 = pneg %p103
        %p275 = pneg %p132
        %p276 = pneg %p129
        %s277 = sand.u32 %s119, 1
        %s278 = sand.u32 %s119, 1
        %s279 = smul.addr %s278, 256
        %s280 = scalar_lea.vmem [#allocation5], %s279
        %s281 = smul.u32 4, %s22
        %s282 = smul.u32 4, %s22
        %v283 = vld [vmem:[%s259] sm:$0xff]
        %v284 = vld [vmem:[%s259 + $0x8] sm:$0xff]
        %v285 = vld [vmem:[%s259 + $0x10] sm:$0xff]
        %v286 = vld [vmem:[%s259 + $0x18] sm:$0xff]
        %v287 = vld [vmem:[%s259 + $0x20] sm:$0xff]
        %v288 = vld [vmem:[%s259 + $0x28] sm:$0xff]
        %v289 = vld [vmem:[%s259 + $0x30] sm:$0xff]
        %v290 = vld [vmem:[%s259 + $0x38] sm:$0xff]
        %v291 = vld [vmem:[%s259 + $0x40] sm:$0xff]
        %v292 = vld [vmem:[%s259 + $0x48] sm:$0xff]
        %v293 = vld [vmem:[%s259 + $0x50] sm:$0xff]
        %v294 = vld [vmem:[%s259 + $0x58] sm:$0xff]
        %v295 = vld [vmem:[%s259 + $0x60] sm:$0xff]
        %v296 = vld [vmem:[%s259 + $0x68] sm:$0xff]
        %v297 = vld [vmem:[%s259 + $0x70] sm:$0xff]
        %v298 = vld [vmem:[%s259 + $0x78] sm:$0xff]
        %v299 = vld [vmem:[%s259 + $0x80] sm:$0xff]
        %v300 = vld [vmem:[%s259 + $0x88] sm:$0xff]
        %v301 = vld [vmem:[%s259 + $0x90] sm:$0xff]
        %v302 = vld [vmem:[%s259 + $0x98] sm:$0xff]
        %v303 = vld [vmem:[%s259 + $0xa0] sm:$0xff]
        %v304 = vld [vmem:[%s259 + $0xa8] sm:$0xff]
        %v305 = vld [vmem:[%s259 + $0xb0] sm:$0xff]
        %v306 = vld [vmem:[%s259 + $0xb8] sm:$0xff]
        %v307 = vld [vmem:[%s259 + $0xc0] sm:$0xff]
        %v308 = vld [vmem:[%s259 + $0xc8] sm:$0xff]
        %v309 = vld [vmem:[%s259 + $0xd0] sm:$0xff]
        %v310 = vld [vmem:[%s259 + $0xd8] sm:$0xff]
        %v311 = vld [vmem:[%s259 + $0xe0] sm:$0xff]
        %v312 = vld [vmem:[%s259 + $0xe8] sm:$0xff]
        %v313 = vld [vmem:[%s259 + $0xf0] sm:$0xff]
        %v314 = vld [vmem:[%s259 + $0xf8] sm:$0xff]
        %v315 = vld [vmem:[%s2] sm:$0xff]
        %v316 = vld [vmem:[%s2 + $0x8] sm:$0xff]
        %v317 = vld [vmem:[%s2 + $0x10] sm:$0xff]
        %v318 = vld [vmem:[%s2 + $0x18] sm:$0xff]
        %v319 = vld [vmem:[%s2 + $0x20] sm:$0xff]
        %v320 = vld [vmem:[%s2 + $0x28] sm:$0xff]
        %v321 = vld [vmem:[%s2 + $0x30] sm:$0xff]
        %v322 = vld [vmem:[%s2 + $0x38] sm:$0xff]
        %vm323 = vcmask 523264
        %v325 = vsel %vm323, %v315, 0
        %v328 = vsel %vm323, %v316, 0
        %v331 = vsel %vm323, %v317, 0
        %v334 = vsel %vm323, %v318, 0
        %v337 = vsel %vm323, %v319, 0
        %v340 = vsel %vm323, %v320, 0
        %v343 = vsel %vm323, %v321, 0
        %v346 = vsel %vm323, %v322, 0
        %348 = vmatprep.subr.mxu0 0.0
        %349 = vmatpush1.msra.mxu0 0.0
        %350 = vmatprep.subr.mxu0 0.0
        %351 = vmatpush1.msra.mxu0 0.0
        %352 = vmatprep.subr.mxu0 0.0
        %353 = vmatpush1.msra.mxu0 0.0
        %354 = vmatprep.subr.mxu0 0.0
        %355 = vmatpush1.msra.mxu0 0.0
        %356 = vmatprep.subr.mxu0 0.0
        %357 = vmatpush1.msra.mxu0 0.0
        %358 = vmatprep.subr.mxu0 0.0
        %359 = vmatpush1.msra.mxu0 0.0
        %360 = vmatprep.subr.mxu0 0.0
        %361 = vmatpush1.msra.mxu0 0.0
        %362 = vmatprep.subr.mxu0 0.0
        %363 = vmatpush1.msra.mxu0 0.0
        %364 = vmatprep.subr.mxu0 %v312
        %365 = vmatpush1.msra.mxu0 %v311
        %366 = vmatprep.subr.mxu0 %v308
        %367 = vmatpush1.msra.mxu0 %v307
        %368 = vmatprep.subr.mxu0 %v304
        %369 = vmatpush1.msra.mxu0 %v303
        %370 = vmatprep.subr.mxu0 %v300
        %371 = vmatpush1.msra.mxu0 %v299
        %372 = vmatprep.subr.mxu0 %v296
        %373 = vmatpush1.msra.mxu0 %v295
        %374 = vmatprep.subr.mxu0 %v292
        %375 = vmatpush1.msra.mxu0 %v291
        %376 = vmatprep.subr.mxu0 %v288
        %377 = vmatpush1.msra.mxu0 %v287
        %378 = vmatprep.subr.mxu0 %v284
        %379 = vmatpush1.msra.mxu0 %v283
        %380 = vmatprep.subr.mxu0 0.0
        %381 = vmatpush2.msra.mxu0 0.0
        %382 = vmatprep.subr.mxu0 0.0
        %383 = vmatpush2.msra.mxu0 0.0
        %384 = vmatprep.subr.mxu0 0.0
        %385 = vmatpush2.msra.mxu0 0.0
        %386 = vmatprep.subr.mxu0 0.0
        %387 = vmatpush2.msra.mxu0 0.0
        %388 = vmatprep.subr.mxu0 0.0
        %389 = vmatpush2.msra.mxu0 0.0
        %390 = vmatprep.subr.mxu0 0.0
        %391 = vmatpush2.msra.mxu0 0.0
        %392 = vmatprep.subr.mxu0 0.0
        %393 = vmatpush2.msra.mxu0 0.0
        %394 = vmatprep.subr.mxu0 0.0
        %395 = vmatpush2.msra.mxu0 0.0
        %396 = vmatprep.subr.mxu0 0.0
        %397 = vmatpush2.msra.mxu0 0.0
        %398 = vmatprep.subr.mxu0 0.0
        %399 = vmatpush2.msra.mxu0 0.0
        %400 = vmatprep.subr.mxu0 0.0
        %401 = vmatpush2.msra.mxu0 0.0
        %402 = vmatprep.subr.mxu0 0.0
        %403 = vmatpush2.msra.mxu0 0.0
        %404 = vmatprep.subr.mxu0 0.0
        %405 = vmatpush2.msra.mxu0 0.0
        %406 = vmatprep.subr.mxu0 0.0
        %407 = vmatpush2.msra.mxu0 0.0
        %408 = vmatprep.subr.mxu0 0.0
        %409 = vmatpush2.msra.mxu0 0.0
        %410 = vmatprep.subr.mxu0 0.0
        %411 = vmatpush2.msra.mxu0 0.0
        %412 = vmatprep.mubr.f32.mxu0 0.0
        %413 = vmatmul.mubr.f32.gmra.mxu0 %v325
        %v414 = vpop.f32.mrf.mxu0
        %v415 = vadd.f32 0.0, %v414
        %v416 = vpop.f32.mrf.mxu0
        %v417 = vadd.f32 0.0, %v416
        %418 = vmatprep.mubr.f32.mxu0 0.0
        %419 = vmatmul.mubr.f32.gmra.mxu0 %v328
        %v420 = vpop.f32.mrf.mxu0
        %v421 = vadd.f32 0.0, %v420
        %v422 = vpop.f32.mrf.mxu0
        %v423 = vadd.f32 0.0, %v422
        %424 = vmatprep.mubr.f32.mxu0 0.0
        %425 = vmatmul.mubr.f32.gmra.mxu0 %v331
        %v426 = vpop.f32.mrf.mxu0
        %v427 = vadd.f32 0.0, %v426
        %v428 = vpop.f32.mrf.mxu0
        %v429 = vadd.f32 0.0, %v428
        %430 = vmatprep.mubr.f32.mxu0 0.0
        %431 = vmatmul.mubr.f32.gmra.mxu0 %v334
        %v432 = vpop.f32.mrf.mxu0
        %v433 = vadd.f32 0.0, %v432
        %v434 = vpop.f32.mrf.mxu0
        %v435 = vadd.f32 0.0, %v434
        %436 = vmatprep.mubr.f32.mxu0 0.0
        %437 = vmatmul.mubr.f32.gmra.mxu0 %v337
        %v438 = vpop.f32.mrf.mxu0
        %v439 = vadd.f32 0.0, %v438
        %v440 = vpop.f32.mrf.mxu0
        %v441 = vadd.f32 0.0, %v440
        %442 = vmatprep.mubr.f32.mxu0 0.0
        %443 = vmatmul.mubr.f32.gmra.mxu0 %v340
        %v444 = vpop.f32.mrf.mxu0
        %v445 = vadd.f32 0.0, %v444
        %v446 = vpop.f32.mrf.mxu0
        %v447 = vadd.f32 0.0, %v446
        %448 = vmatprep.mubr.f32.mxu0 0.0
        %449 = vmatmul.mubr.f32.gmra.mxu0 %v343
        %v450 = vpop.f32.mrf.mxu0
        %v451 = vadd.f32 0.0, %v450
        %v452 = vpop.f32.mrf.mxu0
        %v453 = vadd.f32 0.0, %v452
        %454 = vmatprep.mubr.f32.mxu0 0.0
        %455 = vmatmul.mubr.f32.gmra.mxu0 %v346
        %v456 = vpop.f32.mrf.mxu0
        %v457 = vadd.f32 0.0, %v456
        %v458 = vpop.f32.mrf.mxu0
        %v459 = vadd.f32 0.0, %v458
        %460 = vdwg.mxu0
        %461 = vmatprep.subr.mxu0 0.0
        %462 = vmatpush1.msra.mxu0 0.0
        %463 = vmatprep.subr.mxu0 0.0
        %464 = vmatpush1.msra.mxu0 0.0
        %465 = vmatprep.subr.mxu0 0.0
        %466 = vmatpush1.msra.mxu0 0.0
        %467 = vmatprep.subr.mxu0 0.0
        %468 = vmatpush1.msra.mxu0 0.0
        %469 = vmatprep.subr.mxu0 0.0
        %470 = vmatpush1.msra.mxu0 0.0
        %471 = vmatprep.subr.mxu0 0.0
        %472 = vmatpush1.msra.mxu0 0.0
        %473 = vmatprep.subr.mxu0 0.0
        %474 = vmatpush1.msra.mxu0 0.0
        %475 = vmatprep.subr.mxu0 0.0
        %476 = vmatpush1.msra.mxu0 0.0
        %477 = vmatprep.subr.mxu0 %v314
        %478 = vmatpush1.msra.mxu0 %v313
        %479 = vmatprep.subr.mxu0 %v310
        %480 = vmatpush1.msra.mxu0 %v309
        %481 = vmatprep.subr.mxu0 %v306
        %482 = vmatpush1.msra.mxu0 %v305
        %483 = vmatprep.subr.mxu0 %v302
        %484 = vmatpush1.msra.mxu0 %v301
        %485 = vmatprep.subr.mxu0 %v298
        %486 = vmatpush1.msra.mxu0 %v297
        %487 = vmatprep.subr.mxu0 %v294
        %488 = vmatpush1.msra.mxu0 %v293
        %489 = vmatprep.subr.mxu0 %v290
        %490 = vmatpush1.msra.mxu0 %v289
        %491 = vmatprep.subr.mxu0 %v286
        %492 = vmatpush1.msra.mxu0 %v285
        %493 = vmatprep.subr.mxu0 0.0
        %494 = vmatpush2.msra.mxu0 0.0
        %495 = vmatprep.subr.mxu0 0.0
        %496 = vmatpush2.msra.mxu0 0.0
        %497 = vmatprep.subr.mxu0 0.0
        %498 = vmatpush2.msra.mxu0 0.0
        %499 = vmatprep.subr.mxu0 0.0
        %500 = vmatpush2.msra.mxu0 0.0
        %501 = vmatprep.subr.mxu0 0.0
        %502 = vmatpush2.msra.mxu0 0.0
        %503 = vmatprep.subr.mxu0 0.0
        %504 = vmatpush2.msra.mxu0 0.0
        %505 = vmatprep.subr.mxu0 0.0
        %506 = vmatpush2.msra.mxu0 0.0
        %507 = vmatprep.subr.mxu0 0.0
        %508 = vmatpush2.msra.mxu0 0.0
        %509 = vmatprep.subr.mxu0 0.0
        %510 = vmatpush2.msra.mxu0 0.0
        %511 = vmatprep.subr.mxu0 0.0
        %512 = vmatpush2.msra.mxu0 0.0
        %513 = vmatprep.subr.mxu0 0.0
        %514 = vmatpush2.msra.mxu0 0.0
        %515 = vmatprep.subr.mxu0 0.0
        %516 = vmatpush2.msra.mxu0 0.0
        %517 = vmatprep.subr.mxu0 0.0
        %518 = vmatpush2.msra.mxu0 0.0
        %519 = vmatprep.subr.mxu0 0.0
        %520 = vmatpush2.msra.mxu0 0.0
        %521 = vmatprep.subr.mxu0 0.0
        %522 = vmatpush2.msra.mxu0 0.0
        %523 = vmatprep.subr.mxu0 0.0
        %524 = vmatpush2.msra.mxu0 0.0
        %525 = vmatprep.mubr.f32.mxu0 0.0
        %526 = vmatmul.mubr.f32.gmra.mxu0 %v325
        %v527 = vpop.f32.mrf.mxu0
        %v528 = vadd.f32 0.0, %v527
        %v529 = vpop.f32.mrf.mxu0
        %v530 = vadd.f32 0.0, %v529
        %531 = vmatprep.mubr.f32.mxu0 0.0
        %532 = vmatmul.mubr.f32.gmra.mxu0 %v328
        %v533 = vpop.f32.mrf.mxu0
        %v534 = vadd.f32 0.0, %v533
        %v535 = vpop.f32.mrf.mxu0
        %v536 = vadd.f32 0.0, %v535
        %537 = vmatprep.mubr.f32.mxu0 0.0
        %538 = vmatmul.mubr.f32.gmra.mxu0 %v331
        %v539 = vpop.f32.mrf.mxu0
        %v540 = vadd.f32 0.0, %v539
        %v541 = vpop.f32.mrf.mxu0
        %v542 = vadd.f32 0.0, %v541
        %543 = vmatprep.mubr.f32.mxu0 0.0
        %544 = vmatmul.mubr.f32.gmra.mxu0 %v334
        %v545 = vpop.f32.mrf.mxu0
        %v546 = vadd.f32 0.0, %v545
        %v547 = vpop.f32.mrf.mxu0
        %v548 = vadd.f32 0.0, %v547
        %549 = vmatprep.mubr.f32.mxu0 0.0
        %550 = vmatmul.mubr.f32.gmra.mxu0 %v337
        %v551 = vpop.f32.mrf.mxu0
        %v552 = vadd.f32 0.0, %v551
        %v553 = vpop.f32.mrf.mxu0
        %v554 = vadd.f32 0.0, %v553
        %555 = vmatprep.mubr.f32.mxu0 0.0
        %556 = vmatmul.mubr.f32.gmra.mxu0 %v340
        %v557 = vpop.f32.mrf.mxu0
        %v558 = vadd.f32 0.0, %v557
        %v559 = vpop.f32.mrf.mxu0
        %v560 = vadd.f32 0.0, %v559
        %561 = vmatprep.mubr.f32.mxu0 0.0
        %562 = vmatmul.mubr.f32.gmra.mxu0 %v343
        %v563 = vpop.f32.mrf.mxu0
        %v564 = vadd.f32 0.0, %v563
        %v565 = vpop.f32.mrf.mxu0
        %v566 = vadd.f32 0.0, %v565
        %567 = vmatprep.mubr.f32.mxu0 0.0
        %568 = vmatmul.mubr.f32.gmra.mxu0 %v346
        %v569 = vpop.f32.mrf.mxu0
        %v570 = vadd.f32 0.0, %v569
        %v571 = vpop.f32.mrf.mxu0
        %v572 = vadd.f32 0.0, %v571
        %573 = vdwg.mxu0
        %v574 = vld [vmem:[%s3] sm:$0xff]
        %v575 = vld [vmem:[%s3 + $0x8] sm:$0xff]
        %v576 = vld [vmem:[%s3 + $0x10] sm:$0xff]
        %v577 = vld [vmem:[%s3 + $0x18] sm:$0xff]
        %v578 = vld [vmem:[%s3 + $0x20] sm:$0xff]
        %v579 = vld [vmem:[%s3 + $0x28] sm:$0xff]
        %v580 = vld [vmem:[%s3 + $0x30] sm:$0xff]
        %v581 = vld [vmem:[%s3 + $0x38] sm:$0xff]
        %v582 = vld [vmem:[%s4] sm:$0xff]
        %v583 = vld [vmem:[%s4 + $0x8] sm:$0xff]
        %v584 = vld [vmem:[%s4 + $0x10] sm:$0xff]
        %v585 = vld [vmem:[%s4 + $0x18] sm:$0xff]
        %v586 = vld [vmem:[%s4 + $0x20] sm:$0xff]
        %v587 = vld [vmem:[%s4 + $0x28] sm:$0xff]
        %v588 = vld [vmem:[%s4 + $0x30] sm:$0xff]
        %v589 = vld [vmem:[%s4 + $0x38] sm:$0xff]
        %v590 = vadd.f32 %v415, %v421
        %v591 = vadd.f32 %v590, %v427
        %v592 = vadd.f32 %v591, %v433
        %v593 = vrot.slane %v592, 4
        %v594 = vadd.f32 %v592, %v593
        %v595 = vrot.slane %v594, 2
        %v596 = vadd.f32 %v594, %v595
        %v597 = vrot.slane %v596, 1
        %v598 = vadd.f32 %v596, %v597
        %v599 = vadd.f32 %v417, %v423
        %v600 = vadd.f32 %v599, %v429
        %v601 = vadd.f32 %v600, %v435
        %v602 = vrot.slane %v601, 4
        %v603 = vadd.f32 %v601, %v602
        %v604 = vrot.slane %v603, 2
        %v605 = vadd.f32 %v603, %v604
        %v606 = vrot.slane %v605, 1
        %v607 = vadd.f32 %v605, %v606
        %v608 = vadd.f32 %v528, %v534
        %v609 = vadd.f32 %v608, %v540
        %v610 = vadd.f32 %v609, %v546
        %v611 = vrot.slane %v610, 4
        %v612 = vadd.f32 %v610, %v611
        %v613 = vrot.slane %v612, 2
        %v614 = vadd.f32 %v612, %v613
        %v615 = vrot.slane %v614, 1
        %v616 = vadd.f32 %v614, %v615
        %v617 = vadd.f32 %v530, %v536
        %v618 = vadd.f32 %v617, %v542
        %v619 = vadd.f32 %v618, %v548
        %v620 = vrot.slane %v619, 4
        %v621 = vadd.f32 %v619, %v620
        %v622 = vrot.slane %v621, 2
        %v623 = vadd.f32 %v621, %v622
        %v624 = vrot.slane %v623, 1
        %v625 = vadd.f32 %v623, %v624
        %v626 = vrcp.pop 32.0
        %v627 = vmul.f32 %v598, %v626
        %v628 = vmul.f32 %v607, %v626
        %v629 = vmul.f32 %v616, %v626
        %v630 = vmul.f32 %v625, %v626
        %v631 = vsub.f32 %v415, %v627
        %v632 = vsub.f32 %v417, %v628
        %v633 = vsub.f32 %v528, %v629
        %v634 = vsub.f32 %v530, %v630
        %v635 = vsub.f32 %v421, %v627
        %v636 = vsub.f32 %v423, %v628
        %v637 = vsub.f32 %v534, %v629
        %v638 = vsub.f32 %v536, %v630
        %v639 = vsub.f32 %v427, %v627
        %v640 = vsub.f32 %v429, %v628
        %v641 = vsub.f32 %v540, %v629
        %v642 = vsub.f32 %v542, %v630
        %v643 = vsub.f32 %v433, %v627
        %v644 = vsub.f32 %v435, %v628
        %v645 = vsub.f32 %v546, %v629
        %v646 = vsub.f32 %v548, %v630
        %v647 = vmul.f32 %v631, %v631
        %v648 = vmul.f32 %v632, %v632
        %v649 = vmul.f32 %v633, %v633
        %v650 = vmul.f32 %v634, %v634
        %v651 = vmul.f32 %v635, %v635
        %v652 = vmul.f32 %v636, %v636
        %v653 = vmul.f32 %v637, %v637
        %v654 = vmul.f32 %v638, %v638
        %v655 = vmul.f32 %v639, %v639
        %v656 = vmul.f32 %v640, %v640
        %v657 = vmul.f32 %v641, %v641
        %v658 = vmul.f32 %v642, %v642
        %v659 = vmul.f32 %v643, %v643
        %v660 = vmul.f32 %v644, %v644
        %v661 = vmul.f32 %v645, %v645
        %v662 = vmul.f32 %v646, %v646
        %v663 = vadd.f32 %v647, %v651
        %v664 = vadd.f32 %v663, %v655
        %v665 = vadd.f32 %v664, %v659
        %v666 = vrot.slane %v665, 4
        %v667 = vadd.f32 %v665, %v666
        %v668 = vrot.slane %v667, 2
        %v669 = vadd.f32 %v667, %v668
        %v670 = vrot.slane %v669, 1
        %v671 = vadd.f32 %v669, %v670
        %v672 = vadd.f32 %v648, %v652
        %v673 = vadd.f32 %v672, %v656
        %v674 = vadd.f32 %v673, %v660
        %v675 = vrot.slane %v674, 4
        %v676 = vadd.f32 %v674, %v675
        %v677 = vrot.slane %v676, 2
        %v678 = vadd.f32 %v676, %v677
        %v679 = vrot.slane %v678, 1
        %v680 = vadd.f32 %v678, %v679
        %v681 = vadd.f32 %v649, %v653
        %v682 = vadd.f32 %v681, %v657
        %v683 = vadd.f32 %v682, %v661
        %v684 = vrot.slane %v683, 4
        %v685 = vadd.f32 %v683, %v684
        %v686 = vrot.slane %v685, 2
        %v687 = vadd.f32 %v685, %v686
        %v688 = vrot.slane %v687, 1
        %v689 = vadd.f32 %v687, %v688
        %v690 = vadd.f32 %v650, %v654
        %v691 = vadd.f32 %v690, %v658
        %v692 = vadd.f32 %v691, %v662
        %v693 = vrot.slane %v692, 4
        %v694 = vadd.f32 %v692, %v693
        %v695 = vrot.slane %v694, 2
        %v696 = vadd.f32 %v694, %v695
        %v697 = vrot.slane %v696, 1
        %v698 = vadd.f32 %v696, %v697
        %v699 = vmul.f32 %v671, %v626
        %v700 = vmul.f32 %v680, %v626
        %v701 = vmul.f32 %v689, %v626
        %v702 = vmul.f32 %v698, %v626
        %v703 = vadd.f32 %v699, 1e-05
        %v704 = vadd.f32 %v700, 1e-05
        %v705 = vadd.f32 %v701, 1e-05
        %v706 = vadd.f32 %v702, 1e-05
        %v707 = vrsqrt.pop %v703
        %v708 = vrsqrt.pop %v704
        %v709 = vrsqrt.pop %v705
        %v710 = vrsqrt.pop %v706
        %v711 = vmul.f32 %v631, %v707
        %v712 = vmul.f32 %v632, %v708
        %v713 = vmul.f32 %v633, %v709
        %v714 = vmul.f32 %v634, %v710
        %v715 = vmul.f32 %v635, %v707
        %v716 = vmul.f32 %v636, %v708
        %v717 = vmul.f32 %v637, %v709
        %v718 = vmul.f32 %v638, %v710
        %v719 = vmul.f32 %v639, %v707
        %v720 = vmul.f32 %v640, %v708
        %v721 = vmul.f32 %v641, %v709
        %v722 = vmul.f32 %v642, %v710
        %v723 = vmul.f32 %v643, %v707
        %v724 = vmul.f32 %v644, %v708
        %v725 = vmul.f32 %v645, %v709
        %v726 = vmul.f32 %v646, %v710
        %v727 = vadd.f32 %v439, %v445
        %v728 = vadd.f32 %v727, %v451
        %v729 = vadd.f32 %v728, %v457
        %v730 = vrot.slane %v729, 4
        %v731 = vadd.f32 %v729, %v730
        %v732 = vrot.slane %v731, 2
        %v733 = vadd.f32 %v731, %v732
        %v734 = vrot.slane %v733, 1
        %v735 = vadd.f32 %v733, %v734
        %v736 = vadd.f32 %v441, %v447
        %v737 = vadd.f32 %v736, %v453
        %v738 = vadd.f32 %v737, %v459
        %v739 = vrot.slane %v738, 4
        %v740 = vadd.f32 %v738, %v739
        %v741 = vrot.slane %v740, 2
        %v742 = vadd.f32 %v740, %v741
        %v743 = vrot.slane %v742, 1
        %v744 = vadd.f32 %v742, %v743
        %v745 = vadd.f32 %v552, %v558
        %v746 = vadd.f32 %v745, %v564
        %v747 = vadd.f32 %v746, %v570
        %v748 = vrot.slane %v747, 4
        %v749 = vadd.f32 %v747, %v748
        %v750 = vrot.slane %v749, 2
        %v751 = vadd.f32 %v749, %v750
        %v752 = vrot.slane %v751, 1
        %v753 = vadd.f32 %v751, %v752
        %v754 = vadd.f32 %v554, %v560
        %v755 = vadd.f32 %v754, %v566
        %v756 = vadd.f32 %v755, %v572
        %v757 = vrot.slane %v756, 4
        %v758 = vadd.f32 %v756, %v757
        %v759 = vrot.slane %v758, 2
        %v760 = vadd.f32 %v758, %v759
        %v761 = vrot.slane %v760, 1
        %v762 = vadd.f32 %v760, %v761
        %v763 = vmul.f32 %v735, %v626
        %v764 = vmul.f32 %v744, %v626
        %v765 = vmul.f32 %v753, %v626
        %v766 = vmul.f32 %v762, %v626
        %v767 = vsub.f32 %v439, %v763
        %v768 = vsub.f32 %v441, %v764
        %v769 = vsub.f32 %v552, %v765
        %v770 = vsub.f32 %v554, %v766
        %v771 = vsub.f32 %v445, %v763
        %v772 = vsub.f32 %v447, %v764
        %v773 = vsub.f32 %v558, %v765
        %v774 = vsub.f32 %v560, %v766
        %v775 = vsub.f32 %v451, %v763
        %v776 = vsub.f32 %v453, %v764
        %v777 = vsub.f32 %v564, %v765
        %v778 = vsub.f32 %v566, %v766
        %v779 = vsub.f32 %v457, %v763
        %v780 = vsub.f32 %v459, %v764
        %v781 = vsub.f32 %v570, %v765
        %v782 = vsub.f32 %v572, %v766
        %v783 = vmul.f32 %v767, %v767
        %v784 = vmul.f32 %v768, %v768
        %v785 = vmul.f32 %v769, %v769
        %v786 = vmul.f32 %v770, %v770
        %v787 = vmul.f32 %v771, %v771
        %v788 = vmul.f32 %v772, %v772
        %v789 = vmul.f32 %v773, %v773
        %v790 = vmul.f32 %v774, %v774
        %v791 = vmul.f32 %v775, %v775
        %v792 = vmul.f32 %v776, %v776
        %v793 = vmul.f32 %v777, %v777
        %v794 = vmul.f32 %v778, %v778
        %v795 = vmul.f32 %v779, %v779
        %v796 = vmul.f32 %v780, %v780
        %v797 = vmul.f32 %v781, %v781
        %v798 = vmul.f32 %v782, %v782
        %v799 = vadd.f32 %v783, %v787
        %v800 = vadd.f32 %v799, %v791
        %v801 = vadd.f32 %v800, %v795
        %v802 = vrot.slane %v801, 4
        %v803 = vadd.f32 %v801, %v802
        %v804 = vrot.slane %v803, 2
        %v805 = vadd.f32 %v803, %v804
        %v806 = vrot.slane %v805, 1
        %v807 = vadd.f32 %v805, %v806
        %v808 = vadd.f32 %v784, %v788
        %v809 = vadd.f32 %v808, %v792
        %v810 = vadd.f32 %v809, %v796
        %v811 = vrot.slane %v810, 4
        %v812 = vadd.f32 %v810, %v811
        %v813 = vrot.slane %v812, 2
        %v814 = vadd.f32 %v812, %v813
        %v815 = vrot.slane %v814, 1
        %v816 = vadd.f32 %v814, %v815
        %v817 = vadd.f32 %v785, %v789
        %v818 = vadd.f32 %v817, %v793
        %v819 = vadd.f32 %v818, %v797
        %v820 = vrot.slane %v819, 4
        %v821 = vadd.f32 %v819, %v820
        %v822 = vrot.slane %v821, 2
        %v823 = vadd.f32 %v821, %v822
        %v824 = vrot.slane %v823, 1
        %v825 = vadd.f32 %v823, %v824
        %v826 = vadd.f32 %v786, %v790
        %v827 = vadd.f32 %v826, %v794
        %v828 = vadd.f32 %v827, %v798
        %v829 = vrot.slane %v828, 4
        %v830 = vadd.f32 %v828, %v829
        %v831 = vrot.slane %v830, 2
        %v832 = vadd.f32 %v830, %v831
        %v833 = vrot.slane %v832, 1
        %v834 = vadd.f32 %v832, %v833
        %v835 = vmul.f32 %v807, %v626
        %v836 = vmul.f32 %v816, %v626
        %v837 = vmul.f32 %v825, %v626
        %v838 = vmul.f32 %v834, %v626
        %v839 = vadd.f32 %v835, 1e-05
        %v840 = vadd.f32 %v836, 1e-05
        %v841 = vadd.f32 %v837, 1e-05
        %v842 = vadd.f32 %v838, 1e-05
        %v843 = vrsqrt.pop %v839
        %v844 = vrsqrt.pop %v840
        %v845 = vrsqrt.pop %v841
        %v846 = vrsqrt.pop %v842
        %v847 = vmul.f32 %v767, %v843
        %v848 = vmul.f32 %v768, %v844
        %v849 = vmul.f32 %v769, %v845
        %v850 = vmul.f32 %v770, %v846
        %v851 = vmul.f32 %v771, %v843
        %v852 = vmul.f32 %v772, %v844
        %v853 = vmul.f32 %v773, %v845
        %v854 = vmul.f32 %v774, %v846
        %v855 = vmul.f32 %v775, %v843
        %v856 = vmul.f32 %v776, %v844
        %v857 = vmul.f32 %v777, %v845
        %v858 = vmul.f32 %v778, %v846
        %v859 = vmul.f32 %v779, %v843
        %v860 = vmul.f32 %v780, %v844
        %v861 = vmul.f32 %v781, %v845
        %v862 = vmul.f32 %v782, %v846
        %864 = vset.pattern.permute.xlu0 0
        %865 = vperm.xlu0 %864, %v574
        %v866 = vpop.permute.xlu0 %865
        %869 = vset.pattern.permute.xlu0 0
        %870 = vperm.xlu0 %869, %v575
        %v871 = vpop.permute.xlu0 %870
        %874 = vset.pattern.permute.xlu0 0
        %875 = vperm.xlu0 %874, %v576
        %v876 = vpop.permute.xlu0 %875
        %879 = vset.pattern.permute.xlu0 0
        %880 = vperm.xlu0 %879, %v577
        %v881 = vpop.permute.xlu0 %880
        %884 = vset.pattern.permute.xlu0 0
        %885 = vperm.xlu0 %884, %v578
        %v886 = vpop.permute.xlu0 %885
        %889 = vset.pattern.permute.xlu0 0
        %890 = vperm.xlu0 %889, %v579
        %v891 = vpop.permute.xlu0 %890
        %894 = vset.pattern.permute.xlu0 0
        %895 = vperm.xlu0 %894, %v580
        %v896 = vpop.permute.xlu0 %895
        %899 = vset.pattern.permute.xlu0 0
        %900 = vperm.xlu0 %899, %v581
        %v901 = vpop.permute.xlu0 %900
        %v903 = vmul.f32 %v711, %v866
        %v904 = vmul.f32 %v712, %v866
        %v905 = vmul.f32 %v713, %v866
        %v906 = vmul.f32 %v714, %v866
        %v907 = vmul.f32 %v715, %v871
        %v908 = vmul.f32 %v716, %v871
        %v909 = vmul.f32 %v717, %v871
        %v910 = vmul.f32 %v718, %v871
        %v911 = vmul.f32 %v719, %v876
        %v912 = vmul.f32 %v720, %v876
        %v913 = vmul.f32 %v721, %v876
        %v914 = vmul.f32 %v722, %v876
        %v915 = vmul.f32 %v723, %v881
        %v916 = vmul.f32 %v724, %v881
        %v917 = vmul.f32 %v725, %v881
        %v918 = vmul.f32 %v726, %v881
        %v919 = vmul.f32 %v847, %v886
        %v920 = vmul.f32 %v848, %v886
        %v921 = vmul.f32 %v849, %v886
        %v922 = vmul.f32 %v850, %v886
        %v923 = vmul.f32 %v851, %v891
        %v924 = vmul.f32 %v852, %v891
        %v925 = vmul.f32 %v853, %v891
        %v926 = vmul.f32 %v854, %v891
        %v927 = vmul.f32 %v855, %v896
        %v928 = vmul.f32 %v856, %v896
        %v929 = vmul.f32 %v857, %v896
        %v930 = vmul.f32 %v858, %v896
        %v931 = vmul.f32 %v859, %v901
        %v932 = vmul.f32 %v860, %v901
        %v933 = vmul.f32 %v861, %v901
        %v934 = vmul.f32 %v862, %v901
        %936 = vset.pattern.permute.xlu0 0
        %937 = vperm.xlu0 %936, %v582
        %v938 = vpop.permute.xlu0 %937
        %941 = vset.pattern.permute.xlu0 0
        %942 = vperm.xlu0 %941, %v583
        %v943 = vpop.permute.xlu0 %942
        %946 = vset.pattern.permute.xlu0 0
        %947 = vperm.xlu0 %946, %v584
        %v948 = vpop.permute.xlu0 %947
        %951 = vset.pattern.permute.xlu0 0
        %952 = vperm.xlu0 %951, %v585
        %v953 = vpop.permute.xlu0 %952
        %956 = vset.pattern.permute.xlu0 0
        %957 = vperm.xlu0 %956, %v586
        %v958 = vpop.permute.xlu0 %957
        %961 = vset.pattern.permute.xlu0 0
        %962 = vperm.xlu0 %961, %v587
        %v963 = vpop.permute.xlu0 %962
        %966 = vset.pattern.permute.xlu0 0
        %967 = vperm.xlu0 %966, %v588
        %v968 = vpop.permute.xlu0 %967
        %971 = vset.pattern.permute.xlu0 0
        %972 = vperm.xlu0 %971, %v589
        %v973 = vpop.permute.xlu0 %972
        %v975 = vadd.f32 %v903, %v938
        %v976 = vadd.f32 %v904, %v938
        %v977 = vadd.f32 %v905, %v938
        %v978 = vadd.f32 %v906, %v938
        %v979 = vadd.f32 %v907, %v943
        %v980 = vadd.f32 %v908, %v943
        %v981 = vadd.f32 %v909, %v943
        %v982 = vadd.f32 %v910, %v943
        %v983 = vadd.f32 %v911, %v948
        %v984 = vadd.f32 %v912, %v948
        %v985 = vadd.f32 %v913, %v948
        %v986 = vadd.f32 %v914, %v948
        %v987 = vadd.f32 %v915, %v953
        %v988 = vadd.f32 %v916, %v953
        %v989 = vadd.f32 %v917, %v953
        %v990 = vadd.f32 %v918, %v953
        %v991 = vadd.f32 %v919, %v958
        %v992 = vadd.f32 %v920, %v958
        %v993 = vadd.f32 %v921, %v958
        %v994 = vadd.f32 %v922, %v958
        %v995 = vadd.f32 %v923, %v963
        %v996 = vadd.f32 %v924, %v963
        %v997 = vadd.f32 %v925, %v963
        %v998 = vadd.f32 %v926, %v963
        %v999 = vadd.f32 %v927, %v968
        %v1000 = vadd.f32 %v928, %v968
        %v1001 = vadd.f32 %v929, %v968
        %v1002 = vadd.f32 %v930, %v968
        %v1003 = vadd.f32 %v931, %v973
        %v1004 = vadd.f32 %v932, %v973
        %v1005 = vadd.f32 %v933, %v973
        %v1006 = vadd.f32 %v934, %v973
        %s1007 = sld [smem:[#allocation3]]
        %v1008 = vmul.f32 %v975, %v975
        %v1009 = vmul.f32 %v976, %v976
        %v1010 = vmul.f32 %v977, %v977
        %v1011 = vmul.f32 %v978, %v978
        %v1012 = vmul.f32 %v979, %v979
        %v1013 = vmul.f32 %v980, %v980
        %v1014 = vmul.f32 %v981, %v981
        %v1015 = vmul.f32 %v982, %v982
        %v1016 = vmul.f32 %v983, %v983
        %v1017 = vmul.f32 %v984, %v984
        %v1018 = vmul.f32 %v985, %v985
        %v1019 = vmul.f32 %v986, %v986
        %v1020 = vmul.f32 %v987, %v987
        %v1021 = vmul.f32 %v988, %v988
        %v1022 = vmul.f32 %v989, %v989
        %v1023 = vmul.f32 %v990, %v990
        %v1024 = vmul.f32 %v991, %v991
        %v1025 = vmul.f32 %v992, %v992
        %v1026 = vmul.f32 %v993, %v993
        %v1027 = vmul.f32 %v994, %v994
        %v1028 = vmul.f32 %v995, %v995
        %v1029 = vmul.f32 %v996, %v996
        %v1030 = vmul.f32 %v997, %v997
        %v1031 = vmul.f32 %v998, %v998
        %v1032 = vmul.f32 %v999, %v999
        %v1033 = vmul.f32 %v1000, %v1000
        %v1034 = vmul.f32 %v1001, %v1001
        %v1035 = vmul.f32 %v1002, %v1002
        %v1036 = vmul.f32 %v1003, %v1003
        %v1037 = vmul.f32 %v1004, %v1004
        %v1038 = vmul.f32 %v1005, %v1005
        %v1039 = vmul.f32 %v1006, %v1006
        %v1040 = vadd.f32 %v1008, %v1024
        %v1041 = vadd.f32 %v1009, %v1025
        %v1042 = vadd.f32 %v1010, %v1026
        %v1043 = vadd.f32 %v1011, %v1027
        %v1044 = vadd.f32 %v1012, %v1028
        %v1045 = vadd.f32 %v1013, %v1029
        %v1046 = vadd.f32 %v1014, %v1030
        %v1047 = vadd.f32 %v1015, %v1031
        %v1048 = vadd.f32 %v1016, %v1032
        %v1049 = vadd.f32 %v1017, %v1033
        %v1050 = vadd.f32 %v1018, %v1034
        %v1051 = vadd.f32 %v1019, %v1035
        %v1052 = vadd.f32 %v1020, %v1036
        %v1053 = vadd.f32 %v1021, %v1037
        %v1054 = vadd.f32 %v1022, %v1038
        %v1055 = vadd.f32 %v1023, %v1039
        %v1056 = vadd.f32 %v1040, 1e-30
        %v1057 = vadd.f32 %v1041, 1e-30
        %v1058 = vadd.f32 %v1042, 1e-30
        %v1059 = vadd.f32 %v1043, 1e-30
        %v1060 = vadd.f32 %v1044, 1e-30
        %v1061 = vadd.f32 %v1045, 1e-30
        %v1062 = vadd.f32 %v1046, 1e-30
        %v1063 = vadd.f32 %v1047, 1e-30
        %v1064 = vadd.f32 %v1048, 1e-30
        %v1065 = vadd.f32 %v1049, 1e-30
        %v1066 = vadd.f32 %v1050, 1e-30
        %v1067 = vadd.f32 %v1051, 1e-30
        %v1068 = vadd.f32 %v1052, 1e-30
        %v1069 = vadd.f32 %v1053, 1e-30
        %v1070 = vadd.f32 %v1054, 1e-30
        %v1071 = vadd.f32 %v1055, 1e-30
        %v1072 = vrsqrt.pop %v1056
        %v1073 = vrsqrt.pop %v1057
        %v1074 = vrsqrt.pop %v1058
        %v1075 = vrsqrt.pop %v1059
        %v1076 = vrsqrt.pop %v1060
        %v1077 = vrsqrt.pop %v1061
        %v1078 = vrsqrt.pop %v1062
        %v1079 = vrsqrt.pop %v1063
        %v1080 = vrsqrt.pop %v1064
        %v1081 = vrsqrt.pop %v1065
        %v1082 = vrsqrt.pop %v1066
        %v1083 = vrsqrt.pop %v1067
        %v1084 = vrsqrt.pop %v1068
        %v1085 = vrsqrt.pop %v1069
        %v1086 = vrsqrt.pop %v1070
        %v1087 = vrsqrt.pop %v1071
        %v1088 = vmul.f32 %v1040, %v1072
        %v1089 = vmul.f32 %v1041, %v1073
        %v1090 = vmul.f32 %v1042, %v1074
        %v1091 = vmul.f32 %v1043, %v1075
        %v1092 = vmul.f32 %v1044, %v1076
        %v1093 = vmul.f32 %v1045, %v1077
        %v1094 = vmul.f32 %v1046, %v1078
        %v1095 = vmul.f32 %v1047, %v1079
        %v1096 = vmul.f32 %v1048, %v1080
        %v1097 = vmul.f32 %v1049, %v1081
        %v1098 = vmul.f32 %v1050, %v1082
        %v1099 = vmul.f32 %v1051, %v1083
        %v1100 = vmul.f32 %v1052, %v1084
        %v1101 = vmul.f32 %v1053, %v1085
        %v1102 = vmul.f32 %v1054, %v1086
        %v1103 = vmul.f32 %v1055, %v1087
        %v1104 = vstv %s1007
        %v1105 = vsub.f32 %v1088, %v1104
        %v1106 = vsub.f32 %v1089, %v1104
        %v1107 = vsub.f32 %v1090, %v1104
        %v1108 = vsub.f32 %v1091, %v1104
        %v1109 = vsub.f32 %v1092, %v1104
        %v1110 = vsub.f32 %v1093, %v1104
        %v1111 = vsub.f32 %v1094, %v1104
        %v1112 = vsub.f32 %v1095, %v1104
        %v1113 = vsub.f32 %v1096, %v1104
        %v1114 = vsub.f32 %v1097, %v1104
        %v1115 = vsub.f32 %v1098, %v1104
        %v1116 = vsub.f32 %v1099, %v1104
        %v1117 = vsub.f32 %v1100, %v1104
        %v1118 = vsub.f32 %v1101, %v1104
        %v1119 = vsub.f32 %v1102, %v1104
        %v1120 = vsub.f32 %v1103, %v1104
        %v1121 = vmax.f32 %v1105, 0.0
        %v1122 = vmax.f32 %v1106, 0.0
        %v1123 = vmax.f32 %v1107, 0.0
        %v1124 = vmax.f32 %v1108, 0.0
        %v1125 = vmax.f32 %v1109, 0.0
        %v1126 = vmax.f32 %v1110, 0.0
        %v1127 = vmax.f32 %v1111, 0.0
        %v1128 = vmax.f32 %v1112, 0.0
        %v1129 = vmax.f32 %v1113, 0.0
        %v1130 = vmax.f32 %v1114, 0.0
        %v1131 = vmax.f32 %v1115, 0.0
        %v1132 = vmax.f32 %v1116, 0.0
        %v1133 = vmax.f32 %v1117, 0.0
        %v1134 = vmax.f32 %v1118, 0.0
        %v1135 = vmax.f32 %v1119, 0.0
        %v1136 = vmax.f32 %v1120, 0.0
        %v1137 = vmul.f32 %v1121, %v1072
        %v1138 = vmul.f32 %v1122, %v1073
        %v1139 = vmul.f32 %v1123, %v1074
        %v1140 = vmul.f32 %v1124, %v1075
        %v1141 = vmul.f32 %v1125, %v1076
        %v1142 = vmul.f32 %v1126, %v1077
        %v1143 = vmul.f32 %v1127, %v1078
        %v1144 = vmul.f32 %v1128, %v1079
        %v1145 = vmul.f32 %v1129, %v1080
        %v1146 = vmul.f32 %v1130, %v1081
        %v1147 = vmul.f32 %v1131, %v1082
        %v1148 = vmul.f32 %v1132, %v1083
        %v1149 = vmul.f32 %v1133, %v1084
        %v1150 = vmul.f32 %v1134, %v1085
        %v1151 = vmul.f32 %v1135, %v1086
        %v1152 = vmul.f32 %v1136, %v1087
        %v1153 = vmul.f32 %v975, %v1137
        %v1154 = vmul.f32 %v976, %v1138
        %v1155 = vmul.f32 %v977, %v1139
        %v1156 = vmul.f32 %v978, %v1140
        %v1157 = vmul.f32 %v979, %v1141
        %v1158 = vmul.f32 %v980, %v1142
        %v1159 = vmul.f32 %v981, %v1143
        %v1160 = vmul.f32 %v982, %v1144
        %v1161 = vmul.f32 %v983, %v1145
        %v1162 = vmul.f32 %v984, %v1146
        %v1163 = vmul.f32 %v985, %v1147
        %v1164 = vmul.f32 %v986, %v1148
        %v1165 = vmul.f32 %v987, %v1149
        %v1166 = vmul.f32 %v988, %v1150
        %v1167 = vmul.f32 %v989, %v1151
        %v1168 = vmul.f32 %v990, %v1152
        %v1169 = vmul.f32 %v991, %v1137
        %v1170 = vmul.f32 %v992, %v1138
        %v1171 = vmul.f32 %v993, %v1139
        %v1172 = vmul.f32 %v994, %v1140
        %v1173 = vmul.f32 %v995, %v1141
        %v1174 = vmul.f32 %v996, %v1142
        %v1175 = vmul.f32 %v997, %v1143
        %v1176 = vmul.f32 %v998, %v1144
        %v1177 = vmul.f32 %v999, %v1145
        %v1178 = vmul.f32 %v1000, %v1146
        %v1179 = vmul.f32 %v1001, %v1147
        %v1180 = vmul.f32 %v1002, %v1148
        %v1181 = vmul.f32 %v1003, %v1149
        %v1182 = vmul.f32 %v1004, %v1150
        %v1183 = vmul.f32 %v1005, %v1151
        %v1184 = vmul.f32 %v1006, %v1152
        %s1185 = scalar_lea.vmem %s2, 64
        %v1186 = vld [vmem:[%s1185] sm:$0xff]
        %v1187 = vld [vmem:[%s1185 + $0x8] sm:$0xff]
        %v1188 = vld [vmem:[%s1185 + $0x10] sm:$0xff]
        %v1189 = vld [vmem:[%s1185 + $0x18] sm:$0xff]
        %v1190 = vld [vmem:[%s1185 + $0x20] sm:$0xff]
        %v1191 = vld [vmem:[%s1185 + $0x28] sm:$0xff]
        %v1192 = vld [vmem:[%s1185 + $0x30] sm:$0xff]
        %v1193 = vld [vmem:[%s1185 + $0x38] sm:$0xff]
        %v1195 = vsel %vm323, %v1186, 0
        %v1198 = vsel %vm323, %v1187, 0
        %v1201 = vsel %vm323, %v1188, 0
        %v1204 = vsel %vm323, %v1189, 0
        %v1207 = vsel %vm323, %v1190, 0
        %v1210 = vsel %vm323, %v1191, 0
        %v1213 = vsel %vm323, %v1192, 0
        %v1216 = vsel %vm323, %v1193, 0
        %1218 = vmatprep.subr.mxu0 0.0
        %1219 = vmatpush1.msra.mxu0 0.0
        %1220 = vmatprep.subr.mxu0 0.0
        %1221 = vmatpush1.msra.mxu0 0.0
        %1222 = vmatprep.subr.mxu0 0.0
        %1223 = vmatpush1.msra.mxu0 0.0
        %1224 = vmatprep.subr.mxu0 0.0
        %1225 = vmatpush1.msra.mxu0 0.0
        %1226 = vmatprep.subr.mxu0 0.0
        %1227 = vmatpush1.msra.mxu0 0.0
        %1228 = vmatprep.subr.mxu0 0.0
        %1229 = vmatpush1.msra.mxu0 0.0
        %1230 = vmatprep.subr.mxu0 0.0
        %1231 = vmatpush1.msra.mxu0 0.0
        %1232 = vmatprep.subr.mxu0 0.0
        %1233 = vmatpush1.msra.mxu0 0.0
        %1234 = vmatprep.subr.mxu0 %v1182
        %1235 = vmatpush1.msra.mxu0 %v1181
        %1236 = vmatprep.subr.mxu0 %v1178
        %1237 = vmatpush1.msra.mxu0 %v1177
        %1238 = vmatprep.subr.mxu0 %v1174
        %1239 = vmatpush1.msra.mxu0 %v1173
        %1240 = vmatprep.subr.mxu0 %v1170
        %1241 = vmatpush1.msra.mxu0 %v1169
        %1242 = vmatprep.subr.mxu0 %v1166
        %1243 = vmatpush1.msra.mxu0 %v1165
        %1244 = vmatprep.subr.mxu0 %v1162
        %1245 = vmatpush1.msra.mxu0 %v1161
        %1246 = vmatprep.subr.mxu0 %v1158
        %1247 = vmatpush1.msra.mxu0 %v1157
        %1248 = vmatprep.subr.mxu0 %v1154
        %1249 = vmatpush1.msra.mxu0 %v1153
        %1250 = vmatprep.subr.mxu0 0.0
        %1251 = vmatpush2.msra.mxu0 0.0
        %1252 = vmatprep.subr.mxu0 0.0
        %1253 = vmatpush2.msra.mxu0 0.0
        %1254 = vmatprep.subr.mxu0 0.0
        %1255 = vmatpush2.msra.mxu0 0.0
        %1256 = vmatprep.subr.mxu0 0.0
        %1257 = vmatpush2.msra.mxu0 0.0
        %1258 = vmatprep.subr.mxu0 0.0
        %1259 = vmatpush2.msra.mxu0 0.0
        %1260 = vmatprep.subr.mxu0 0.0
        %1261 = vmatpush2.msra.mxu0 0.0
        %1262 = vmatprep.subr.mxu0 0.0
        %1263 = vmatpush2.msra.mxu0 0.0
        %1264 = vmatprep.subr.mxu0 0.0
        %1265 = vmatpush2.msra.mxu0 0.0
        %1266 = vmatprep.subr.mxu0 0.0
        %1267 = vmatpush2.msra.mxu0 0.0
        %1268 = vmatprep.subr.mxu0 0.0
        %1269 = vmatpush2.msra.mxu0 0.0
        %1270 = vmatprep.subr.mxu0 0.0
        %1271 = vmatpush2.msra.mxu0 0.0
        %1272 = vmatprep.subr.mxu0 0.0
        %1273 = vmatpush2.msra.mxu0 0.0
        %1274 = vmatprep.subr.mxu0 0.0
        %1275 = vmatpush2.msra.mxu0 0.0
        %1276 = vmatprep.subr.mxu0 0.0
        %1277 = vmatpush2.msra.mxu0 0.0
        %1278 = vmatprep.subr.mxu0 0.0
        %1279 = vmatpush2.msra.mxu0 0.0
        %1280 = vmatprep.subr.mxu0 0.0
        %1281 = vmatpush2.msra.mxu0 0.0
        %1282 = vmatprep.mubr.f32.mxu0 0.0
        %1283 = vmatmul.mubr.f32.gmra.mxu0 %v1195
        %v1284 = vpop.f32.mrf.mxu0
        %v1285 = vadd.f32 0.0, %v1284
        %v1286 = vpop.f32.mrf.mxu0
        %v1287 = vadd.f32 0.0, %v1286
        %1288 = vmatprep.mubr.f32.mxu0 0.0
        %1289 = vmatmul.mubr.f32.gmra.mxu0 %v1198
        %v1290 = vpop.f32.mrf.mxu0
        %v1291 = vadd.f32 0.0, %v1290
        %v1292 = vpop.f32.mrf.mxu0
        %v1293 = vadd.f32 0.0, %v1292
        %1294 = vmatprep.mubr.f32.mxu0 0.0
        %1295 = vmatmul.mubr.f32.gmra.mxu0 %v1201
        %v1296 = vpop.f32.mrf.mxu0
        %v1297 = vadd.f32 0.0, %v1296
        %v1298 = vpop.f32.mrf.mxu0
        %v1299 = vadd.f32 0.0, %v1298
        %1300 = vmatprep.mubr.f32.mxu0 0.0
        %1301 = vmatmul.mubr.f32.gmra.mxu0 %v1204
        %v1302 = vpop.f32.mrf.mxu0
        %v1303 = vadd.f32 0.0, %v1302
        %v1304 = vpop.f32.mrf.mxu0
        %v1305 = vadd.f32 0.0, %v1304
        %1306 = vmatprep.mubr.f32.mxu0 0.0
        %1307 = vmatmul.mubr.f32.gmra.mxu0 %v1207
        %v1308 = vpop.f32.mrf.mxu0
        %v1309 = vadd.f32 0.0, %v1308
        %v1310 = vpop.f32.mrf.mxu0
        %v1311 = vadd.f32 0.0, %v1310
        %1312 = vmatprep.mubr.f32.mxu0 0.0
        %1313 = vmatmul.mubr.f32.gmra.mxu0 %v1210
        %v1314 = vpop.f32.mrf.mxu0
        %v1315 = vadd.f32 0.0, %v1314
        %v1316 = vpop.f32.mrf.mxu0
        %v1317 = vadd.f32 0.0, %v1316
        %1318 = vmatprep.mubr.f32.mxu0 0.0
        %1319 = vmatmul.mubr.f32.gmra.mxu0 %v1213
        %v1320 = vpop.f32.mrf.mxu0
        %v1321 = vadd.f32 0.0, %v1320
        %v1322 = vpop.f32.mrf.mxu0
        %v1323 = vadd.f32 0.0, %v1322
        %1324 = vmatprep.mubr.f32.mxu0 0.0
        %1325 = vmatmul.mubr.f32.gmra.mxu0 %v1216
        %v1326 = vpop.f32.mrf.mxu0
        %v1327 = vadd.f32 0.0, %v1326
        %v1328 = vpop.f32.mrf.mxu0
        %v1329 = vadd.f32 0.0, %v1328
        %1330 = vdwg.mxu0
        %1331 = vmatprep.subr.mxu0 0.0
        %1332 = vmatpush1.msra.mxu0 0.0
        %1333 = vmatprep.subr.mxu0 0.0
        %1334 = vmatpush1.msra.mxu0 0.0
        %1335 = vmatprep.subr.mxu0 0.0
        %1336 = vmatpush1.msra.mxu0 0.0
        %1337 = vmatprep.subr.mxu0 0.0
        %1338 = vmatpush1.msra.mxu0 0.0
        %1339 = vmatprep.subr.mxu0 0.0
        %1340 = vmatpush1.msra.mxu0 0.0
        %1341 = vmatprep.subr.mxu0 0.0
        %1342 = vmatpush1.msra.mxu0 0.0
        %1343 = vmatprep.subr.mxu0 0.0
        %1344 = vmatpush1.msra.mxu0 0.0
        %1345 = vmatprep.subr.mxu0 0.0
        %1346 = vmatpush1.msra.mxu0 0.0
        %1347 = vmatprep.subr.mxu0 %v1184
        %1348 = vmatpush1.msra.mxu0 %v1183
        %1349 = vmatprep.subr.mxu0 %v1180
        %1350 = vmatpush1.msra.mxu0 %v1179
        %1351 = vmatprep.subr.mxu0 %v1176
        %1352 = vmatpush1.msra.mxu0 %v1175
        %1353 = vmatprep.subr.mxu0 %v1172
        %1354 = vmatpush1.msra.mxu0 %v1171
        %1355 = vmatprep.subr.mxu0 %v1168
        %1356 = vmatpush1.msra.mxu0 %v1167
        %1357 = vmatprep.subr.mxu0 %v1164
        %1358 = vmatpush1.msra.mxu0 %v1163
        %1359 = vmatprep.subr.mxu0 %v1160
        %1360 = vmatpush1.msra.mxu0 %v1159
        %1361 = vmatprep.subr.mxu0 %v1156
        %1362 = vmatpush1.msra.mxu0 %v1155
        %1363 = vmatprep.subr.mxu0 0.0
        %1364 = vmatpush2.msra.mxu0 0.0
        %1365 = vmatprep.subr.mxu0 0.0
        %1366 = vmatpush2.msra.mxu0 0.0
        %1367 = vmatprep.subr.mxu0 0.0
        %1368 = vmatpush2.msra.mxu0 0.0
        %1369 = vmatprep.subr.mxu0 0.0
        %1370 = vmatpush2.msra.mxu0 0.0
        %1371 = vmatprep.subr.mxu0 0.0
        %1372 = vmatpush2.msra.mxu0 0.0
        %1373 = vmatprep.subr.mxu0 0.0
        %1374 = vmatpush2.msra.mxu0 0.0
        %1375 = vmatprep.subr.mxu0 0.0
        %1376 = vmatpush2.msra.mxu0 0.0
        %1377 = vmatprep.subr.mxu0 0.0
        %1378 = vmatpush2.msra.mxu0 0.0
        %1379 = vmatprep.subr.mxu0 0.0
        %1380 = vmatpush2.msra.mxu0 0.0
        %1381 = vmatprep.subr.mxu0 0.0
        %1382 = vmatpush2.msra.mxu0 0.0
        %1383 = vmatprep.subr.mxu0 0.0
        %1384 = vmatpush2.msra.mxu0 0.0
        %1385 = vmatprep.subr.mxu0 0.0
        %1386 = vmatpush2.msra.mxu0 0.0
        %1387 = vmatprep.subr.mxu0 0.0
        %1388 = vmatpush2.msra.mxu0 0.0
        %1389 = vmatprep.subr.mxu0 0.0
        %1390 = vmatpush2.msra.mxu0 0.0
        %1391 = vmatprep.subr.mxu0 0.0
        %1392 = vmatpush2.msra.mxu0 0.0
        %1393 = vmatprep.subr.mxu0 0.0
        %1394 = vmatpush2.msra.mxu0 0.0
        %1395 = vmatprep.mubr.f32.mxu0 0.0
        %1396 = vmatmul.mubr.f32.gmra.mxu0 %v1195
        %v1397 = vpop.f32.mrf.mxu0
        %v1398 = vadd.f32 0.0, %v1397
        %v1399 = vpop.f32.mrf.mxu0
        %v1400 = vadd.f32 0.0, %v1399
        %1401 = vmatprep.mubr.f32.mxu0 0.0
        %1402 = vmatmul.mubr.f32.gmra.mxu0 %v1198
        %v1403 = vpop.f32.mrf.mxu0
        %v1404 = vadd.f32 0.0, %v1403
        %v1405 = vpop.f32.mrf.mxu0
        %v1406 = vadd.f32 0.0, %v1405
        %1407 = vmatprep.mubr.f32.mxu0 0.0
        %1408 = vmatmul.mubr.f32.gmra.mxu0 %v1201
        %v1409 = vpop.f32.mrf.mxu0
        %v1410 = vadd.f32 0.0, %v1409
        %v1411 = vpop.f32.mrf.mxu0
        %v1412 = vadd.f32 0.0, %v1411
        %1413 = vmatprep.mubr.f32.mxu0 0.0
        %1414 = vmatmul.mubr.f32.gmra.mxu0 %v1204
        %v1415 = vpop.f32.mrf.mxu0
        %v1416 = vadd.f32 0.0, %v1415
        %v1417 = vpop.f32.mrf.mxu0
        %v1418 = vadd.f32 0.0, %v1417
        %1419 = vmatprep.mubr.f32.mxu0 0.0
        %1420 = vmatmul.mubr.f32.gmra.mxu0 %v1207
        %v1421 = vpop.f32.mrf.mxu0
        %v1422 = vadd.f32 0.0, %v1421
        %v1423 = vpop.f32.mrf.mxu0
        %v1424 = vadd.f32 0.0, %v1423
        %1425 = vmatprep.mubr.f32.mxu0 0.0
        %1426 = vmatmul.mubr.f32.gmra.mxu0 %v1210
        %v1427 = vpop.f32.mrf.mxu0
        %v1428 = vadd.f32 0.0, %v1427
        %v1429 = vpop.f32.mrf.mxu0
        %v1430 = vadd.f32 0.0, %v1429
        %1431 = vmatprep.mubr.f32.mxu0 0.0
        %1432 = vmatmul.mubr.f32.gmra.mxu0 %v1213
        %v1433 = vpop.f32.mrf.mxu0
        %v1434 = vadd.f32 0.0, %v1433
        %v1435 = vpop.f32.mrf.mxu0
        %v1436 = vadd.f32 0.0, %v1435
        %1437 = vmatprep.mubr.f32.mxu0 0.0
        %1438 = vmatmul.mubr.f32.gmra.mxu0 %v1216
        %v1439 = vpop.f32.mrf.mxu0
        %v1440 = vadd.f32 0.0, %v1439
        %v1441 = vpop.f32.mrf.mxu0
        %v1442 = vadd.f32 0.0, %v1441
        %1443 = vdwg.mxu0
        %s1444 = scalar_lea.vmem %s3, 64
        %v1445 = vld [vmem:[%s1444] sm:$0xff]
        %v1446 = vld [vmem:[%s1444 + $0x8] sm:$0xff]
        %v1447 = vld [vmem:[%s1444 + $0x10] sm:$0xff]
        %v1448 = vld [vmem:[%s1444 + $0x18] sm:$0xff]
        %v1449 = vld [vmem:[%s1444 + $0x20] sm:$0xff]
        %v1450 = vld [vmem:[%s1444 + $0x28] sm:$0xff]
        %v1451 = vld [vmem:[%s1444 + $0x30] sm:$0xff]
        %v1452 = vld [vmem:[%s1444 + $0x38] sm:$0xff]
        %s1453 = scalar_lea.vmem %s4, 64
        %v1454 = vld [vmem:[%s1453] sm:$0xff]
        %v1455 = vld [vmem:[%s1453 + $0x8] sm:$0xff]
        %v1456 = vld [vmem:[%s1453 + $0x10] sm:$0xff]
        %v1457 = vld [vmem:[%s1453 + $0x18] sm:$0xff]
        %v1458 = vld [vmem:[%s1453 + $0x20] sm:$0xff]
        %v1459 = vld [vmem:[%s1453 + $0x28] sm:$0xff]
        %v1460 = vld [vmem:[%s1453 + $0x30] sm:$0xff]
        %v1461 = vld [vmem:[%s1453 + $0x38] sm:$0xff]
        %v1462 = vadd.f32 %v1285, %v1291
        %v1463 = vadd.f32 %v1462, %v1297
        %v1464 = vadd.f32 %v1463, %v1303
        %v1465 = vrot.slane %v1464, 4
        %v1466 = vadd.f32 %v1464, %v1465
        %v1467 = vrot.slane %v1466, 2
        %v1468 = vadd.f32 %v1466, %v1467
        %v1469 = vrot.slane %v1468, 1
        %v1470 = vadd.f32 %v1468, %v1469
        %v1471 = vadd.f32 %v1287, %v1293
        %v1472 = vadd.f32 %v1471, %v1299
        %v1473 = vadd.f32 %v1472, %v1305
        %v1474 = vrot.slane %v1473, 4
        %v1475 = vadd.f32 %v1473, %v1474
        %v1476 = vrot.slane %v1475, 2
        %v1477 = vadd.f32 %v1475, %v1476
        %v1478 = vrot.slane %v1477, 1
        %v1479 = vadd.f32 %v1477, %v1478
        %v1480 = vadd.f32 %v1398, %v1404
        %v1481 = vadd.f32 %v1480, %v1410
        %v1482 = vadd.f32 %v1481, %v1416
        %v1483 = vrot.slane %v1482, 4
        %v1484 = vadd.f32 %v1482, %v1483
        %v1485 = vrot.slane %v1484, 2
        %v1486 = vadd.f32 %v1484, %v1485
        %v1487 = vrot.slane %v1486, 1
        %v1488 = vadd.f32 %v1486, %v1487
        %v1489 = vadd.f32 %v1400, %v1406
        %v1490 = vadd.f32 %v1489, %v1412
        %v1491 = vadd.f32 %v1490, %v1418
        %v1492 = vrot.slane %v1491, 4
        %v1493 = vadd.f32 %v1491, %v1492
        %v1494 = vrot.slane %v1493, 2
        %v1495 = vadd.f32 %v1493, %v1494
        %v1496 = vrot.slane %v1495, 1
        %v1497 = vadd.f32 %v1495, %v1496
        %v1498 = vmul.f32 %v1470, %v626
        %v1499 = vmul.f32 %v1479, %v626
        %v1500 = vmul.f32 %v1488, %v626
        %v1501 = vmul.f32 %v1497, %v626
        %v1502 = vsub.f32 %v1285, %v1498
        %v1503 = vsub.f32 %v1287, %v1499
        %v1504 = vsub.f32 %v1398, %v1500
        %v1505 = vsub.f32 %v1400, %v1501
        %v1506 = vsub.f32 %v1291, %v1498
        %v1507 = vsub.f32 %v1293, %v1499
        %v1508 = vsub.f32 %v1404, %v1500
        %v1509 = vsub.f32 %v1406, %v1501
        %v1510 = vsub.f32 %v1297, %v1498
        %v1511 = vsub.f32 %v1299, %v1499
        %v1512 = vsub.f32 %v1410, %v1500
        %v1513 = vsub.f32 %v1412, %v1501
        %v1514 = vsub.f32 %v1303, %v1498
        %v1515 = vsub.f32 %v1305, %v1499
        %v1516 = vsub.f32 %v1416, %v1500
        %v1517 = vsub.f32 %v1418, %v1501
        %v1518 = vmul.f32 %v1502, %v1502
        %v1519 = vmul.f32 %v1503, %v1503
        %v1520 = vmul.f32 %v1504, %v1504
        %v1521 = vmul.f32 %v1505, %v1505
        %v1522 = vmul.f32 %v1506, %v1506
        %v1523 = vmul.f32 %v1507, %v1507
        %v1524 = vmul.f32 %v1508, %v1508
        %v1525 = vmul.f32 %v1509, %v1509
        %v1526 = vmul.f32 %v1510, %v1510
        %v1527 = vmul.f32 %v1511, %v1511
        %v1528 = vmul.f32 %v1512, %v1512
        %v1529 = vmul.f32 %v1513, %v1513
        %v1530 = vmul.f32 %v1514, %v1514
        %v1531 = vmul.f32 %v1515, %v1515
        %v1532 = vmul.f32 %v1516, %v1516
        %v1533 = vmul.f32 %v1517, %v1517
        %v1534 = vadd.f32 %v1518, %v1522
        %v1535 = vadd.f32 %v1534, %v1526
        %v1536 = vadd.f32 %v1535, %v1530
        %v1537 = vrot.slane %v1536, 4
        %v1538 = vadd.f32 %v1536, %v1537
        %v1539 = vrot.slane %v1538, 2
        %v1540 = vadd.f32 %v1538, %v1539
        %v1541 = vrot.slane %v1540, 1
        %v1542 = vadd.f32 %v1540, %v1541
        %v1543 = vadd.f32 %v1519, %v1523
        %v1544 = vadd.f32 %v1543, %v1527
        %v1545 = vadd.f32 %v1544, %v1531
        %v1546 = vrot.slane %v1545, 4
        %v1547 = vadd.f32 %v1545, %v1546
        %v1548 = vrot.slane %v1547, 2
        %v1549 = vadd.f32 %v1547, %v1548
        %v1550 = vrot.slane %v1549, 1
        %v1551 = vadd.f32 %v1549, %v1550
        %v1552 = vadd.f32 %v1520, %v1524
        %v1553 = vadd.f32 %v1552, %v1528
        %v1554 = vadd.f32 %v1553, %v1532
        %v1555 = vrot.slane %v1554, 4
        %v1556 = vadd.f32 %v1554, %v1555
        %v1557 = vrot.slane %v1556, 2
        %v1558 = vadd.f32 %v1556, %v1557
        %v1559 = vrot.slane %v1558, 1
        %v1560 = vadd.f32 %v1558, %v1559
        %v1561 = vadd.f32 %v1521, %v1525
        %v1562 = vadd.f32 %v1561, %v1529
        %v1563 = vadd.f32 %v1562, %v1533
        %v1564 = vrot.slane %v1563, 4
        %v1565 = vadd.f32 %v1563, %v1564
        %v1566 = vrot.slane %v1565, 2
        %v1567 = vadd.f32 %v1565, %v1566
        %v1568 = vrot.slane %v1567, 1
        %v1569 = vadd.f32 %v1567, %v1568
        %v1570 = vmul.f32 %v1542, %v626
        %v1571 = vmul.f32 %v1551, %v626
        %v1572 = vmul.f32 %v1560, %v626
        %v1573 = vmul.f32 %v1569, %v626
        %v1574 = vadd.f32 %v1570, 1e-05
        %v1575 = vadd.f32 %v1571, 1e-05
        %v1576 = vadd.f32 %v1572, 1e-05
        %v1577 = vadd.f32 %v1573, 1e-05
        %v1578 = vrsqrt.pop %v1574
        %v1579 = vrsqrt.pop %v1575
        %v1580 = vrsqrt.pop %v1576
        %v1581 = vrsqrt.pop %v1577
        %v1582 = vmul.f32 %v1502, %v1578
        %v1583 = vmul.f32 %v1503, %v1579
        %v1584 = vmul.f32 %v1504, %v1580
        %v1585 = vmul.f32 %v1505, %v1581
        %v1586 = vmul.f32 %v1506, %v1578
        %v1587 = vmul.f32 %v1507, %v1579
        %v1588 = vmul.f32 %v1508, %v1580
        %v1589 = vmul.f32 %v1509, %v1581
        %v1590 = vmul.f32 %v1510, %v1578
        %v1591 = vmul.f32 %v1511, %v1579
        %v1592 = vmul.f32 %v1512, %v1580
        %v1593 = vmul.f32 %v1513, %v1581
        %v1594 = vmul.f32 %v1514, %v1578
        %v1595 = vmul.f32 %v1515, %v1579
        %v1596 = vmul.f32 %v1516, %v1580
        %v1597 = vmul.f32 %v1517, %v1581
        %v1598 = vadd.f32 %v1309, %v1315
        %v1599 = vadd.f32 %v1598, %v1321
        %v1600 = vadd.f32 %v1599, %v1327
        %v1601 = vrot.slane %v1600, 4
        %v1602 = vadd.f32 %v1600, %v1601
        %v1603 = vrot.slane %v1602, 2
        %v1604 = vadd.f32 %v1602, %v1603
        %v1605 = vrot.slane %v1604, 1
        %v1606 = vadd.f32 %v1604, %v1605
        %v1607 = vadd.f32 %v1311, %v1317
        %v1608 = vadd.f32 %v1607, %v1323
        %v1609 = vadd.f32 %v1608, %v1329
        %v1610 = vrot.slane %v1609, 4
        %v1611 = vadd.f32 %v1609, %v1610
        %v1612 = vrot.slane %v1611, 2
        %v1613 = vadd.f32 %v1611, %v1612
        %v1614 = vrot.slane %v1613, 1
        %v1615 = vadd.f32 %v1613, %v1614
        %v1616 = vadd.f32 %v1422, %v1428
        %v1617 = vadd.f32 %v1616, %v1434
        %v1618 = vadd.f32 %v1617, %v1440
        %v1619 = vrot.slane %v1618, 4
        %v1620 = vadd.f32 %v1618, %v1619
        %v1621 = vrot.slane %v1620, 2
        %v1622 = vadd.f32 %v1620, %v1621
        %v1623 = vrot.slane %v1622, 1
        %v1624 = vadd.f32 %v1622, %v1623
        %v1625 = vadd.f32 %v1424, %v1430
        %v1626 = vadd.f32 %v1625, %v1436
        %v1627 = vadd.f32 %v1626, %v1442
        %v1628 = vrot.slane %v1627, 4
        %v1629 = vadd.f32 %v1627, %v1628
        %v1630 = vrot.slane %v1629, 2
        %v1631 = vadd.f32 %v1629, %v1630
        %v1632 = vrot.slane %v1631, 1
        %v1633 = vadd.f32 %v1631, %v1632
        %v1634 = vmul.f32 %v1606, %v626
        %v1635 = vmul.f32 %v1615, %v626
        %v1636 = vmul.f32 %v1624, %v626
        %v1637 = vmul.f32 %v1633, %v626
        %v1638 = vsub.f32 %v1309, %v1634
        %v1639 = vsub.f32 %v1311, %v1635
        %v1640 = vsub.f32 %v1422, %v1636
        %v1641 = vsub.f32 %v1424, %v1637
        %v1642 = vsub.f32 %v1315, %v1634
        %v1643 = vsub.f32 %v1317, %v1635
        %v1644 = vsub.f32 %v1428, %v1636
        %v1645 = vsub.f32 %v1430, %v1637
        %v1646 = vsub.f32 %v1321, %v1634
        %v1647 = vsub.f32 %v1323, %v1635
        %v1648 = vsub.f32 %v1434, %v1636
        %v1649 = vsub.f32 %v1436, %v1637
        %v1650 = vsub.f32 %v1327, %v1634
        %v1651 = vsub.f32 %v1329, %v1635
        %v1652 = vsub.f32 %v1440, %v1636
        %v1653 = vsub.f32 %v1442, %v1637
        %v1654 = vmul.f32 %v1638, %v1638
        %v1655 = vmul.f32 %v1639, %v1639
        %v1656 = vmul.f32 %v1640, %v1640
        %v1657 = vmul.f32 %v1641, %v1641
        %v1658 = vmul.f32 %v1642, %v1642
        %v1659 = vmul.f32 %v1643, %v1643
        %v1660 = vmul.f32 %v1644, %v1644
        %v1661 = vmul.f32 %v1645, %v1645
        %v1662 = vmul.f32 %v1646, %v1646
        %v1663 = vmul.f32 %v1647, %v1647
        %v1664 = vmul.f32 %v1648, %v1648
        %v1665 = vmul.f32 %v1649, %v1649
        %v1666 = vmul.f32 %v1650, %v1650
        %v1667 = vmul.f32 %v1651, %v1651
        %v1668 = vmul.f32 %v1652, %v1652
        %v1669 = vmul.f32 %v1653, %v1653
        %v1670 = vadd.f32 %v1654, %v1658
        %v1671 = vadd.f32 %v1670, %v1662
        %v1672 = vadd.f32 %v1671, %v1666
        %v1673 = vrot.slane %v1672, 4
        %v1674 = vadd.f32 %v1672, %v1673
        %v1675 = vrot.slane %v1674, 2
        %v1676 = vadd.f32 %v1674, %v1675
        %v1677 = vrot.slane %v1676, 1
        %v1678 = vadd.f32 %v1676, %v1677
        %v1679 = vadd.f32 %v1655, %v1659
        %v1680 = vadd.f32 %v1679, %v1663
        %v1681 = vadd.f32 %v1680, %v1667
        %v1682 = vrot.slane %v1681, 4
        %v1683 = vadd.f32 %v1681, %v1682
        %v1684 = vrot.slane %v1683, 2
        %v1685 = vadd.f32 %v1683, %v1684
        %v1686 = vrot.slane %v1685, 1
        %v1687 = vadd.f32 %v1685, %v1686
        %v1688 = vadd.f32 %v1656, %v1660
        %v1689 = vadd.f32 %v1688, %v1664
        %v1690 = vadd.f32 %v1689, %v1668
        %v1691 = vrot.slane %v1690, 4
        %v1692 = vadd.f32 %v1690, %v1691
        %v1693 = vrot.slane %v1692, 2
        %v1694 = vadd.f32 %v1692, %v1693
        %v1695 = vrot.slane %v1694, 1
        %v1696 = vadd.f32 %v1694, %v1695
        %v1697 = vadd.f32 %v1657, %v1661
        %v1698 = vadd.f32 %v1697, %v1665
        %v1699 = vadd.f32 %v1698, %v1669
        %v1700 = vrot.slane %v1699, 4
        %v1701 = vadd.f32 %v1699, %v1700
        %v1702 = vrot.slane %v1701, 2
        %v1703 = vadd.f32 %v1701, %v1702
        %v1704 = vrot.slane %v1703, 1
        %v1705 = vadd.f32 %v1703, %v1704
        %v1706 = vmul.f32 %v1678, %v626
        %v1707 = vmul.f32 %v1687, %v626
        %v1708 = vmul.f32 %v1696, %v626
        %v1709 = vmul.f32 %v1705, %v626
        %v1710 = vadd.f32 %v1706, 1e-05
        %v1711 = vadd.f32 %v1707, 1e-05
        %v1712 = vadd.f32 %v1708, 1e-05
        %v1713 = vadd.f32 %v1709, 1e-05
        %v1714 = vrsqrt.pop %v1710
        %v1715 = vrsqrt.pop %v1711
        %v1716 = vrsqrt.pop %v1712
        %v1717 = vrsqrt.pop %v1713
        %v1718 = vmul.f32 %v1638, %v1714
        %v1719 = vmul.f32 %v1639, %v1715
        %v1720 = vmul.f32 %v1640, %v1716
        %v1721 = vmul.f32 %v1641, %v1717
        %v1722 = vmul.f32 %v1642, %v1714
        %v1723 = vmul.f32 %v1643, %v1715
        %v1724 = vmul.f32 %v1644, %v1716
        %v1725 = vmul.f32 %v1645, %v1717
        %v1726 = vmul.f32 %v1646, %v1714
        %v1727 = vmul.f32 %v1647, %v1715
        %v1728 = vmul.f32 %v1648, %v1716
        %v1729 = vmul.f32 %v1649, %v1717
        %v1730 = vmul.f32 %v1650, %v1714
        %v1731 = vmul.f32 %v1651, %v1715
        %v1732 = vmul.f32 %v1652, %v1716
        %v1733 = vmul.f32 %v1653, %v1717
        %1735 = vset.pattern.permute.xlu0 0
        %1736 = vperm.xlu0 %1735, %v1445
        %v1737 = vpop.permute.xlu0 %1736
        %1740 = vset.pattern.permute.xlu0 0
        %1741 = vperm.xlu0 %1740, %v1446
        %v1742 = vpop.permute.xlu0 %1741
        %1745 = vset.pattern.permute.xlu0 0
        %1746 = vperm.xlu0 %1745, %v1447
        %v1747 = vpop.permute.xlu0 %1746
        %1750 = vset.pattern.permute.xlu0 0
        %1751 = vperm.xlu0 %1750, %v1448
        %v1752 = vpop.permute.xlu0 %1751
        %1755 = vset.pattern.permute.xlu0 0
        %1756 = vperm.xlu0 %1755, %v1449
        %v1757 = vpop.permute.xlu0 %1756
        %1760 = vset.pattern.permute.xlu0 0
        %1761 = vperm.xlu0 %1760, %v1450
        %v1762 = vpop.permute.xlu0 %1761
        %1765 = vset.pattern.permute.xlu0 0
        %1766 = vperm.xlu0 %1765, %v1451
        %v1767 = vpop.permute.xlu0 %1766
        %1770 = vset.pattern.permute.xlu0 0
        %1771 = vperm.xlu0 %1770, %v1452
        %v1772 = vpop.permute.xlu0 %1771
        %v1774 = vmul.f32 %v1582, %v1737
        %v1775 = vmul.f32 %v1583, %v1737
        %v1776 = vmul.f32 %v1584, %v1737
        %v1777 = vmul.f32 %v1585, %v1737
        %v1778 = vmul.f32 %v1586, %v1742
        %v1779 = vmul.f32 %v1587, %v1742
        %v1780 = vmul.f32 %v1588, %v1742
        %v1781 = vmul.f32 %v1589, %v1742
        %v1782 = vmul.f32 %v1590, %v1747
        %v1783 = vmul.f32 %v1591, %v1747
        %v1784 = vmul.f32 %v1592, %v1747
        %v1785 = vmul.f32 %v1593, %v1747
        %v1786 = vmul.f32 %v1594, %v1752
        %v1787 = vmul.f32 %v1595, %v1752
        %v1788 = vmul.f32 %v1596, %v1752
        %v1789 = vmul.f32 %v1597, %v1752
        %v1790 = vmul.f32 %v1718, %v1757
        %v1791 = vmul.f32 %v1719, %v1757
        %v1792 = vmul.f32 %v1720, %v1757
        %v1793 = vmul.f32 %v1721, %v1757
        %v1794 = vmul.f32 %v1722, %v1762
        %v1795 = vmul.f32 %v1723, %v1762
        %v1796 = vmul.f32 %v1724, %v1762
        %v1797 = vmul.f32 %v1725, %v1762
        %v1798 = vmul.f32 %v1726, %v1767
        %v1799 = vmul.f32 %v1727, %v1767
        %v1800 = vmul.f32 %v1728, %v1767
        %v1801 = vmul.f32 %v1729, %v1767
        %v1802 = vmul.f32 %v1730, %v1772
        %v1803 = vmul.f32 %v1731, %v1772
        %v1804 = vmul.f32 %v1732, %v1772
        %v1805 = vmul.f32 %v1733, %v1772
        %1807 = vset.pattern.permute.xlu0 0
        %1808 = vperm.xlu0 %1807, %v1454
        %v1809 = vpop.permute.xlu0 %1808
        %1812 = vset.pattern.permute.xlu0 0
        %1813 = vperm.xlu0 %1812, %v1455
        %v1814 = vpop.permute.xlu0 %1813
        %1817 = vset.pattern.permute.xlu0 0
        %1818 = vperm.xlu0 %1817, %v1456
        %v1819 = vpop.permute.xlu0 %1818
        %1822 = vset.pattern.permute.xlu0 0
        %1823 = vperm.xlu0 %1822, %v1457
        %v1824 = vpop.permute.xlu0 %1823
        %1827 = vset.pattern.permute.xlu0 0
        %1828 = vperm.xlu0 %1827, %v1458
        %v1829 = vpop.permute.xlu0 %1828
        %1832 = vset.pattern.permute.xlu0 0
        %1833 = vperm.xlu0 %1832, %v1459
        %v1834 = vpop.permute.xlu0 %1833
        %1837 = vset.pattern.permute.xlu0 0
        %1838 = vperm.xlu0 %1837, %v1460
        %v1839 = vpop.permute.xlu0 %1838
        %1842 = vset.pattern.permute.xlu0 0
        %1843 = vperm.xlu0 %1842, %v1461
        %v1844 = vpop.permute.xlu0 %1843
        %v1846 = vadd.f32 %v1774, %v1809
        %v1847 = vadd.f32 %v1775, %v1809
        %v1848 = vadd.f32 %v1776, %v1809
        %v1849 = vadd.f32 %v1777, %v1809
        %v1850 = vadd.f32 %v1778, %v1814
        %v1851 = vadd.f32 %v1779, %v1814
        %v1852 = vadd.f32 %v1780, %v1814
        %v1853 = vadd.f32 %v1781, %v1814
        %v1854 = vadd.f32 %v1782, %v1819
        %v1855 = vadd.f32 %v1783, %v1819
        %v1856 = vadd.f32 %v1784, %v1819
        %v1857 = vadd.f32 %v1785, %v1819
        %v1858 = vadd.f32 %v1786, %v1824
        %v1859 = vadd.f32 %v1787, %v1824
        %v1860 = vadd.f32 %v1788, %v1824
        %v1861 = vadd.f32 %v1789, %v1824
        %v1862 = vadd.f32 %v1790, %v1829
        %v1863 = vadd.f32 %v1791, %v1829
        %v1864 = vadd.f32 %v1792, %v1829
        %v1865 = vadd.f32 %v1793, %v1829
        %v1866 = vadd.f32 %v1794, %v1834
        %v1867 = vadd.f32 %v1795, %v1834
        %v1868 = vadd.f32 %v1796, %v1834
        %v1869 = vadd.f32 %v1797, %v1834
        %v1870 = vadd.f32 %v1798, %v1839
        %v1871 = vadd.f32 %v1799, %v1839
        %v1872 = vadd.f32 %v1800, %v1839
        %v1873 = vadd.f32 %v1801, %v1839
        %v1874 = vadd.f32 %v1802, %v1844
        %v1875 = vadd.f32 %v1803, %v1844
        %v1876 = vadd.f32 %v1804, %v1844
        %v1877 = vadd.f32 %v1805, %v1844
        %v1878 = vadd.f32 %v1846, %v283
        %v1879 = vadd.f32 %v1847, %v284
        %v1880 = vadd.f32 %v1848, %v285
        %v1881 = vadd.f32 %v1849, %v286
        %v1882 = vadd.f32 %v1850, %v287
        %v1883 = vadd.f32 %v1851, %v288
        %v1884 = vadd.f32 %v1852, %v289
        %v1885 = vadd.f32 %v1853, %v290
        %v1886 = vadd.f32 %v1854, %v291
        %v1887 = vadd.f32 %v1855, %v292
        %v1888 = vadd.f32 %v1856, %v293
        %v1889 = vadd.f32 %v1857, %v294
        %v1890 = vadd.f32 %v1858, %v295
        %v1891 = vadd.f32 %v1859, %v296
        %v1892 = vadd.f32 %v1860, %v297
        %v1893 = vadd.f32 %v1861, %v298
        %v1894 = vadd.f32 %v1862, %v299
        %v1895 = vadd.f32 %v1863, %v300
        %v1896 = vadd.f32 %v1864, %v301
        %v1897 = vadd.f32 %v1865, %v302
        %v1898 = vadd.f32 %v1866, %v303
        %v1899 = vadd.f32 %v1867, %v304
        %v1900 = vadd.f32 %v1868, %v305
        %v1901 = vadd.f32 %v1869, %v306
        %v1902 = vadd.f32 %v1870, %v307
        %v1903 = vadd.f32 %v1871, %v308
        %v1904 = vadd.f32 %v1872, %v309
        %v1905 = vadd.f32 %v1873, %v310
        %v1906 = vadd.f32 %v1874, %v311
        %v1907 = vadd.f32 %v1875, %v312
        %v1908 = vadd.f32 %v1876, %v313
        %v1909 = vadd.f32 %v1877, %v314
        %s1910 = sld [smem:[#allocation3 + $0x1]]
        %v1911 = vmul.f32 %v1878, %v1878
        %v1912 = vmul.f32 %v1879, %v1879
        %v1913 = vmul.f32 %v1880, %v1880
        %v1914 = vmul.f32 %v1881, %v1881
        %v1915 = vmul.f32 %v1882, %v1882
        %v1916 = vmul.f32 %v1883, %v1883
        %v1917 = vmul.f32 %v1884, %v1884
        %v1918 = vmul.f32 %v1885, %v1885
        %v1919 = vmul.f32 %v1886, %v1886
        %v1920 = vmul.f32 %v1887, %v1887
        %v1921 = vmul.f32 %v1888, %v1888
        %v1922 = vmul.f32 %v1889, %v1889
        %v1923 = vmul.f32 %v1890, %v1890
        %v1924 = vmul.f32 %v1891, %v1891
        %v1925 = vmul.f32 %v1892, %v1892
        %v1926 = vmul.f32 %v1893, %v1893
        %v1927 = vmul.f32 %v1894, %v1894
        %v1928 = vmul.f32 %v1895, %v1895
        %v1929 = vmul.f32 %v1896, %v1896
        %v1930 = vmul.f32 %v1897, %v1897
        %v1931 = vmul.f32 %v1898, %v1898
        %v1932 = vmul.f32 %v1899, %v1899
        %v1933 = vmul.f32 %v1900, %v1900
        %v1934 = vmul.f32 %v1901, %v1901
        %v1935 = vmul.f32 %v1902, %v1902
        %v1936 = vmul.f32 %v1903, %v1903
        %v1937 = vmul.f32 %v1904, %v1904
        %v1938 = vmul.f32 %v1905, %v1905
        %v1939 = vmul.f32 %v1906, %v1906
        %v1940 = vmul.f32 %v1907, %v1907
        %v1941 = vmul.f32 %v1908, %v1908
        %v1942 = vmul.f32 %v1909, %v1909
        %v1943 = vadd.f32 %v1911, %v1927
        %v1944 = vadd.f32 %v1912, %v1928
        %v1945 = vadd.f32 %v1913, %v1929
        %v1946 = vadd.f32 %v1914, %v1930
        %v1947 = vadd.f32 %v1915, %v1931
        %v1948 = vadd.f32 %v1916, %v1932
        %v1949 = vadd.f32 %v1917, %v1933
        %v1950 = vadd.f32 %v1918, %v1934
        %v1951 = vadd.f32 %v1919, %v1935
        %v1952 = vadd.f32 %v1920, %v1936
        %v1953 = vadd.f32 %v1921, %v1937
        %v1954 = vadd.f32 %v1922, %v1938
        %v1955 = vadd.f32 %v1923, %v1939
        %v1956 = vadd.f32 %v1924, %v1940
        %v1957 = vadd.f32 %v1925, %v1941
        %v1958 = vadd.f32 %v1926, %v1942
        %v1959 = vadd.f32 %v1943, 1e-30
        %v1960 = vadd.f32 %v1944, 1e-30
        %v1961 = vadd.f32 %v1945, 1e-30
        %v1962 = vadd.f32 %v1946, 1e-30
        %v1963 = vadd.f32 %v1947, 1e-30
        %v1964 = vadd.f32 %v1948, 1e-30
        %v1965 = vadd.f32 %v1949, 1e-30
        %v1966 = vadd.f32 %v1950, 1e-30
        %v1967 = vadd.f32 %v1951, 1e-30
        %v1968 = vadd.f32 %v1952, 1e-30
        %v1969 = vadd.f32 %v1953, 1e-30
        %v1970 = vadd.f32 %v1954, 1e-30
        %v1971 = vadd.f32 %v1955, 1e-30
        %v1972 = vadd.f32 %v1956, 1e-30
        %v1973 = vadd.f32 %v1957, 1e-30
        %v1974 = vadd.f32 %v1958, 1e-30
        %v1975 = vrsqrt.pop %v1959
        %v1976 = vrsqrt.pop %v1960
        %v1977 = vrsqrt.pop %v1961
        %v1978 = vrsqrt.pop %v1962
        %v1979 = vrsqrt.pop %v1963
        %v1980 = vrsqrt.pop %v1964
        %v1981 = vrsqrt.pop %v1965
        %v1982 = vrsqrt.pop %v1966
        %v1983 = vrsqrt.pop %v1967
        %v1984 = vrsqrt.pop %v1968
        %v1985 = vrsqrt.pop %v1969
        %v1986 = vrsqrt.pop %v1970
        %v1987 = vrsqrt.pop %v1971
        %v1988 = vrsqrt.pop %v1972
        %v1989 = vrsqrt.pop %v1973
        %v1990 = vrsqrt.pop %v1974
        %v1991 = vmul.f32 %v1943, %v1975
        %v1992 = vmul.f32 %v1944, %v1976
        %v1993 = vmul.f32 %v1945, %v1977
        %v1994 = vmul.f32 %v1946, %v1978
        %v1995 = vmul.f32 %v1947, %v1979
        %v1996 = vmul.f32 %v1948, %v1980
        %v1997 = vmul.f32 %v1949, %v1981
        %v1998 = vmul.f32 %v1950, %v1982
        %v1999 = vmul.f32 %v1951, %v1983
        %v2000 = vmul.f32 %v1952, %v1984
        %v2001 = vmul.f32 %v1953, %v1985
        %v2002 = vmul.f32 %v1954, %v1986
        %v2003 = vmul.f32 %v1955, %v1987
        %v2004 = vmul.f32 %v1956, %v1988
        %v2005 = vmul.f32 %v1957, %v1989
        %v2006 = vmul.f32 %v1958, %v1990
        %v2007 = vstv %s1910
        %v2008 = vsub.f32 %v1991, %v2007
        %v2009 = vsub.f32 %v1992, %v2007
        %v2010 = vsub.f32 %v1993, %v2007
        %v2011 = vsub.f32 %v1994, %v2007
        %v2012 = vsub.f32 %v1995, %v2007
        %v2013 = vsub.f32 %v1996, %v2007
        %v2014 = vsub.f32 %v1997, %v2007
        %v2015 = vsub.f32 %v1998, %v2007
        %v2016 = vsub.f32 %v1999, %v2007
        %v2017 = vsub.f32 %v2000, %v2007
        %v2018 = vsub.f32 %v2001, %v2007
        %v2019 = vsub.f32 %v2002, %v2007
        %v2020 = vsub.f32 %v2003, %v2007
        %v2021 = vsub.f32 %v2004, %v2007
        %v2022 = vsub.f32 %v2005, %v2007
        %v2023 = vsub.f32 %v2006, %v2007
        %v2024 = vmax.f32 %v2008, 0.0
        %v2025 = vmax.f32 %v2009, 0.0
        %v2026 = vmax.f32 %v2010, 0.0
        %v2027 = vmax.f32 %v2011, 0.0
        %v2028 = vmax.f32 %v2012, 0.0
        %v2029 = vmax.f32 %v2013, 0.0
        %v2030 = vmax.f32 %v2014, 0.0
        %v2031 = vmax.f32 %v2015, 0.0
        %v2032 = vmax.f32 %v2016, 0.0
        %v2033 = vmax.f32 %v2017, 0.0
        %v2034 = vmax.f32 %v2018, 0.0
        %v2035 = vmax.f32 %v2019, 0.0
        %v2036 = vmax.f32 %v2020, 0.0
        %v2037 = vmax.f32 %v2021, 0.0
        %v2038 = vmax.f32 %v2022, 0.0
        %v2039 = vmax.f32 %v2023, 0.0
        %v2040 = vmul.f32 %v2024, %v1975
        %v2041 = vmul.f32 %v2025, %v1976
        %v2042 = vmul.f32 %v2026, %v1977
        %v2043 = vmul.f32 %v2027, %v1978
        %v2044 = vmul.f32 %v2028, %v1979
        %v2045 = vmul.f32 %v2029, %v1980
        %v2046 = vmul.f32 %v2030, %v1981
        %v2047 = vmul.f32 %v2031, %v1982
        %v2048 = vmul.f32 %v2032, %v1983
        %v2049 = vmul.f32 %v2033, %v1984
        %v2050 = vmul.f32 %v2034, %v1985
        %v2051 = vmul.f32 %v2035, %v1986
        %v2052 = vmul.f32 %v2036, %v1987
        %v2053 = vmul.f32 %v2037, %v1988
        %v2054 = vmul.f32 %v2038, %v1989
        %v2055 = vmul.f32 %v2039, %v1990
        %v2056 = vmul.f32 %v1878, %v2040
        %v2057 = vmul.f32 %v1879, %v2041
        %v2058 = vmul.f32 %v1880, %v2042
        %v2059 = vmul.f32 %v1881, %v2043
        %v2060 = vmul.f32 %v1882, %v2044
        %v2061 = vmul.f32 %v1883, %v2045
        %v2062 = vmul.f32 %v1884, %v2046
        %v2063 = vmul.f32 %v1885, %v2047
        %v2064 = vmul.f32 %v1886, %v2048
        %v2065 = vmul.f32 %v1887, %v2049
        %v2066 = vmul.f32 %v1888, %v2050
        %v2067 = vmul.f32 %v1889, %v2051
        %v2068 = vmul.f32 %v1890, %v2052
        %v2069 = vmul.f32 %v1891, %v2053
        %v2070 = vmul.f32 %v1892, %v2054
        %v2071 = vmul.f32 %v1893, %v2055
        %v2072 = vmul.f32 %v1894, %v2040
        %v2073 = vmul.f32 %v1895, %v2041
        %v2074 = vmul.f32 %v1896, %v2042
        %v2075 = vmul.f32 %v1897, %v2043
        %v2076 = vmul.f32 %v1898, %v2044
        %v2077 = vmul.f32 %v1899, %v2045
        %v2078 = vmul.f32 %v1900, %v2046
        %v2079 = vmul.f32 %v1901, %v2047
        %v2080 = vmul.f32 %v1902, %v2048
        %v2081 = vmul.f32 %v1903, %v2049
        %v2082 = vmul.f32 %v1904, %v2050
        %v2083 = vmul.f32 %v1905, %v2051
        %v2084 = vmul.f32 %v1906, %v2052
        %v2085 = vmul.f32 %v1907, %v2053
        %v2086 = vmul.f32 %v1908, %v2054
        %v2087 = vmul.f32 %v1909, %v2055
        %s2088 = scalar_lea.vmem %s2, 128
        %v2089 = vld [vmem:[%s2088] sm:$0xff]
        %v2090 = vld [vmem:[%s2088 + $0x8] sm:$0xff]
        %v2091 = vld [vmem:[%s2088 + $0x10] sm:$0xff]
        %v2092 = vld [vmem:[%s2088 + $0x18] sm:$0xff]
        %v2093 = vld [vmem:[%s2088 + $0x20] sm:$0xff]
        %v2094 = vld [vmem:[%s2088 + $0x28] sm:$0xff]
        %v2095 = vld [vmem:[%s2088 + $0x30] sm:$0xff]
        %v2096 = vld [vmem:[%s2088 + $0x38] sm:$0xff]
        %v2098 = vsel %vm323, %v2089, 0
        %v2101 = vsel %vm323, %v2090, 0
        %v2104 = vsel %vm323, %v2091, 0
        %v2107 = vsel %vm323, %v2092, 0
        %v2110 = vsel %vm323, %v2093, 0
        %v2113 = vsel %vm323, %v2094, 0
        %v2116 = vsel %vm323, %v2095, 0
        %v2119 = vsel %vm323, %v2096, 0
        %2121 = vmatprep.subr.mxu0 0.0
        %2122 = vmatpush1.msra.mxu0 0.0
        %2123 = vmatprep.subr.mxu0 0.0
        %2124 = vmatpush1.msra.mxu0 0.0
        %2125 = vmatprep.subr.mxu0 0.0
        %2126 = vmatpush1.msra.mxu0 0.0
        %2127 = vmatprep.subr.mxu0 0.0
        %2128 = vmatpush1.msra.mxu0 0.0
        %2129 = vmatprep.subr.mxu0 0.0
        %2130 = vmatpush1.msra.mxu0 0.0
        %2131 = vmatprep.subr.mxu0 0.0
        %2132 = vmatpush1.msra.mxu0 0.0
        %2133 = vmatprep.subr.mxu0 0.0
        %2134 = vmatpush1.msra.mxu0 0.0
        %2135 = vmatprep.subr.mxu0 0.0
        %2136 = vmatpush1.msra.mxu0 0.0
        %2137 = vmatprep.subr.mxu0 %v2085
        %2138 = vmatpush1.msra.mxu0 %v2084
        %2139 = vmatprep.subr.mxu0 %v2081
        %2140 = vmatpush1.msra.mxu0 %v2080
        %2141 = vmatprep.subr.mxu0 %v2077
        %2142 = vmatpush1.msra.mxu0 %v2076
        %2143 = vmatprep.subr.mxu0 %v2073
        %2144 = vmatpush1.msra.mxu0 %v2072
        %2145 = vmatprep.subr.mxu0 %v2069
        %2146 = vmatpush1.msra.mxu0 %v2068
        %2147 = vmatprep.subr.mxu0 %v2065
        %2148 = vmatpush1.msra.mxu0 %v2064
        %2149 = vmatprep.subr.mxu0 %v2061
        %2150 = vmatpush1.msra.mxu0 %v2060
        %2151 = vmatprep.subr.mxu0 %v2057
        %2152 = vmatpush1.msra.mxu0 %v2056
        %2153 = vmatprep.subr.mxu0 0.0
        %2154 = vmatpush2.msra.mxu0 0.0
        %2155 = vmatprep.subr.mxu0 0.0
        %2156 = vmatpush2.msra.mxu0 0.0
        %2157 = vmatprep.subr.mxu0 0.0
        %2158 = vmatpush2.msra.mxu0 0.0
        %2159 = vmatprep.subr.mxu0 0.0
        %2160 = vmatpush2.msra.mxu0 0.0
        %2161 = vmatprep.subr.mxu0 0.0
        %2162 = vmatpush2.msra.mxu0 0.0
        %2163 = vmatprep.subr.mxu0 0.0
        %2164 = vmatpush2.msra.mxu0 0.0
        %2165 = vmatprep.subr.mxu0 0.0
        %2166 = vmatpush2.msra.mxu0 0.0
        %2167 = vmatprep.subr.mxu0 0.0
        %2168 = vmatpush2.msra.mxu0 0.0
        %2169 = vmatprep.subr.mxu0 0.0
        %2170 = vmatpush2.msra.mxu0 0.0
        %2171 = vmatprep.subr.mxu0 0.0
        %2172 = vmatpush2.msra.mxu0 0.0
        %2173 = vmatprep.subr.mxu0 0.0
        %2174 = vmatpush2.msra.mxu0 0.0
        %2175 = vmatprep.subr.mxu0 0.0
        %2176 = vmatpush2.msra.mxu0 0.0
        %2177 = vmatprep.subr.mxu0 0.0
        %2178 = vmatpush2.msra.mxu0 0.0
        %2179 = vmatprep.subr.mxu0 0.0
        %2180 = vmatpush2.msra.mxu0 0.0
        %2181 = vmatprep.subr.mxu0 0.0
        %2182 = vmatpush2.msra.mxu0 0.0
        %2183 = vmatprep.subr.mxu0 0.0
        %2184 = vmatpush2.msra.mxu0 0.0
        %2185 = vmatprep.mubr.f32.mxu0 0.0
        %2186 = vmatmul.mubr.f32.gmra.mxu0 %v2098
        %v2187 = vpop.f32.mrf.mxu0
        %v2188 = vadd.f32 0.0, %v2187
        %v2189 = vpop.f32.mrf.mxu0
        %v2190 = vadd.f32 0.0, %v2189
        %2191 = vmatprep.mubr.f32.mxu0 0.0
        %2192 = vmatmul.mubr.f32.gmra.mxu0 %v2101
        %v2193 = vpop.f32.mrf.mxu0
        %v2194 = vadd.f32 0.0, %v2193
        %v2195 = vpop.f32.mrf.mxu0
        %v2196 = vadd.f32 0.0, %v2195
        %2197 = vmatprep.mubr.f32.mxu0 0.0
        %2198 = vmatmul.mubr.f32.gmra.mxu0 %v2104
        %v2199 = vpop.f32.mrf.mxu0
        %v2200 = vadd.f32 0.0, %v2199
        %v2201 = vpop.f32.mrf.mxu0
        %v2202 = vadd.f32 0.0, %v2201
        %2203 = vmatprep.mubr.f32.mxu0 0.0
        %2204 = vmatmul.mubr.f32.gmra.mxu0 %v2107
        %v2205 = vpop.f32.mrf.mxu0
        %v2206 = vadd.f32 0.0, %v2205
        %v2207 = vpop.f32.mrf.mxu0
        %v2208 = vadd.f32 0.0, %v2207
        %2209 = vmatprep.mubr.f32.mxu0 0.0
        %2210 = vmatmul.mubr.f32.gmra.mxu0 %v2110
        %v2211 = vpop.f32.mrf.mxu0
        %v2212 = vadd.f32 0.0, %v2211
        %v2213 = vpop.f32.mrf.mxu0
        %v2214 = vadd.f32 0.0, %v2213
        %2215 = vmatprep.mubr.f32.mxu0 0.0
        %2216 = vmatmul.mubr.f32.gmra.mxu0 %v2113
        %v2217 = vpop.f32.mrf.mxu0
        %v2218 = vadd.f32 0.0, %v2217
        %v2219 = vpop.f32.mrf.mxu0
        %v2220 = vadd.f32 0.0, %v2219
        %2221 = vmatprep.mubr.f32.mxu0 0.0
        %2222 = vmatmul.mubr.f32.gmra.mxu0 %v2116
        %v2223 = vpop.f32.mrf.mxu0
        %v2224 = vadd.f32 0.0, %v2223
        %v2225 = vpop.f32.mrf.mxu0
        %v2226 = vadd.f32 0.0, %v2225
        %2227 = vmatprep.mubr.f32.mxu0 0.0
        %2228 = vmatmul.mubr.f32.gmra.mxu0 %v2119
        %v2229 = vpop.f32.mrf.mxu0
        %v2230 = vadd.f32 0.0, %v2229
        %v2231 = vpop.f32.mrf.mxu0
        %v2232 = vadd.f32 0.0, %v2231
        %2233 = vdwg.mxu0
        %2234 = vmatprep.subr.mxu0 0.0
        %2235 = vmatpush1.msra.mxu0 0.0
        %2236 = vmatprep.subr.mxu0 0.0
        %2237 = vmatpush1.msra.mxu0 0.0
        %2238 = vmatprep.subr.mxu0 0.0
        %2239 = vmatpush1.msra.mxu0 0.0
        %2240 = vmatprep.subr.mxu0 0.0
        %2241 = vmatpush1.msra.mxu0 0.0
        %2242 = vmatprep.subr.mxu0 0.0
        %2243 = vmatpush1.msra.mxu0 0.0
        %2244 = vmatprep.subr.mxu0 0.0
        %2245 = vmatpush1.msra.mxu0 0.0
        %2246 = vmatprep.subr.mxu0 0.0
        %2247 = vmatpush1.msra.mxu0 0.0
        %2248 = vmatprep.subr.mxu0 0.0
        %2249 = vmatpush1.msra.mxu0 0.0
        %2250 = vmatprep.subr.mxu0 %v2087
        %2251 = vmatpush1.msra.mxu0 %v2086
        %2252 = vmatprep.subr.mxu0 %v2083
        %2253 = vmatpush1.msra.mxu0 %v2082
        %2254 = vmatprep.subr.mxu0 %v2079
        %2255 = vmatpush1.msra.mxu0 %v2078
        %2256 = vmatprep.subr.mxu0 %v2075
        %2257 = vmatpush1.msra.mxu0 %v2074
        %2258 = vmatprep.subr.mxu0 %v2071
        %2259 = vmatpush1.msra.mxu0 %v2070
        %2260 = vmatprep.subr.mxu0 %v2067
        %2261 = vmatpush1.msra.mxu0 %v2066
        %2262 = vmatprep.subr.mxu0 %v2063
        %2263 = vmatpush1.msra.mxu0 %v2062
        %2264 = vmatprep.subr.mxu0 %v2059
        %2265 = vmatpush1.msra.mxu0 %v2058
        %2266 = vmatprep.subr.mxu0 0.0
        %2267 = vmatpush2.msra.mxu0 0.0
        %2268 = vmatprep.subr.mxu0 0.0
        %2269 = vmatpush2.msra.mxu0 0.0
        %2270 = vmatprep.subr.mxu0 0.0
        %2271 = vmatpush2.msra.mxu0 0.0
        %2272 = vmatprep.subr.mxu0 0.0
        %2273 = vmatpush2.msra.mxu0 0.0
        %2274 = vmatprep.subr.mxu0 0.0
        %2275 = vmatpush2.msra.mxu0 0.0
        %2276 = vmatprep.subr.mxu0 0.0
        %2277 = vmatpush2.msra.mxu0 0.0
        %2278 = vmatprep.subr.mxu0 0.0
        %2279 = vmatpush2.msra.mxu0 0.0
        %2280 = vmatprep.subr.mxu0 0.0
        %2281 = vmatpush2.msra.mxu0 0.0
        %2282 = vmatprep.subr.mxu0 0.0
        %2283 = vmatpush2.msra.mxu0 0.0
        %2284 = vmatprep.subr.mxu0 0.0
        %2285 = vmatpush2.msra.mxu0 0.0
        %2286 = vmatprep.subr.mxu0 0.0
        %2287 = vmatpush2.msra.mxu0 0.0
        %2288 = vmatprep.subr.mxu0 0.0
        %2289 = vmatpush2.msra.mxu0 0.0
        %2290 = vmatprep.subr.mxu0 0.0
        %2291 = vmatpush2.msra.mxu0 0.0
        %2292 = vmatprep.subr.mxu0 0.0
        %2293 = vmatpush2.msra.mxu0 0.0
        %2294 = vmatprep.subr.mxu0 0.0
        %2295 = vmatpush2.msra.mxu0 0.0
        %2296 = vmatprep.subr.mxu0 0.0
        %2297 = vmatpush2.msra.mxu0 0.0
        %2298 = vmatprep.mubr.f32.mxu0 0.0
        %2299 = vmatmul.mubr.f32.gmra.mxu0 %v2098
        %v2300 = vpop.f32.mrf.mxu0
        %v2301 = vadd.f32 0.0, %v2300
        %v2302 = vpop.f32.mrf.mxu0
        %v2303 = vadd.f32 0.0, %v2302
        %2304 = vmatprep.mubr.f32.mxu0 0.0
        %2305 = vmatmul.mubr.f32.gmra.mxu0 %v2101
        %v2306 = vpop.f32.mrf.mxu0
        %v2307 = vadd.f32 0.0, %v2306
        %v2308 = vpop.f32.mrf.mxu0
        %v2309 = vadd.f32 0.0, %v2308
        %2310 = vmatprep.mubr.f32.mxu0 0.0
        %2311 = vmatmul.mubr.f32.gmra.mxu0 %v2104
        %v2312 = vpop.f32.mrf.mxu0
        %v2313 = vadd.f32 0.0, %v2312
        %v2314 = vpop.f32.mrf.mxu0
        %v2315 = vadd.f32 0.0, %v2314
        %2316 = vmatprep.mubr.f32.mxu0 0.0
        %2317 = vmatmul.mubr.f32.gmra.mxu0 %v2107
        %v2318 = vpop.f32.mrf.mxu0
        %v2319 = vadd.f32 0.0, %v2318
        %v2320 = vpop.f32.mrf.mxu0
        %v2321 = vadd.f32 0.0, %v2320
        %2322 = vmatprep.mubr.f32.mxu0 0.0
        %2323 = vmatmul.mubr.f32.gmra.mxu0 %v2110
        %v2324 = vpop.f32.mrf.mxu0
        %v2325 = vadd.f32 0.0, %v2324
        %v2326 = vpop.f32.mrf.mxu0
        %v2327 = vadd.f32 0.0, %v2326
        %2328 = vmatprep.mubr.f32.mxu0 0.0
        %2329 = vmatmul.mubr.f32.gmra.mxu0 %v2113
        %v2330 = vpop.f32.mrf.mxu0
        %v2331 = vadd.f32 0.0, %v2330
        %v2332 = vpop.f32.mrf.mxu0
        %v2333 = vadd.f32 0.0, %v2332
        %2334 = vmatprep.mubr.f32.mxu0 0.0
        %2335 = vmatmul.mubr.f32.gmra.mxu0 %v2116
        %v2336 = vpop.f32.mrf.mxu0
        %v2337 = vadd.f32 0.0, %v2336
        %v2338 = vpop.f32.mrf.mxu0
        %v2339 = vadd.f32 0.0, %v2338
        %2340 = vmatprep.mubr.f32.mxu0 0.0
        %2341 = vmatmul.mubr.f32.gmra.mxu0 %v2119
        %v2342 = vpop.f32.mrf.mxu0
        %v2343 = vadd.f32 0.0, %v2342
        %v2344 = vpop.f32.mrf.mxu0
        %v2345 = vadd.f32 0.0, %v2344
        %2346 = vdwg.mxu0
        %s2347 = scalar_lea.vmem %s3, 128
        %v2348 = vld [vmem:[%s2347] sm:$0xff]
        %v2349 = vld [vmem:[%s2347 + $0x8] sm:$0xff]
        %v2350 = vld [vmem:[%s2347 + $0x10] sm:$0xff]
        %v2351 = vld [vmem:[%s2347 + $0x18] sm:$0xff]
        %v2352 = vld [vmem:[%s2347 + $0x20] sm:$0xff]
        %v2353 = vld [vmem:[%s2347 + $0x28] sm:$0xff]
        %v2354 = vld [vmem:[%s2347 + $0x30] sm:$0xff]
        %v2355 = vld [vmem:[%s2347 + $0x38] sm:$0xff]
        %s2356 = scalar_lea.vmem %s4, 128
        %v2357 = vld [vmem:[%s2356] sm:$0xff]
        %v2358 = vld [vmem:[%s2356 + $0x8] sm:$0xff]
        %v2359 = vld [vmem:[%s2356 + $0x10] sm:$0xff]
        %v2360 = vld [vmem:[%s2356 + $0x18] sm:$0xff]
        %v2361 = vld [vmem:[%s2356 + $0x20] sm:$0xff]
        %v2362 = vld [vmem:[%s2356 + $0x28] sm:$0xff]
        %v2363 = vld [vmem:[%s2356 + $0x30] sm:$0xff]
        %v2364 = vld [vmem:[%s2356 + $0x38] sm:$0xff]
        %v2365 = vadd.f32 %v2188, %v2194
        %v2366 = vadd.f32 %v2365, %v2200
        %v2367 = vadd.f32 %v2366, %v2206
        %v2368 = vrot.slane %v2367, 4
        %v2369 = vadd.f32 %v2367, %v2368
        %v2370 = vrot.slane %v2369, 2
        %v2371 = vadd.f32 %v2369, %v2370
        %v2372 = vrot.slane %v2371, 1
        %v2373 = vadd.f32 %v2371, %v2372
        %v2374 = vadd.f32 %v2190, %v2196
        %v2375 = vadd.f32 %v2374, %v2202
        %v2376 = vadd.f32 %v2375, %v2208
        %v2377 = vrot.slane %v2376, 4
        %v2378 = vadd.f32 %v2376, %v2377
        %v2379 = vrot.slane %v2378, 2
        %v2380 = vadd.f32 %v2378, %v2379
        %v2381 = vrot.slane %v2380, 1
        %v2382 = vadd.f32 %v2380, %v2381
        %v2383 = vadd.f32 %v2301, %v2307
        %v2384 = vadd.f32 %v2383, %v2313
        %v2385 = vadd.f32 %v2384, %v2319
        %v2386 = vrot.slane %v2385, 4
        %v2387 = vadd.f32 %v2385, %v2386
        %v2388 = vrot.slane %v2387, 2
        %v2389 = vadd.f32 %v2387, %v2388
        %v2390 = vrot.slane %v2389, 1
        %v2391 = vadd.f32 %v2389, %v2390
        %v2392 = vadd.f32 %v2303, %v2309
        %v2393 = vadd.f32 %v2392, %v2315
        %v2394 = vadd.f32 %v2393, %v2321
        %v2395 = vrot.slane %v2394, 4
        %v2396 = vadd.f32 %v2394, %v2395
        %v2397 = vrot.slane %v2396, 2
        %v2398 = vadd.f32 %v2396, %v2397
        %v2399 = vrot.slane %v2398, 1
        %v2400 = vadd.f32 %v2398, %v2399
        %v2401 = vmul.f32 %v2373, %v626
        %v2402 = vmul.f32 %v2382, %v626
        %v2403 = vmul.f32 %v2391, %v626
        %v2404 = vmul.f32 %v2400, %v626
        %v2405 = vsub.f32 %v2188, %v2401
        %v2406 = vsub.f32 %v2190, %v2402
        %v2407 = vsub.f32 %v2301, %v2403
        %v2408 = vsub.f32 %v2303, %v2404
        %v2409 = vsub.f32 %v2194, %v2401
        %v2410 = vsub.f32 %v2196, %v2402
        %v2411 = vsub.f32 %v2307, %v2403
        %v2412 = vsub.f32 %v2309, %v2404
        %v2413 = vsub.f32 %v2200, %v2401
        %v2414 = vsub.f32 %v2202, %v2402
        %v2415 = vsub.f32 %v2313, %v2403
        %v2416 = vsub.f32 %v2315, %v2404
        %v2417 = vsub.f32 %v2206, %v2401
        %v2418 = vsub.f32 %v2208, %v2402
        %v2419 = vsub.f32 %v2319, %v2403
        %v2420 = vsub.f32 %v2321, %v2404
        %v2421 = vmul.f32 %v2405, %v2405
        %v2422 = vmul.f32 %v2406, %v2406
        %v2423 = vmul.f32 %v2407, %v2407
        %v2424 = vmul.f32 %v2408, %v2408
        %v2425 = vmul.f32 %v2409, %v2409
        %v2426 = vmul.f32 %v2410, %v2410
        %v2427 = vmul.f32 %v2411, %v2411
        %v2428 = vmul.f32 %v2412, %v2412
        %v2429 = vmul.f32 %v2413, %v2413
        %v2430 = vmul.f32 %v2414, %v2414
        %v2431 = vmul.f32 %v2415, %v2415
        %v2432 = vmul.f32 %v2416, %v2416
        %v2433 = vmul.f32 %v2417, %v2417
        %v2434 = vmul.f32 %v2418, %v2418
        %v2435 = vmul.f32 %v2419, %v2419
        %v2436 = vmul.f32 %v2420, %v2420
        %v2437 = vadd.f32 %v2421, %v2425
        %v2438 = vadd.f32 %v2437, %v2429
        %v2439 = vadd.f32 %v2438, %v2433
        %v2440 = vrot.slane %v2439, 4
        %v2441 = vadd.f32 %v2439, %v2440
        %v2442 = vrot.slane %v2441, 2
        %v2443 = vadd.f32 %v2441, %v2442
        %v2444 = vrot.slane %v2443, 1
        %v2445 = vadd.f32 %v2443, %v2444
        %v2446 = vadd.f32 %v2422, %v2426
        %v2447 = vadd.f32 %v2446, %v2430
        %v2448 = vadd.f32 %v2447, %v2434
        %v2449 = vrot.slane %v2448, 4
        %v2450 = vadd.f32 %v2448, %v2449
        %v2451 = vrot.slane %v2450, 2
        %v2452 = vadd.f32 %v2450, %v2451
        %v2453 = vrot.slane %v2452, 1
        %v2454 = vadd.f32 %v2452, %v2453
        %v2455 = vadd.f32 %v2423, %v2427
        %v2456 = vadd.f32 %v2455, %v2431
        %v2457 = vadd.f32 %v2456, %v2435
        %v2458 = vrot.slane %v2457, 4
        %v2459 = vadd.f32 %v2457, %v2458
        %v2460 = vrot.slane %v2459, 2
        %v2461 = vadd.f32 %v2459, %v2460
        %v2462 = vrot.slane %v2461, 1
        %v2463 = vadd.f32 %v2461, %v2462
        %v2464 = vadd.f32 %v2424, %v2428
        %v2465 = vadd.f32 %v2464, %v2432
        %v2466 = vadd.f32 %v2465, %v2436
        %v2467 = vrot.slane %v2466, 4
        %v2468 = vadd.f32 %v2466, %v2467
        %v2469 = vrot.slane %v2468, 2
        %v2470 = vadd.f32 %v2468, %v2469
        %v2471 = vrot.slane %v2470, 1
        %v2472 = vadd.f32 %v2470, %v2471
        %v2473 = vmul.f32 %v2445, %v626
        %v2474 = vmul.f32 %v2454, %v626
        %v2475 = vmul.f32 %v2463, %v626
        %v2476 = vmul.f32 %v2472, %v626
        %v2477 = vadd.f32 %v2473, 1e-05
        %v2478 = vadd.f32 %v2474, 1e-05
        %v2479 = vadd.f32 %v2475, 1e-05
        %v2480 = vadd.f32 %v2476, 1e-05
        %v2481 = vrsqrt.pop %v2477
        %v2482 = vrsqrt.pop %v2478
        %v2483 = vrsqrt.pop %v2479
        %v2484 = vrsqrt.pop %v2480
        %v2485 = vmul.f32 %v2405, %v2481
        %v2486 = vmul.f32 %v2406, %v2482
        %v2487 = vmul.f32 %v2407, %v2483
        %v2488 = vmul.f32 %v2408, %v2484
        %v2489 = vmul.f32 %v2409, %v2481
        %v2490 = vmul.f32 %v2410, %v2482
        %v2491 = vmul.f32 %v2411, %v2483
        %v2492 = vmul.f32 %v2412, %v2484
        %v2493 = vmul.f32 %v2413, %v2481
        %v2494 = vmul.f32 %v2414, %v2482
        %v2495 = vmul.f32 %v2415, %v2483
        %v2496 = vmul.f32 %v2416, %v2484
        %v2497 = vmul.f32 %v2417, %v2481
        %v2498 = vmul.f32 %v2418, %v2482
        %v2499 = vmul.f32 %v2419, %v2483
        %v2500 = vmul.f32 %v2420, %v2484
        %v2501 = vadd.f32 %v2212, %v2218
        %v2502 = vadd.f32 %v2501, %v2224
        %v2503 = vadd.f32 %v2502, %v2230
        %v2504 = vrot.slane %v2503, 4
        %v2505 = vadd.f32 %v2503, %v2504
        %v2506 = vrot.slane %v2505, 2
        %v2507 = vadd.f32 %v2505, %v2506
        %v2508 = vrot.slane %v2507, 1
        %v2509 = vadd.f32 %v2507, %v2508
        %v2510 = vadd.f32 %v2214, %v2220
        %v2511 = vadd.f32 %v2510, %v2226
        %v2512 = vadd.f32 %v2511, %v2232
        %v2513 = vrot.slane %v2512, 4
        %v2514 = vadd.f32 %v2512, %v2513
        %v2515 = vrot.slane %v2514, 2
        %v2516 = vadd.f32 %v2514, %v2515
        %v2517 = vrot.slane %v2516, 1
        %v2518 = vadd.f32 %v2516, %v2517
        %v2519 = vadd.f32 %v2325, %v2331
        %v2520 = vadd.f32 %v2519, %v2337
        %v2521 = vadd.f32 %v2520, %v2343
        %v2522 = vrot.slane %v2521, 4
        %v2523 = vadd.f32 %v2521, %v2522
        %v2524 = vrot.slane %v2523, 2
        %v2525 = vadd.f32 %v2523, %v2524
        %v2526 = vrot.slane %v2525, 1
        %v2527 = vadd.f32 %v2525, %v2526
        %v2528 = vadd.f32 %v2327, %v2333
        %v2529 = vadd.f32 %v2528, %v2339
        %v2530 = vadd.f32 %v2529, %v2345
        %v2531 = vrot.slane %v2530, 4
        %v2532 = vadd.f32 %v2530, %v2531
        %v2533 = vrot.slane %v2532, 2
        %v2534 = vadd.f32 %v2532, %v2533
        %v2535 = vrot.slane %v2534, 1
        %v2536 = vadd.f32 %v2534, %v2535
        %v2537 = vmul.f32 %v2509, %v626
        %v2538 = vmul.f32 %v2518, %v626
        %v2539 = vmul.f32 %v2527, %v626
        %v2540 = vmul.f32 %v2536, %v626
        %v2541 = vsub.f32 %v2212, %v2537
        %v2542 = vsub.f32 %v2214, %v2538
        %v2543 = vsub.f32 %v2325, %v2539
        %v2544 = vsub.f32 %v2327, %v2540
        %v2545 = vsub.f32 %v2218, %v2537
        %v2546 = vsub.f32 %v2220, %v2538
        %v2547 = vsub.f32 %v2331, %v2539
        %v2548 = vsub.f32 %v2333, %v2540
        %v2549 = vsub.f32 %v2224, %v2537
        %v2550 = vsub.f32 %v2226, %v2538
        %v2551 = vsub.f32 %v2337, %v2539
        %v2552 = vsub.f32 %v2339, %v2540
        %v2553 = vsub.f32 %v2230, %v2537
        %v2554 = vsub.f32 %v2232, %v2538
        %v2555 = vsub.f32 %v2343, %v2539
        %v2556 = vsub.f32 %v2345, %v2540
        %v2557 = vmul.f32 %v2541, %v2541
        %v2558 = vmul.f32 %v2542, %v2542
        %v2559 = vmul.f32 %v2543, %v2543
        %v2560 = vmul.f32 %v2544, %v2544
        %v2561 = vmul.f32 %v2545, %v2545
        %v2562 = vmul.f32 %v2546, %v2546
        %v2563 = vmul.f32 %v2547, %v2547
        %v2564 = vmul.f32 %v2548, %v2548
        %v2565 = vmul.f32 %v2549, %v2549
        %v2566 = vmul.f32 %v2550, %v2550
        %v2567 = vmul.f32 %v2551, %v2551
        %v2568 = vmul.f32 %v2552, %v2552
        %v2569 = vmul.f32 %v2553, %v2553
        %v2570 = vmul.f32 %v2554, %v2554
        %v2571 = vmul.f32 %v2555, %v2555
        %v2572 = vmul.f32 %v2556, %v2556
        %v2573 = vadd.f32 %v2557, %v2561
        %v2574 = vadd.f32 %v2573, %v2565
        %v2575 = vadd.f32 %v2574, %v2569
        %v2576 = vrot.slane %v2575, 4
        %v2577 = vadd.f32 %v2575, %v2576
        %v2578 = vrot.slane %v2577, 2
        %v2579 = vadd.f32 %v2577, %v2578
        %v2580 = vrot.slane %v2579, 1
        %v2581 = vadd.f32 %v2579, %v2580
        %v2582 = vadd.f32 %v2558, %v2562
        %v2583 = vadd.f32 %v2582, %v2566
        %v2584 = vadd.f32 %v2583, %v2570
        %v2585 = vrot.slane %v2584, 4
        %v2586 = vadd.f32 %v2584, %v2585
        %v2587 = vrot.slane %v2586, 2
        %v2588 = vadd.f32 %v2586, %v2587
        %v2589 = vrot.slane %v2588, 1
        %v2590 = vadd.f32 %v2588, %v2589
        %v2591 = vadd.f32 %v2559, %v2563
        %v2592 = vadd.f32 %v2591, %v2567
        %v2593 = vadd.f32 %v2592, %v2571
        %v2594 = vrot.slane %v2593, 4
        %v2595 = vadd.f32 %v2593, %v2594
        %v2596 = vrot.slane %v2595, 2
        %v2597 = vadd.f32 %v2595, %v2596
        %v2598 = vrot.slane %v2597, 1
        %v2599 = vadd.f32 %v2597, %v2598
        %v2600 = vadd.f32 %v2560, %v2564
        %v2601 = vadd.f32 %v2600, %v2568
        %v2602 = vadd.f32 %v2601, %v2572
        %v2603 = vrot.slane %v2602, 4
        %v2604 = vadd.f32 %v2602, %v2603
        %v2605 = vrot.slane %v2604, 2
        %v2606 = vadd.f32 %v2604, %v2605
        %v2607 = vrot.slane %v2606, 1
        %v2608 = vadd.f32 %v2606, %v2607
        %v2609 = vmul.f32 %v2581, %v626
        %v2610 = vmul.f32 %v2590, %v626
        %v2611 = vmul.f32 %v2599, %v626
        %v2612 = vmul.f32 %v2608, %v626
        %v2613 = vadd.f32 %v2609, 1e-05
        %v2614 = vadd.f32 %v2610, 1e-05
        %v2615 = vadd.f32 %v2611, 1e-05
        %v2616 = vadd.f32 %v2612, 1e-05
        %v2617 = vrsqrt.pop %v2613
        %v2618 = vrsqrt.pop %v2614
        %v2619 = vrsqrt.pop %v2615
        %v2620 = vrsqrt.pop %v2616
        %v2621 = vmul.f32 %v2541, %v2617
        %v2622 = vmul.f32 %v2542, %v2618
        %v2623 = vmul.f32 %v2543, %v2619
        %v2624 = vmul.f32 %v2544, %v2620
        %v2625 = vmul.f32 %v2545, %v2617
        %v2626 = vmul.f32 %v2546, %v2618
        %v2627 = vmul.f32 %v2547, %v2619
        %v2628 = vmul.f32 %v2548, %v2620
        %v2629 = vmul.f32 %v2549, %v2617
        %v2630 = vmul.f32 %v2550, %v2618
        %v2631 = vmul.f32 %v2551, %v2619
        %v2632 = vmul.f32 %v2552, %v2620
        %v2633 = vmul.f32 %v2553, %v2617
        %v2634 = vmul.f32 %v2554, %v2618
        %v2635 = vmul.f32 %v2555, %v2619
        %v2636 = vmul.f32 %v2556, %v2620
        %2638 = vset.pattern.permute.xlu0 0
        %2639 = vperm.xlu0 %2638, %v2348
        %v2640 = vpop.permute.xlu0 %2639
        %2643 = vset.pattern.permute.xlu0 0
        %2644 = vperm.xlu0 %2643, %v2349
        %v2645 = vpop.permute.xlu0 %2644
        %2648 = vset.pattern.permute.xlu0 0
        %2649 = vperm.xlu0 %2648, %v2350
        %v2650 = vpop.permute.xlu0 %2649
        %2653 = vset.pattern.permute.xlu0 0
        %2654 = vperm.xlu0 %2653, %v2351
        %v2655 = vpop.permute.xlu0 %2654
        %2658 = vset.pattern.permute.xlu0 0
        %2659 = vperm.xlu0 %2658, %v2352
        %v2660 = vpop.permute.xlu0 %2659
        %2663 = vset.pattern.permute.xlu0 0
        %2664 = vperm.xlu0 %2663, %v2353
        %v2665 = vpop.permute.xlu0 %2664
        %2668 = vset.pattern.permute.xlu0 0
        %2669 = vperm.xlu0 %2668, %v2354
        %v2670 = vpop.permute.xlu0 %2669
        %2673 = vset.pattern.permute.xlu0 0
        %2674 = vperm.xlu0 %2673, %v2355
        %v2675 = vpop.permute.xlu0 %2674
        %v2677 = vmul.f32 %v2485, %v2640
        %v2678 = vmul.f32 %v2486, %v2640
        %v2679 = vmul.f32 %v2487, %v2640
        %v2680 = vmul.f32 %v2488, %v2640
        %v2681 = vmul.f32 %v2489, %v2645
        %v2682 = vmul.f32 %v2490, %v2645
        %v2683 = vmul.f32 %v2491, %v2645
        %v2684 = vmul.f32 %v2492, %v2645
        %v2685 = vmul.f32 %v2493, %v2650
        %v2686 = vmul.f32 %v2494, %v2650
        %v2687 = vmul.f32 %v2495, %v2650
        %v2688 = vmul.f32 %v2496, %v2650
        %v2689 = vmul.f32 %v2497, %v2655
        %v2690 = vmul.f32 %v2498, %v2655
        %v2691 = vmul.f32 %v2499, %v2655
        %v2692 = vmul.f32 %v2500, %v2655
        %v2693 = vmul.f32 %v2621, %v2660
        %v2694 = vmul.f32 %v2622, %v2660
        %v2695 = vmul.f32 %v2623, %v2660
        %v2696 = vmul.f32 %v2624, %v2660
        %v2697 = vmul.f32 %v2625, %v2665
        %v2698 = vmul.f32 %v2626, %v2665
        %v2699 = vmul.f32 %v2627, %v2665
        %v2700 = vmul.f32 %v2628, %v2665
        %v2701 = vmul.f32 %v2629, %v2670
        %v2702 = vmul.f32 %v2630, %v2670
        %v2703 = vmul.f32 %v2631, %v2670
        %v2704 = vmul.f32 %v2632, %v2670
        %v2705 = vmul.f32 %v2633, %v2675
        %v2706 = vmul.f32 %v2634, %v2675
        %v2707 = vmul.f32 %v2635, %v2675
        %v2708 = vmul.f32 %v2636, %v2675
        %2710 = vset.pattern.permute.xlu0 0
        %2711 = vperm.xlu0 %2710, %v2357
        %v2712 = vpop.permute.xlu0 %2711
        %2715 = vset.pattern.permute.xlu0 0
        %2716 = vperm.xlu0 %2715, %v2358
        %v2717 = vpop.permute.xlu0 %2716
        %2720 = vset.pattern.permute.xlu0 0
        %2721 = vperm.xlu0 %2720, %v2359
        %v2722 = vpop.permute.xlu0 %2721
        %2725 = vset.pattern.permute.xlu0 0
        %2726 = vperm.xlu0 %2725, %v2360
        %v2727 = vpop.permute.xlu0 %2726
        %2730 = vset.pattern.permute.xlu0 0
        %2731 = vperm.xlu0 %2730, %v2361
        %v2732 = vpop.permute.xlu0 %2731
        %2735 = vset.pattern.permute.xlu0 0
        %2736 = vperm.xlu0 %2735, %v2362
        %v2737 = vpop.permute.xlu0 %2736
        %2740 = vset.pattern.permute.xlu0 0
        %2741 = vperm.xlu0 %2740, %v2363
        %v2742 = vpop.permute.xlu0 %2741
        %2745 = vset.pattern.permute.xlu0 0
        %2746 = vperm.xlu0 %2745, %v2364
        %v2747 = vpop.permute.xlu0 %2746
        %v2749 = vadd.f32 %v2677, %v2712
        %v2750 = vadd.f32 %v2678, %v2712
        %v2751 = vadd.f32 %v2679, %v2712
        %v2752 = vadd.f32 %v2680, %v2712
        %v2753 = vadd.f32 %v2681, %v2717
        %v2754 = vadd.f32 %v2682, %v2717
        %v2755 = vadd.f32 %v2683, %v2717
        %v2756 = vadd.f32 %v2684, %v2717
        %v2757 = vadd.f32 %v2685, %v2722
        %v2758 = vadd.f32 %v2686, %v2722
        %v2759 = vadd.f32 %v2687, %v2722
        %v2760 = vadd.f32 %v2688, %v2722
        %v2761 = vadd.f32 %v2689, %v2727
        %v2762 = vadd.f32 %v2690, %v2727
        %v2763 = vadd.f32 %v2691, %v2727
        %v2764 = vadd.f32 %v2692, %v2727
        %v2765 = vadd.f32 %v2693, %v2732
        %v2766 = vadd.f32 %v2694, %v2732
        %v2767 = vadd.f32 %v2695, %v2732
        %v2768 = vadd.f32 %v2696, %v2732
        %v2769 = vadd.f32 %v2697, %v2737
        %v2770 = vadd.f32 %v2698, %v2737
        %v2771 = vadd.f32 %v2699, %v2737
        %v2772 = vadd.f32 %v2700, %v2737
        %v2773 = vadd.f32 %v2701, %v2742
        %v2774 = vadd.f32 %v2702, %v2742
        %v2775 = vadd.f32 %v2703, %v2742
        %v2776 = vadd.f32 %v2704, %v2742
        %v2777 = vadd.f32 %v2705, %v2747
        %v2778 = vadd.f32 %v2706, %v2747
        %v2779 = vadd.f32 %v2707, %v2747
        %v2780 = vadd.f32 %v2708, %v2747
        %s2781 = sld [smem:[#allocation3 + $0x80]]
        %v2782 = vmul.f32 %v2749, %v2749
        %v2783 = vmul.f32 %v2750, %v2750
        %v2784 = vmul.f32 %v2751, %v2751
        %v2785 = vmul.f32 %v2752, %v2752
        %v2786 = vmul.f32 %v2753, %v2753
        %v2787 = vmul.f32 %v2754, %v2754
        %v2788 = vmul.f32 %v2755, %v2755
        %v2789 = vmul.f32 %v2756, %v2756
        %v2790 = vmul.f32 %v2757, %v2757
        %v2791 = vmul.f32 %v2758, %v2758
        %v2792 = vmul.f32 %v2759, %v2759
        %v2793 = vmul.f32 %v2760, %v2760
        %v2794 = vmul.f32 %v2761, %v2761
        %v2795 = vmul.f32 %v2762, %v2762
        %v2796 = vmul.f32 %v2763, %v2763
        %v2797 = vmul.f32 %v2764, %v2764
        %v2798 = vmul.f32 %v2765, %v2765
        %v2799 = vmul.f32 %v2766, %v2766
        %v2800 = vmul.f32 %v2767, %v2767
        %v2801 = vmul.f32 %v2768, %v2768
        %v2802 = vmul.f32 %v2769, %v2769
        %v2803 = vmul.f32 %v2770, %v2770
        %v2804 = vmul.f32 %v2771, %v2771
        %v2805 = vmul.f32 %v2772, %v2772
        %v2806 = vmul.f32 %v2773, %v2773
        %v2807 = vmul.f32 %v2774, %v2774
        %v2808 = vmul.f32 %v2775, %v2775
        %v2809 = vmul.f32 %v2776, %v2776
        %v2810 = vmul.f32 %v2777, %v2777
        %v2811 = vmul.f32 %v2778, %v2778
        %v2812 = vmul.f32 %v2779, %v2779
        %v2813 = vmul.f32 %v2780, %v2780
        %v2814 = vadd.f32 %v2782, %v2798
        %v2815 = vadd.f32 %v2783, %v2799
        %v2816 = vadd.f32 %v2784, %v2800
        %v2817 = vadd.f32 %v2785, %v2801
        %v2818 = vadd.f32 %v2786, %v2802
        %v2819 = vadd.f32 %v2787, %v2803
        %v2820 = vadd.f32 %v2788, %v2804
        %v2821 = vadd.f32 %v2789, %v2805
        %v2822 = vadd.f32 %v2790, %v2806
        %v2823 = vadd.f32 %v2791, %v2807
        %v2824 = vadd.f32 %v2792, %v2808
        %v2825 = vadd.f32 %v2793, %v2809
        %v2826 = vadd.f32 %v2794, %v2810
        %v2827 = vadd.f32 %v2795, %v2811
        %v2828 = vadd.f32 %v2796, %v2812
        %v2829 = vadd.f32 %v2797, %v2813
        %v2830 = vadd.f32 %v2814, 1e-30
        %v2831 = vadd.f32 %v2815, 1e-30
        %v2832 = vadd.f32 %v2816, 1e-30
        %v2833 = vadd.f32 %v2817, 1e-30
        %v2834 = vadd.f32 %v2818, 1e-30
        %v2835 = vadd.f32 %v2819, 1e-30
        %v2836 = vadd.f32 %v2820, 1e-30
        %v2837 = vadd.f32 %v2821, 1e-30
        %v2838 = vadd.f32 %v2822, 1e-30
        %v2839 = vadd.f32 %v2823, 1e-30
        %v2840 = vadd.f32 %v2824, 1e-30
        %v2841 = vadd.f32 %v2825, 1e-30
        %v2842 = vadd.f32 %v2826, 1e-30
        %v2843 = vadd.f32 %v2827, 1e-30
        %v2844 = vadd.f32 %v2828, 1e-30
        %v2845 = vadd.f32 %v2829, 1e-30
        %v2846 = vrsqrt.pop %v2830
        %v2847 = vrsqrt.pop %v2831
        %v2848 = vrsqrt.pop %v2832
        %v2849 = vrsqrt.pop %v2833
        %v2850 = vrsqrt.pop %v2834
        %v2851 = vrsqrt.pop %v2835
        %v2852 = vrsqrt.pop %v2836
        %v2853 = vrsqrt.pop %v2837
        %v2854 = vrsqrt.pop %v2838
        %v2855 = vrsqrt.pop %v2839
        %v2856 = vrsqrt.pop %v2840
        %v2857 = vrsqrt.pop %v2841
        %v2858 = vrsqrt.pop %v2842
        %v2859 = vrsqrt.pop %v2843
        %v2860 = vrsqrt.pop %v2844
        %v2861 = vrsqrt.pop %v2845
        %v2862 = vmul.f32 %v2814, %v2846
        %v2863 = vmul.f32 %v2815, %v2847
        %v2864 = vmul.f32 %v2816, %v2848
        %v2865 = vmul.f32 %v2817, %v2849
        %v2866 = vmul.f32 %v2818, %v2850
        %v2867 = vmul.f32 %v2819, %v2851
        %v2868 = vmul.f32 %v2820, %v2852
        %v2869 = vmul.f32 %v2821, %v2853
        %v2870 = vmul.f32 %v2822, %v2854
        %v2871 = vmul.f32 %v2823, %v2855
        %v2872 = vmul.f32 %v2824, %v2856
        %v2873 = vmul.f32 %v2825, %v2857
        %v2874 = vmul.f32 %v2826, %v2858
        %v2875 = vmul.f32 %v2827, %v2859
        %v2876 = vmul.f32 %v2828, %v2860
        %v2877 = vmul.f32 %v2829, %v2861
        %v2878 = vstv %s2781
        %v2879 = vsub.f32 %v2862, %v2878
        %v2880 = vsub.f32 %v2863, %v2878
        %v2881 = vsub.f32 %v2864, %v2878
        %v2882 = vsub.f32 %v2865, %v2878
        %v2883 = vsub.f32 %v2866, %v2878
        %v2884 = vsub.f32 %v2867, %v2878
        %v2885 = vsub.f32 %v2868, %v2878
        %v2886 = vsub.f32 %v2869, %v2878
        %v2887 = vsub.f32 %v2870, %v2878
        %v2888 = vsub.f32 %v2871, %v2878
        %v2889 = vsub.f32 %v2872, %v2878
        %v2890 = vsub.f32 %v2873, %v2878
        %v2891 = vsub.f32 %v2874, %v2878
        %v2892 = vsub.f32 %v2875, %v2878
        %v2893 = vsub.f32 %v2876, %v2878
        %v2894 = vsub.f32 %v2877, %v2878
        %v2895 = vmax.f32 %v2879, 0.0
        %v2896 = vmax.f32 %v2880, 0.0
        %v2897 = vmax.f32 %v2881, 0.0
        %v2898 = vmax.f32 %v2882, 0.0
        %v2899 = vmax.f32 %v2883, 0.0
        %v2900 = vmax.f32 %v2884, 0.0
        %v2901 = vmax.f32 %v2885, 0.0
        %v2902 = vmax.f32 %v2886, 0.0
        %v2903 = vmax.f32 %v2887, 0.0
        %v2904 = vmax.f32 %v2888, 0.0
        %v2905 = vmax.f32 %v2889, 0.0
        %v2906 = vmax.f32 %v2890, 0.0
        %v2907 = vmax.f32 %v2891, 0.0
        %v2908 = vmax.f32 %v2892, 0.0
        %v2909 = vmax.f32 %v2893, 0.0
        %v2910 = vmax.f32 %v2894, 0.0
        %v2911 = vmul.f32 %v2895, %v2846
        %v2912 = vmul.f32 %v2896, %v2847
        %v2913 = vmul.f32 %v2897, %v2848
        %v2914 = vmul.f32 %v2898, %v2849
        %v2915 = vmul.f32 %v2899, %v2850
        %v2916 = vmul.f32 %v2900, %v2851
        %v2917 = vmul.f32 %v2901, %v2852
        %v2918 = vmul.f32 %v2902, %v2853
        %v2919 = vmul.f32 %v2903, %v2854
        %v2920 = vmul.f32 %v2904, %v2855
        %v2921 = vmul.f32 %v2905, %v2856
        %v2922 = vmul.f32 %v2906, %v2857
        %v2923 = vmul.f32 %v2907, %v2858
        %v2924 = vmul.f32 %v2908, %v2859
        %v2925 = vmul.f32 %v2909, %v2860
        %v2926 = vmul.f32 %v2910, %v2861
        %v2927 = vmul.f32 %v2749, %v2911
        %v2928 = vmul.f32 %v2750, %v2912
        %v2929 = vmul.f32 %v2751, %v2913
        %v2930 = vmul.f32 %v2752, %v2914
        %v2931 = vmul.f32 %v2753, %v2915
        %v2932 = vmul.f32 %v2754, %v2916
        %v2933 = vmul.f32 %v2755, %v2917
        %v2934 = vmul.f32 %v2756, %v2918
        %v2935 = vmul.f32 %v2757, %v2919
        %v2936 = vmul.f32 %v2758, %v2920
        %v2937 = vmul.f32 %v2759, %v2921
        %v2938 = vmul.f32 %v2760, %v2922
        %v2939 = vmul.f32 %v2761, %v2923
        %v2940 = vmul.f32 %v2762, %v2924
        %v2941 = vmul.f32 %v2763, %v2925
        %v2942 = vmul.f32 %v2764, %v2926
        %v2943 = vmul.f32 %v2765, %v2911
        %v2944 = vmul.f32 %v2766, %v2912
        %v2945 = vmul.f32 %v2767, %v2913
        %v2946 = vmul.f32 %v2768, %v2914
        %v2947 = vmul.f32 %v2769, %v2915
        %v2948 = vmul.f32 %v2770, %v2916
        %v2949 = vmul.f32 %v2771, %v2917
        %v2950 = vmul.f32 %v2772, %v2918
        %v2951 = vmul.f32 %v2773, %v2919
        %v2952 = vmul.f32 %v2774, %v2920
        %v2953 = vmul.f32 %v2775, %v2921
        %v2954 = vmul.f32 %v2776, %v2922
        %v2955 = vmul.f32 %v2777, %v2923
        %v2956 = vmul.f32 %v2778, %v2924
        %v2957 = vmul.f32 %v2779, %v2925
        %v2958 = vmul.f32 %v2780, %v2926
        %s2959 = scalar_lea.vmem %s2, 192
        %v2960 = vld [vmem:[%s2959] sm:$0xff]
        %v2961 = vld [vmem:[%s2959 + $0x8] sm:$0xff]
        %v2962 = vld [vmem:[%s2959 + $0x10] sm:$0xff]
        %v2963 = vld [vmem:[%s2959 + $0x18] sm:$0xff]
        %v2964 = vld [vmem:[%s2959 + $0x20] sm:$0xff]
        %v2965 = vld [vmem:[%s2959 + $0x28] sm:$0xff]
        %v2966 = vld [vmem:[%s2959 + $0x30] sm:$0xff]
        %v2967 = vld [vmem:[%s2959 + $0x38] sm:$0xff]
        %v2969 = vsel %vm323, %v2960, 0
        %v2972 = vsel %vm323, %v2961, 0
        %v2975 = vsel %vm323, %v2962, 0
        %v2978 = vsel %vm323, %v2963, 0
        %v2981 = vsel %vm323, %v2964, 0
        %v2984 = vsel %vm323, %v2965, 0
        %v2987 = vsel %vm323, %v2966, 0
        %v2990 = vsel %vm323, %v2967, 0
        %2992 = vmatprep.subr.mxu0 0.0
        %2993 = vmatpush1.msra.mxu0 0.0
        %2994 = vmatprep.subr.mxu0 0.0
        %2995 = vmatpush1.msra.mxu0 0.0
        %2996 = vmatprep.subr.mxu0 0.0
        %2997 = vmatpush1.msra.mxu0 0.0
        %2998 = vmatprep.subr.mxu0 0.0
        %2999 = vmatpush1.msra.mxu0 0.0
        %3000 = vmatprep.subr.mxu0 0.0
        %3001 = vmatpush1.msra.mxu0 0.0
        %3002 = vmatprep.subr.mxu0 0.0
        %3003 = vmatpush1.msra.mxu0 0.0
        %3004 = vmatprep.subr.mxu0 0.0
        %3005 = vmatpush1.msra.mxu0 0.0
        %3006 = vmatprep.subr.mxu0 0.0
        %3007 = vmatpush1.msra.mxu0 0.0
        %3008 = vmatprep.subr.mxu0 %v2956
        %3009 = vmatpush1.msra.mxu0 %v2955
        %3010 = vmatprep.subr.mxu0 %v2952
        %3011 = vmatpush1.msra.mxu0 %v2951
        %3012 = vmatprep.subr.mxu0 %v2948
        %3013 = vmatpush1.msra.mxu0 %v2947
        %3014 = vmatprep.subr.mxu0 %v2944
        %3015 = vmatpush1.msra.mxu0 %v2943
        %3016 = vmatprep.subr.mxu0 %v2940
        %3017 = vmatpush1.msra.mxu0 %v2939
        %3018 = vmatprep.subr.mxu0 %v2936
        %3019 = vmatpush1.msra.mxu0 %v2935
        %3020 = vmatprep.subr.mxu0 %v2932
        %3021 = vmatpush1.msra.mxu0 %v2931
        %3022 = vmatprep.subr.mxu0 %v2928
        %3023 = vmatpush1.msra.mxu0 %v2927
        %3024 = vmatprep.subr.mxu0 0.0
        %3025 = vmatpush2.msra.mxu0 0.0
        %3026 = vmatprep.subr.mxu0 0.0
        %3027 = vmatpush2.msra.mxu0 0.0
        %3028 = vmatprep.subr.mxu0 0.0
        %3029 = vmatpush2.msra.mxu0 0.0
        %3030 = vmatprep.subr.mxu0 0.0
        %3031 = vmatpush2.msra.mxu0 0.0
        %3032 = vmatprep.subr.mxu0 0.0
        %3033 = vmatpush2.msra.mxu0 0.0
        %3034 = vmatprep.subr.mxu0 0.0
        %3035 = vmatpush2.msra.mxu0 0.0
        %3036 = vmatprep.subr.mxu0 0.0
        %3037 = vmatpush2.msra.mxu0 0.0
        %3038 = vmatprep.subr.mxu0 0.0
        %3039 = vmatpush2.msra.mxu0 0.0
        %3040 = vmatprep.subr.mxu0 0.0
        %3041 = vmatpush2.msra.mxu0 0.0
        %3042 = vmatprep.subr.mxu0 0.0
        %3043 = vmatpush2.msra.mxu0 0.0
        %3044 = vmatprep.subr.mxu0 0.0
        %3045 = vmatpush2.msra.mxu0 0.0
        %3046 = vmatprep.subr.mxu0 0.0
        %3047 = vmatpush2.msra.mxu0 0.0
        %3048 = vmatprep.subr.mxu0 0.0
        %3049 = vmatpush2.msra.mxu0 0.0
        %3050 = vmatprep.subr.mxu0 0.0
        %3051 = vmatpush2.msra.mxu0 0.0
        %3052 = vmatprep.subr.mxu0 0.0
        %3053 = vmatpush2.msra.mxu0 0.0
        %3054 = vmatprep.subr.mxu0 0.0
        %3055 = vmatpush2.msra.mxu0 0.0
        %3056 = vmatprep.mubr.f32.mxu0 0.0
        %3057 = vmatmul.mubr.f32.gmra.mxu0 %v2969
        %v3058 = vpop.f32.mrf.mxu0
        %v3059 = vadd.f32 0.0, %v3058
        %v3060 = vpop.f32.mrf.mxu0
        %v3061 = vadd.f32 0.0, %v3060
        %3062 = vmatprep.mubr.f32.mxu0 0.0
        %3063 = vmatmul.mubr.f32.gmra.mxu0 %v2972
        %v3064 = vpop.f32.mrf.mxu0
        %v3065 = vadd.f32 0.0, %v3064
        %v3066 = vpop.f32.mrf.mxu0
        %v3067 = vadd.f32 0.0, %v3066
        %3068 = vmatprep.mubr.f32.mxu0 0.0
        %3069 = vmatmul.mubr.f32.gmra.mxu0 %v2975
        %v3070 = vpop.f32.mrf.mxu0
        %v3071 = vadd.f32 0.0, %v3070
        %v3072 = vpop.f32.mrf.mxu0
        %v3073 = vadd.f32 0.0, %v3072
        %3074 = vmatprep.mubr.f32.mxu0 0.0
        %3075 = vmatmul.mubr.f32.gmra.mxu0 %v2978
        %v3076 = vpop.f32.mrf.mxu0
        %v3077 = vadd.f32 0.0, %v3076
        %v3078 = vpop.f32.mrf.mxu0
        %v3079 = vadd.f32 0.0, %v3078
        %3080 = vmatprep.mubr.f32.mxu0 0.0
        %3081 = vmatmul.mubr.f32.gmra.mxu0 %v2981
        %v3082 = vpop.f32.mrf.mxu0
        %v3083 = vadd.f32 0.0, %v3082
        %v3084 = vpop.f32.mrf.mxu0
        %v3085 = vadd.f32 0.0, %v3084
        %3086 = vmatprep.mubr.f32.mxu0 0.0
        %3087 = vmatmul.mubr.f32.gmra.mxu0 %v2984
        %v3088 = vpop.f32.mrf.mxu0
        %v3089 = vadd.f32 0.0, %v3088
        %v3090 = vpop.f32.mrf.mxu0
        %v3091 = vadd.f32 0.0, %v3090
        %3092 = vmatprep.mubr.f32.mxu0 0.0
        %3093 = vmatmul.mubr.f32.gmra.mxu0 %v2987
        %v3094 = vpop.f32.mrf.mxu0
        %v3095 = vadd.f32 0.0, %v3094
        %v3096 = vpop.f32.mrf.mxu0
        %v3097 = vadd.f32 0.0, %v3096
        %3098 = vmatprep.mubr.f32.mxu0 0.0
        %3099 = vmatmul.mubr.f32.gmra.mxu0 %v2990
        %v3100 = vpop.f32.mrf.mxu0
        %v3101 = vadd.f32 0.0, %v3100
        %v3102 = vpop.f32.mrf.mxu0
        %v3103 = vadd.f32 0.0, %v3102
        %3104 = vdwg.mxu0
        %3105 = vmatprep.subr.mxu0 0.0
        %3106 = vmatpush1.msra.mxu0 0.0
        %3107 = vmatprep.subr.mxu0 0.0
        %3108 = vmatpush1.msra.mxu0 0.0
        %3109 = vmatprep.subr.mxu0 0.0
        %3110 = vmatpush1.msra.mxu0 0.0
        %3111 = vmatprep.subr.mxu0 0.0
        %3112 = vmatpush1.msra.mxu0 0.0
        %3113 = vmatprep.subr.mxu0 0.0
        %3114 = vmatpush1.msra.mxu0 0.0
        %3115 = vmatprep.subr.mxu0 0.0
        %3116 = vmatpush1.msra.mxu0 0.0
        %3117 = vmatprep.subr.mxu0 0.0
        %3118 = vmatpush1.msra.mxu0 0.0
        %3119 = vmatprep.subr.mxu0 0.0
        %3120 = vmatpush1.msra.mxu0 0.0
        %3121 = vmatprep.subr.mxu0 %v2958
        %3122 = vmatpush1.msra.mxu0 %v2957
        %3123 = vmatprep.subr.mxu0 %v2954
        %3124 = vmatpush1.msra.mxu0 %v2953
        %3125 = vmatprep.subr.mxu0 %v2950
        %3126 = vmatpush1.msra.mxu0 %v2949
        %3127 = vmatprep.subr.mxu0 %v2946
        %3128 = vmatpush1.msra.mxu0 %v2945
        %3129 = vmatprep.subr.mxu0 %v2942
        %3130 = vmatpush1.msra.mxu0 %v2941
        %3131 = vmatprep.subr.mxu0 %v2938
        %3132 = vmatpush1.msra.mxu0 %v2937
        %3133 = vmatprep.subr.mxu0 %v2934
        %3134 = vmatpush1.msra.mxu0 %v2933
        %3135 = vmatprep.subr.mxu0 %v2930
        %3136 = vmatpush1.msra.mxu0 %v2929
        %3137 = vmatprep.subr.mxu0 0.0
        %3138 = vmatpush2.msra.mxu0 0.0
        %3139 = vmatprep.subr.mxu0 0.0
        %3140 = vmatpush2.msra.mxu0 0.0
        %3141 = vmatprep.subr.mxu0 0.0
        %3142 = vmatpush2.msra.mxu0 0.0
        %3143 = vmatprep.subr.mxu0 0.0
        %3144 = vmatpush2.msra.mxu0 0.0
        %3145 = vmatprep.subr.mxu0 0.0
        %3146 = vmatpush2.msra.mxu0 0.0
        %3147 = vmatprep.subr.mxu0 0.0
        %3148 = vmatpush2.msra.mxu0 0.0
        %3149 = vmatprep.subr.mxu0 0.0
        %3150 = vmatpush2.msra.mxu0 0.0
        %3151 = vmatprep.subr.mxu0 0.0
        %3152 = vmatpush2.msra.mxu0 0.0
        %3153 = vmatprep.subr.mxu0 0.0
        %3154 = vmatpush2.msra.mxu0 0.0
        %3155 = vmatprep.subr.mxu0 0.0
        %3156 = vmatpush2.msra.mxu0 0.0
        %3157 = vmatprep.subr.mxu0 0.0
        %3158 = vmatpush2.msra.mxu0 0.0
        %3159 = vmatprep.subr.mxu0 0.0
        %3160 = vmatpush2.msra.mxu0 0.0
        %3161 = vmatprep.subr.mxu0 0.0
        %3162 = vmatpush2.msra.mxu0 0.0
        %3163 = vmatprep.subr.mxu0 0.0
        %3164 = vmatpush2.msra.mxu0 0.0
        %3165 = vmatprep.subr.mxu0 0.0
        %3166 = vmatpush2.msra.mxu0 0.0
        %3167 = vmatprep.subr.mxu0 0.0
        %3168 = vmatpush2.msra.mxu0 0.0
        %3169 = vmatprep.mubr.f32.mxu0 0.0
        %3170 = vmatmul.mubr.f32.gmra.mxu0 %v2969
        %v3171 = vpop.f32.mrf.mxu0
        %v3172 = vadd.f32 0.0, %v3171
        %v3173 = vpop.f32.mrf.mxu0
        %v3174 = vadd.f32 0.0, %v3173
        %3175 = vmatprep.mubr.f32.mxu0 0.0
        %3176 = vmatmul.mubr.f32.gmra.mxu0 %v2972
        %v3177 = vpop.f32.mrf.mxu0
        %v3178 = vadd.f32 0.0, %v3177
        %v3179 = vpop.f32.mrf.mxu0
        %v3180 = vadd.f32 0.0, %v3179
        %3181 = vmatprep.mubr.f32.mxu0 0.0
        %3182 = vmatmul.mubr.f32.gmra.mxu0 %v2975
        %v3183 = vpop.f32.mrf.mxu0
        %v3184 = vadd.f32 0.0, %v3183
        %v3185 = vpop.f32.mrf.mxu0
        %v3186 = vadd.f32 0.0, %v3185
        %3187 = vmatprep.mubr.f32.mxu0 0.0
        %3188 = vmatmul.mubr.f32.gmra.mxu0 %v2978
        %v3189 = vpop.f32.mrf.mxu0
        %v3190 = vadd.f32 0.0, %v3189
        %v3191 = vpop.f32.mrf.mxu0
        %v3192 = vadd.f32 0.0, %v3191
        %3193 = vmatprep.mubr.f32.mxu0 0.0
        %3194 = vmatmul.mubr.f32.gmra.mxu0 %v2981
        %v3195 = vpop.f32.mrf.mxu0
        %v3196 = vadd.f32 0.0, %v3195
        %v3197 = vpop.f32.mrf.mxu0
        %v3198 = vadd.f32 0.0, %v3197
        %3199 = vmatprep.mubr.f32.mxu0 0.0
        %3200 = vmatmul.mubr.f32.gmra.mxu0 %v2984
        %v3201 = vpop.f32.mrf.mxu0
        %v3202 = vadd.f32 0.0, %v3201
        %v3203 = vpop.f32.mrf.mxu0
        %v3204 = vadd.f32 0.0, %v3203
        %3205 = vmatprep.mubr.f32.mxu0 0.0
        %3206 = vmatmul.mubr.f32.gmra.mxu0 %v2987
        %v3207 = vpop.f32.mrf.mxu0
        %v3208 = vadd.f32 0.0, %v3207
        %v3209 = vpop.f32.mrf.mxu0
        %v3210 = vadd.f32 0.0, %v3209
        %3211 = vmatprep.mubr.f32.mxu0 0.0
        %3212 = vmatmul.mubr.f32.gmra.mxu0 %v2990
        %v3213 = vpop.f32.mrf.mxu0
        %v3214 = vadd.f32 0.0, %v3213
        %v3215 = vpop.f32.mrf.mxu0
        %v3216 = vadd.f32 0.0, %v3215
        %3217 = vdwg.mxu0
        %s3218 = scalar_lea.vmem %s3, 192
        %v3219 = vld [vmem:[%s3218] sm:$0xff]
        %v3220 = vld [vmem:[%s3218 + $0x8] sm:$0xff]
        %v3221 = vld [vmem:[%s3218 + $0x10] sm:$0xff]
        %v3222 = vld [vmem:[%s3218 + $0x18] sm:$0xff]
        %v3223 = vld [vmem:[%s3218 + $0x20] sm:$0xff]
        %v3224 = vld [vmem:[%s3218 + $0x28] sm:$0xff]
        %v3225 = vld [vmem:[%s3218 + $0x30] sm:$0xff]
        %v3226 = vld [vmem:[%s3218 + $0x38] sm:$0xff]
        %s3227 = scalar_lea.vmem %s4, 192
        %v3228 = vld [vmem:[%s3227] sm:$0xff]
        %v3229 = vld [vmem:[%s3227 + $0x8] sm:$0xff]
        %v3230 = vld [vmem:[%s3227 + $0x10] sm:$0xff]
        %v3231 = vld [vmem:[%s3227 + $0x18] sm:$0xff]
        %v3232 = vld [vmem:[%s3227 + $0x20] sm:$0xff]
        %v3233 = vld [vmem:[%s3227 + $0x28] sm:$0xff]
        %v3234 = vld [vmem:[%s3227 + $0x30] sm:$0xff]
        %v3235 = vld [vmem:[%s3227 + $0x38] sm:$0xff]
        %v3236 = vadd.f32 %v3059, %v3065
        %v3237 = vadd.f32 %v3236, %v3071
        %v3238 = vadd.f32 %v3237, %v3077
        %v3239 = vrot.slane %v3238, 4
        %v3240 = vadd.f32 %v3238, %v3239
        %v3241 = vrot.slane %v3240, 2
        %v3242 = vadd.f32 %v3240, %v3241
        %v3243 = vrot.slane %v3242, 1
        %v3244 = vadd.f32 %v3242, %v3243
        %v3245 = vadd.f32 %v3061, %v3067
        %v3246 = vadd.f32 %v3245, %v3073
        %v3247 = vadd.f32 %v3246, %v3079
        %v3248 = vrot.slane %v3247, 4
        %v3249 = vadd.f32 %v3247, %v3248
        %v3250 = vrot.slane %v3249, 2
        %v3251 = vadd.f32 %v3249, %v3250
        %v3252 = vrot.slane %v3251, 1
        %v3253 = vadd.f32 %v3251, %v3252
        %v3254 = vadd.f32 %v3172, %v3178
        %v3255 = vadd.f32 %v3254, %v3184
        %v3256 = vadd.f32 %v3255, %v3190
        %v3257 = vrot.slane %v3256, 4
        %v3258 = vadd.f32 %v3256, %v3257
        %v3259 = vrot.slane %v3258, 2
        %v3260 = vadd.f32 %v3258, %v3259
        %v3261 = vrot.slane %v3260, 1
        %v3262 = vadd.f32 %v3260, %v3261
        %v3263 = vadd.f32 %v3174, %v3180
        %v3264 = vadd.f32 %v3263, %v3186
        %v3265 = vadd.f32 %v3264, %v3192
        %v3266 = vrot.slane %v3265, 4
        %v3267 = vadd.f32 %v3265, %v3266
        %v3268 = vrot.slane %v3267, 2
        %v3269 = vadd.f32 %v3267, %v3268
        %v3270 = vrot.slane %v3269, 1
        %v3271 = vadd.f32 %v3269, %v3270
        %v3272 = vmul.f32 %v3244, %v626
        %v3273 = vmul.f32 %v3253, %v626
        %v3274 = vmul.f32 %v3262, %v626
        %v3275 = vmul.f32 %v3271, %v626
        %v3276 = vsub.f32 %v3059, %v3272
        %v3277 = vsub.f32 %v3061, %v3273
        %v3278 = vsub.f32 %v3172, %v3274
        %v3279 = vsub.f32 %v3174, %v3275
        %v3280 = vsub.f32 %v3065, %v3272
        %v3281 = vsub.f32 %v3067, %v3273
        %v3282 = vsub.f32 %v3178, %v3274
        %v3283 = vsub.f32 %v3180, %v3275
        %v3284 = vsub.f32 %v3071, %v3272
        %v3285 = vsub.f32 %v3073, %v3273
        %v3286 = vsub.f32 %v3184, %v3274
        %v3287 = vsub.f32 %v3186, %v3275
        %v3288 = vsub.f32 %v3077, %v3272
        %v3289 = vsub.f32 %v3079, %v3273
        %v3290 = vsub.f32 %v3190, %v3274
        %v3291 = vsub.f32 %v3192, %v3275
        %v3292 = vmul.f32 %v3276, %v3276
        %v3293 = vmul.f32 %v3277, %v3277
        %v3294 = vmul.f32 %v3278, %v3278
        %v3295 = vmul.f32 %v3279, %v3279
        %v3296 = vmul.f32 %v3280, %v3280
        %v3297 = vmul.f32 %v3281, %v3281
        %v3298 = vmul.f32 %v3282, %v3282
        %v3299 = vmul.f32 %v3283, %v3283
        %v3300 = vmul.f32 %v3284, %v3284
        %v3301 = vmul.f32 %v3285, %v3285
        %v3302 = vmul.f32 %v3286, %v3286
        %v3303 = vmul.f32 %v3287, %v3287
        %v3304 = vmul.f32 %v3288, %v3288
        %v3305 = vmul.f32 %v3289, %v3289
        %v3306 = vmul.f32 %v3290, %v3290
        %v3307 = vmul.f32 %v3291, %v3291
        %v3308 = vadd.f32 %v3292, %v3296
        %v3309 = vadd.f32 %v3308, %v3300
        %v3310 = vadd.f32 %v3309, %v3304
        %v3311 = vrot.slane %v3310, 4
        %v3312 = vadd.f32 %v3310, %v3311
        %v3313 = vrot.slane %v3312, 2
        %v3314 = vadd.f32 %v3312, %v3313
        %v3315 = vrot.slane %v3314, 1
        %v3316 = vadd.f32 %v3314, %v3315
        %v3317 = vadd.f32 %v3293, %v3297
        %v3318 = vadd.f32 %v3317, %v3301
        %v3319 = vadd.f32 %v3318, %v3305
        %v3320 = vrot.slane %v3319, 4
        %v3321 = vadd.f32 %v3319, %v3320
        %v3322 = vrot.slane %v3321, 2
        %v3323 = vadd.f32 %v3321, %v3322
        %v3324 = vrot.slane %v3323, 1
        %v3325 = vadd.f32 %v3323, %v3324
        %v3326 = vadd.f32 %v3294, %v3298
        %v3327 = vadd.f32 %v3326, %v3302
        %v3328 = vadd.f32 %v3327, %v3306
        %v3329 = vrot.slane %v3328, 4
        %v3330 = vadd.f32 %v3328, %v3329
        %v3331 = vrot.slane %v3330, 2
        %v3332 = vadd.f32 %v3330, %v3331
        %v3333 = vrot.slane %v3332, 1
        %v3334 = vadd.f32 %v3332, %v3333
        %v3335 = vadd.f32 %v3295, %v3299
        %v3336 = vadd.f32 %v3335, %v3303
        %v3337 = vadd.f32 %v3336, %v3307
        %v3338 = vrot.slane %v3337, 4
        %v3339 = vadd.f32 %v3337, %v3338
        %v3340 = vrot.slane %v3339, 2
        %v3341 = vadd.f32 %v3339, %v3340
        %v3342 = vrot.slane %v3341, 1
        %v3343 = vadd.f32 %v3341, %v3342
        %v3344 = vmul.f32 %v3316, %v626
        %v3345 = vmul.f32 %v3325, %v626
        %v3346 = vmul.f32 %v3334, %v626
        %v3347 = vmul.f32 %v3343, %v626
        %v3348 = vadd.f32 %v3344, 1e-05
        %v3349 = vadd.f32 %v3345, 1e-05
        %v3350 = vadd.f32 %v3346, 1e-05
        %v3351 = vadd.f32 %v3347, 1e-05
        %v3352 = vrsqrt.pop %v3348
        %v3353 = vrsqrt.pop %v3349
        %v3354 = vrsqrt.pop %v3350
        %v3355 = vrsqrt.pop %v3351
        %v3356 = vmul.f32 %v3276, %v3352
        %v3357 = vmul.f32 %v3277, %v3353
        %v3358 = vmul.f32 %v3278, %v3354
        %v3359 = vmul.f32 %v3279, %v3355
        %v3360 = vmul.f32 %v3280, %v3352
        %v3361 = vmul.f32 %v3281, %v3353
        %v3362 = vmul.f32 %v3282, %v3354
        %v3363 = vmul.f32 %v3283, %v3355
        %v3364 = vmul.f32 %v3284, %v3352
        %v3365 = vmul.f32 %v3285, %v3353
        %v3366 = vmul.f32 %v3286, %v3354
        %v3367 = vmul.f32 %v3287, %v3355
        %v3368 = vmul.f32 %v3288, %v3352
        %v3369 = vmul.f32 %v3289, %v3353
        %v3370 = vmul.f32 %v3290, %v3354
        %v3371 = vmul.f32 %v3291, %v3355
        %v3372 = vadd.f32 %v3083, %v3089
        %v3373 = vadd.f32 %v3372, %v3095
        %v3374 = vadd.f32 %v3373, %v3101
        %v3375 = vrot.slane %v3374, 4
        %v3376 = vadd.f32 %v3374, %v3375
        %v3377 = vrot.slane %v3376, 2
        %v3378 = vadd.f32 %v3376, %v3377
        %v3379 = vrot.slane %v3378, 1
        %v3380 = vadd.f32 %v3378, %v3379
        %v3381 = vadd.f32 %v3085, %v3091
        %v3382 = vadd.f32 %v3381, %v3097
        %v3383 = vadd.f32 %v3382, %v3103
        %v3384 = vrot.slane %v3383, 4
        %v3385 = vadd.f32 %v3383, %v3384
        %v3386 = vrot.slane %v3385, 2
        %v3387 = vadd.f32 %v3385, %v3386
        %v3388 = vrot.slane %v3387, 1
        %v3389 = vadd.f32 %v3387, %v3388
        %v3390 = vadd.f32 %v3196, %v3202
        %v3391 = vadd.f32 %v3390, %v3208
        %v3392 = vadd.f32 %v3391, %v3214
        %v3393 = vrot.slane %v3392, 4
        %v3394 = vadd.f32 %v3392, %v3393
        %v3395 = vrot.slane %v3394, 2
        %v3396 = vadd.f32 %v3394, %v3395
        %v3397 = vrot.slane %v3396, 1
        %v3398 = vadd.f32 %v3396, %v3397
        %v3399 = vadd.f32 %v3198, %v3204
        %v3400 = vadd.f32 %v3399, %v3210
        %v3401 = vadd.f32 %v3400, %v3216
        %v3402 = vrot.slane %v3401, 4
        %v3403 = vadd.f32 %v3401, %v3402
        %v3404 = vrot.slane %v3403, 2
        %v3405 = vadd.f32 %v3403, %v3404
        %v3406 = vrot.slane %v3405, 1
        %v3407 = vadd.f32 %v3405, %v3406
        %v3408 = vmul.f32 %v3380, %v626
        %v3409 = vmul.f32 %v3389, %v626
        %v3410 = vmul.f32 %v3398, %v626
        %v3411 = vmul.f32 %v3407, %v626
        %v3412 = vsub.f32 %v3083, %v3408
        %v3413 = vsub.f32 %v3085, %v3409
        %v3414 = vsub.f32 %v3196, %v3410
        %v3415 = vsub.f32 %v3198, %v3411
        %v3416 = vsub.f32 %v3089, %v3408
        %v3417 = vsub.f32 %v3091, %v3409
        %v3418 = vsub.f32 %v3202, %v3410
        %v3419 = vsub.f32 %v3204, %v3411
        %v3420 = vsub.f32 %v3095, %v3408
        %v3421 = vsub.f32 %v3097, %v3409
        %v3422 = vsub.f32 %v3208, %v3410
        %v3423 = vsub.f32 %v3210, %v3411
        %v3424 = vsub.f32 %v3101, %v3408
        %v3425 = vsub.f32 %v3103, %v3409
        %v3426 = vsub.f32 %v3214, %v3410
        %v3427 = vsub.f32 %v3216, %v3411
        %v3428 = vmul.f32 %v3412, %v3412
        %v3429 = vmul.f32 %v3413, %v3413
        %v3430 = vmul.f32 %v3414, %v3414
        %v3431 = vmul.f32 %v3415, %v3415
        %v3432 = vmul.f32 %v3416, %v3416
        %v3433 = vmul.f32 %v3417, %v3417
        %v3434 = vmul.f32 %v3418, %v3418
        %v3435 = vmul.f32 %v3419, %v3419
        %v3436 = vmul.f32 %v3420, %v3420
        %v3437 = vmul.f32 %v3421, %v3421
        %v3438 = vmul.f32 %v3422, %v3422
        %v3439 = vmul.f32 %v3423, %v3423
        %v3440 = vmul.f32 %v3424, %v3424
        %v3441 = vmul.f32 %v3425, %v3425
        %v3442 = vmul.f32 %v3426, %v3426
        %v3443 = vmul.f32 %v3427, %v3427
        %v3444 = vadd.f32 %v3428, %v3432
        %v3445 = vadd.f32 %v3444, %v3436
        %v3446 = vadd.f32 %v3445, %v3440
        %v3447 = vrot.slane %v3446, 4
        %v3448 = vadd.f32 %v3446, %v3447
        %v3449 = vrot.slane %v3448, 2
        %v3450 = vadd.f32 %v3448, %v3449
        %v3451 = vrot.slane %v3450, 1
        %v3452 = vadd.f32 %v3450, %v3451
        %v3453 = vadd.f32 %v3429, %v3433
        %v3454 = vadd.f32 %v3453, %v3437
        %v3455 = vadd.f32 %v3454, %v3441
        %v3456 = vrot.slane %v3455, 4
        %v3457 = vadd.f32 %v3455, %v3456
        %v3458 = vrot.slane %v3457, 2
        %v3459 = vadd.f32 %v3457, %v3458
        %v3460 = vrot.slane %v3459, 1
        %v3461 = vadd.f32 %v3459, %v3460
        %v3462 = vadd.f32 %v3430, %v3434
        %v3463 = vadd.f32 %v3462, %v3438
        %v3464 = vadd.f32 %v3463, %v3442
        %v3465 = vrot.slane %v3464, 4
        %v3466 = vadd.f32 %v3464, %v3465
        %v3467 = vrot.slane %v3466, 2
        %v3468 = vadd.f32 %v3466, %v3467
        %v3469 = vrot.slane %v3468, 1
        %v3470 = vadd.f32 %v3468, %v3469
        %v3471 = vadd.f32 %v3431, %v3435
        %v3472 = vadd.f32 %v3471, %v3439
        %v3473 = vadd.f32 %v3472, %v3443
        %v3474 = vrot.slane %v3473, 4
        %v3475 = vadd.f32 %v3473, %v3474
        %v3476 = vrot.slane %v3475, 2
        %v3477 = vadd.f32 %v3475, %v3476
        %v3478 = vrot.slane %v3477, 1
        %v3479 = vadd.f32 %v3477, %v3478
        %v3480 = vmul.f32 %v3452, %v626
        %v3481 = vmul.f32 %v3461, %v626
        %v3482 = vmul.f32 %v3470, %v626
        %v3483 = vmul.f32 %v3479, %v626
        %v3484 = vadd.f32 %v3480, 1e-05
        %v3485 = vadd.f32 %v3481, 1e-05
        %v3486 = vadd.f32 %v3482, 1e-05
        %v3487 = vadd.f32 %v3483, 1e-05
        %v3488 = vrsqrt.pop %v3484
        %v3489 = vrsqrt.pop %v3485
        %v3490 = vrsqrt.pop %v3486
        %v3491 = vrsqrt.pop %v3487
        %v3492 = vmul.f32 %v3412, %v3488
        %v3493 = vmul.f32 %v3413, %v3489
        %v3494 = vmul.f32 %v3414, %v3490
        %v3495 = vmul.f32 %v3415, %v3491
        %v3496 = vmul.f32 %v3416, %v3488
        %v3497 = vmul.f32 %v3417, %v3489
        %v3498 = vmul.f32 %v3418, %v3490
        %v3499 = vmul.f32 %v3419, %v3491
        %v3500 = vmul.f32 %v3420, %v3488
        %v3501 = vmul.f32 %v3421, %v3489
        %v3502 = vmul.f32 %v3422, %v3490
        %v3503 = vmul.f32 %v3423, %v3491
        %v3504 = vmul.f32 %v3424, %v3488
        %v3505 = vmul.f32 %v3425, %v3489
        %v3506 = vmul.f32 %v3426, %v3490
        %v3507 = vmul.f32 %v3427, %v3491
        %3509 = vset.pattern.permute.xlu0 0
        %3510 = vperm.xlu0 %3509, %v3219
        %v3511 = vpop.permute.xlu0 %3510
        %3514 = vset.pattern.permute.xlu0 0
        %3515 = vperm.xlu0 %3514, %v3220
        %v3516 = vpop.permute.xlu0 %3515
        %3519 = vset.pattern.permute.xlu0 0
        %3520 = vperm.xlu0 %3519, %v3221
        %v3521 = vpop.permute.xlu0 %3520
        %3524 = vset.pattern.permute.xlu0 0
        %3525 = vperm.xlu0 %3524, %v3222
        %v3526 = vpop.permute.xlu0 %3525
        %3529 = vset.pattern.permute.xlu0 0
        %3530 = vperm.xlu0 %3529, %v3223
        %v3531 = vpop.permute.xlu0 %3530
        %3534 = vset.pattern.permute.xlu0 0
        %3535 = vperm.xlu0 %3534, %v3224
        %v3536 = vpop.permute.xlu0 %3535
        %3539 = vset.pattern.permute.xlu0 0
        %3540 = vperm.xlu0 %3539, %v3225
        %v3541 = vpop.permute.xlu0 %3540
        %3544 = vset.pattern.permute.xlu0 0
        %3545 = vperm.xlu0 %3544, %v3226
        %v3546 = vpop.permute.xlu0 %3545
        %v3548 = vmul.f32 %v3356, %v3511
        %v3549 = vmul.f32 %v3357, %v3511
        %v3550 = vmul.f32 %v3358, %v3511
        %v3551 = vmul.f32 %v3359, %v3511
        %v3552 = vmul.f32 %v3360, %v3516
        %v3553 = vmul.f32 %v3361, %v3516
        %v3554 = vmul.f32 %v3362, %v3516
        %v3555 = vmul.f32 %v3363, %v3516
        %v3556 = vmul.f32 %v3364, %v3521
        %v3557 = vmul.f32 %v3365, %v3521
        %v3558 = vmul.f32 %v3366, %v3521
        %v3559 = vmul.f32 %v3367, %v3521
        %v3560 = vmul.f32 %v3368, %v3526
        %v3561 = vmul.f32 %v3369, %v3526
        %v3562 = vmul.f32 %v3370, %v3526
        %v3563 = vmul.f32 %v3371, %v3526
        %v3564 = vmul.f32 %v3492, %v3531
        %v3565 = vmul.f32 %v3493, %v3531
        %v3566 = vmul.f32 %v3494, %v3531
        %v3567 = vmul.f32 %v3495, %v3531
        %v3568 = vmul.f32 %v3496, %v3536
        %v3569 = vmul.f32 %v3497, %v3536
        %v3570 = vmul.f32 %v3498, %v3536
        %v3571 = vmul.f32 %v3499, %v3536
        %v3572 = vmul.f32 %v3500, %v3541
        %v3573 = vmul.f32 %v3501, %v3541
        %v3574 = vmul.f32 %v3502, %v3541
        %v3575 = vmul.f32 %v3503, %v3541
        %v3576 = vmul.f32 %v3504, %v3546
        %v3577 = vmul.f32 %v3505, %v3546
        %v3578 = vmul.f32 %v3506, %v3546
        %v3579 = vmul.f32 %v3507, %v3546
        %3581 = vset.pattern.permute.xlu0 0
        %3582 = vperm.xlu0 %3581, %v3228
        %v3583 = vpop.permute.xlu0 %3582
        %3586 = vset.pattern.permute.xlu0 0
        %3587 = vperm.xlu0 %3586, %v3229
        %v3588 = vpop.permute.xlu0 %3587
        %3591 = vset.pattern.permute.xlu0 0
        %3592 = vperm.xlu0 %3591, %v3230
        %v3593 = vpop.permute.xlu0 %3592
        %3596 = vset.pattern.permute.xlu0 0
        %3597 = vperm.xlu0 %3596, %v3231
        %v3598 = vpop.permute.xlu0 %3597
        %3601 = vset.pattern.permute.xlu0 0
        %3602 = vperm.xlu0 %3601, %v3232
        %v3603 = vpop.permute.xlu0 %3602
        %3606 = vset.pattern.permute.xlu0 0
        %3607 = vperm.xlu0 %3606, %v3233
        %v3608 = vpop.permute.xlu0 %3607
        %3611 = vset.pattern.permute.xlu0 0
        %3612 = vperm.xlu0 %3611, %v3234
        %v3613 = vpop.permute.xlu0 %3612
        %3616 = vset.pattern.permute.xlu0 0
        %3617 = vperm.xlu0 %3616, %v3235
        %v3618 = vpop.permute.xlu0 %3617
        %v3620 = vadd.f32 %v3548, %v3583
        %v3621 = vadd.f32 %v3549, %v3583
        %v3622 = vadd.f32 %v3550, %v3583
        %v3623 = vadd.f32 %v3551, %v3583
        %v3624 = vadd.f32 %v3552, %v3588
        %v3625 = vadd.f32 %v3553, %v3588
        %v3626 = vadd.f32 %v3554, %v3588
        %v3627 = vadd.f32 %v3555, %v3588
        %v3628 = vadd.f32 %v3556, %v3593
        %v3629 = vadd.f32 %v3557, %v3593
        %v3630 = vadd.f32 %v3558, %v3593
        %v3631 = vadd.f32 %v3559, %v3593
        %v3632 = vadd.f32 %v3560, %v3598
        %v3633 = vadd.f32 %v3561, %v3598
        %v3634 = vadd.f32 %v3562, %v3598
        %v3635 = vadd.f32 %v3563, %v3598
        %v3636 = vadd.f32 %v3564, %v3603
        %v3637 = vadd.f32 %v3565, %v3603
        %v3638 = vadd.f32 %v3566, %v3603
        %v3639 = vadd.f32 %v3567, %v3603
        %v3640 = vadd.f32 %v3568, %v3608
        %v3641 = vadd.f32 %v3569, %v3608
        %v3642 = vadd.f32 %v3570, %v3608
        %v3643 = vadd.f32 %v3571, %v3608
        %v3644 = vadd.f32 %v3572, %v3613
        %v3645 = vadd.f32 %v3573, %v3613
        %v3646 = vadd.f32 %v3574, %v3613
        %v3647 = vadd.f32 %v3575, %v3613
        %v3648 = vadd.f32 %v3576, %v3618
        %v3649 = vadd.f32 %v3577, %v3618
        %v3650 = vadd.f32 %v3578, %v3618
        %v3651 = vadd.f32 %v3579, %v3618
        %v3652 = vadd.f32 %v3620, %v2056
        %v3653 = vadd.f32 %v3621, %v2057
        %v3654 = vadd.f32 %v3622, %v2058
        %v3655 = vadd.f32 %v3623, %v2059
        %v3656 = vadd.f32 %v3624, %v2060
        %v3657 = vadd.f32 %v3625, %v2061
        %v3658 = vadd.f32 %v3626, %v2062
        %v3659 = vadd.f32 %v3627, %v2063
        %v3660 = vadd.f32 %v3628, %v2064
        %v3661 = vadd.f32 %v3629, %v2065
        %v3662 = vadd.f32 %v3630, %v2066
        %v3663 = vadd.f32 %v3631, %v2067
        %v3664 = vadd.f32 %v3632, %v2068
        %v3665 = vadd.f32 %v3633, %v2069
        %v3666 = vadd.f32 %v3634, %v2070
        %v3667 = vadd.f32 %v3635, %v2071
        %v3668 = vadd.f32 %v3636, %v2072
        %v3669 = vadd.f32 %v3637, %v2073
        %v3670 = vadd.f32 %v3638, %v2074
        %v3671 = vadd.f32 %v3639, %v2075
        %v3672 = vadd.f32 %v3640, %v2076
        %v3673 = vadd.f32 %v3641, %v2077
        %v3674 = vadd.f32 %v3642, %v2078
        %v3675 = vadd.f32 %v3643, %v2079
        %v3676 = vadd.f32 %v3644, %v2080
        %v3677 = vadd.f32 %v3645, %v2081
        %v3678 = vadd.f32 %v3646, %v2082
        %v3679 = vadd.f32 %v3647, %v2083
        %v3680 = vadd.f32 %v3648, %v2084
        %v3681 = vadd.f32 %v3649, %v2085
        %v3682 = vadd.f32 %v3650, %v2086
        %v3683 = vadd.f32 %v3651, %v2087
        %s3684 = sld [smem:[#allocation3 + $0x81]]
        %v3685 = vmul.f32 %v3652, %v3652
        %v3686 = vmul.f32 %v3653, %v3653
        %v3687 = vmul.f32 %v3654, %v3654
        %v3688 = vmul.f32 %v3655, %v3655
        %v3689 = vmul.f32 %v3656, %v3656
        %v3690 = vmul.f32 %v3657, %v3657
        %v3691 = vmul.f32 %v3658, %v3658
        %v3692 = vmul.f32 %v3659, %v3659
        %v3693 = vmul.f32 %v3660, %v3660
        %v3694 = vmul.f32 %v3661, %v3661
        %v3695 = vmul.f32 %v3662, %v3662
        %v3696 = vmul.f32 %v3663, %v3663
        %v3697 = vmul.f32 %v3664, %v3664
        %v3698 = vmul.f32 %v3665, %v3665
        %v3699 = vmul.f32 %v3666, %v3666
        %v3700 = vmul.f32 %v3667, %v3667
        %v3701 = vmul.f32 %v3668, %v3668
        %v3702 = vmul.f32 %v3669, %v3669
        %v3703 = vmul.f32 %v3670, %v3670
        %v3704 = vmul.f32 %v3671, %v3671
        %v3705 = vmul.f32 %v3672, %v3672
        %v3706 = vmul.f32 %v3673, %v3673
        %v3707 = vmul.f32 %v3674, %v3674
        %v3708 = vmul.f32 %v3675, %v3675
        %v3709 = vmul.f32 %v3676, %v3676
        %v3710 = vmul.f32 %v3677, %v3677
        %v3711 = vmul.f32 %v3678, %v3678
        %v3712 = vmul.f32 %v3679, %v3679
        %v3713 = vmul.f32 %v3680, %v3680
        %v3714 = vmul.f32 %v3681, %v3681
        %v3715 = vmul.f32 %v3682, %v3682
        %v3716 = vmul.f32 %v3683, %v3683
        %v3717 = vadd.f32 %v3685, %v3701
        %v3718 = vadd.f32 %v3686, %v3702
        %v3719 = vadd.f32 %v3687, %v3703
        %v3720 = vadd.f32 %v3688, %v3704
        %v3721 = vadd.f32 %v3689, %v3705
        %v3722 = vadd.f32 %v3690, %v3706
        %v3723 = vadd.f32 %v3691, %v3707
        %v3724 = vadd.f32 %v3692, %v3708
        %v3725 = vadd.f32 %v3693, %v3709
        %v3726 = vadd.f32 %v3694, %v3710
        %v3727 = vadd.f32 %v3695, %v3711
        %v3728 = vadd.f32 %v3696, %v3712
        %v3729 = vadd.f32 %v3697, %v3713
        %v3730 = vadd.f32 %v3698, %v3714
        %v3731 = vadd.f32 %v3699, %v3715
        %v3732 = vadd.f32 %v3700, %v3716
        %v3733 = vadd.f32 %v3717, 1e-30
        %v3734 = vadd.f32 %v3718, 1e-30
        %v3735 = vadd.f32 %v3719, 1e-30
        %v3736 = vadd.f32 %v3720, 1e-30
        %v3737 = vadd.f32 %v3721, 1e-30
        %v3738 = vadd.f32 %v3722, 1e-30
        %v3739 = vadd.f32 %v3723, 1e-30
        %v3740 = vadd.f32 %v3724, 1e-30
        %v3741 = vadd.f32 %v3725, 1e-30
        %v3742 = vadd.f32 %v3726, 1e-30
        %v3743 = vadd.f32 %v3727, 1e-30
        %v3744 = vadd.f32 %v3728, 1e-30
        %v3745 = vadd.f32 %v3729, 1e-30
        %v3746 = vadd.f32 %v3730, 1e-30
        %v3747 = vadd.f32 %v3731, 1e-30
        %v3748 = vadd.f32 %v3732, 1e-30
        %v3749 = vrsqrt.pop %v3733
        %v3750 = vrsqrt.pop %v3734
        %v3751 = vrsqrt.pop %v3735
        %v3752 = vrsqrt.pop %v3736
        %v3753 = vrsqrt.pop %v3737
        %v3754 = vrsqrt.pop %v3738
        %v3755 = vrsqrt.pop %v3739
        %v3756 = vrsqrt.pop %v3740
        %v3757 = vrsqrt.pop %v3741
        %v3758 = vrsqrt.pop %v3742
        %v3759 = vrsqrt.pop %v3743
        %v3760 = vrsqrt.pop %v3744
        %v3761 = vrsqrt.pop %v3745
        %v3762 = vrsqrt.pop %v3746
        %v3763 = vrsqrt.pop %v3747
        %v3764 = vrsqrt.pop %v3748
        %v3765 = vmul.f32 %v3717, %v3749
        %v3766 = vmul.f32 %v3718, %v3750
        %v3767 = vmul.f32 %v3719, %v3751
        %v3768 = vmul.f32 %v3720, %v3752
        %v3769 = vmul.f32 %v3721, %v3753
        %v3770 = vmul.f32 %v3722, %v3754
        %v3771 = vmul.f32 %v3723, %v3755
        %v3772 = vmul.f32 %v3724, %v3756
        %v3773 = vmul.f32 %v3725, %v3757
        %v3774 = vmul.f32 %v3726, %v3758
        %v3775 = vmul.f32 %v3727, %v3759
        %v3776 = vmul.f32 %v3728, %v3760
        %v3777 = vmul.f32 %v3729, %v3761
        %v3778 = vmul.f32 %v3730, %v3762
        %v3779 = vmul.f32 %v3731, %v3763
        %v3780 = vmul.f32 %v3732, %v3764
        %v3781 = vstv %s3684
        %v3782 = vsub.f32 %v3765, %v3781
        %v3783 = vsub.f32 %v3766, %v3781
        %v3784 = vsub.f32 %v3767, %v3781
        %v3785 = vsub.f32 %v3768, %v3781
        %v3786 = vsub.f32 %v3769, %v3781
        %v3787 = vsub.f32 %v3770, %v3781
        %v3788 = vsub.f32 %v3771, %v3781
        %v3789 = vsub.f32 %v3772, %v3781
        %v3790 = vsub.f32 %v3773, %v3781
        %v3791 = vsub.f32 %v3774, %v3781
        %v3792 = vsub.f32 %v3775, %v3781
        %v3793 = vsub.f32 %v3776, %v3781
        %v3794 = vsub.f32 %v3777, %v3781
        %v3795 = vsub.f32 %v3778, %v3781
        %v3796 = vsub.f32 %v3779, %v3781
        %v3797 = vsub.f32 %v3780, %v3781
        %v3798 = vmax.f32 %v3782, 0.0
        %v3799 = vmax.f32 %v3783, 0.0
        %v3800 = vmax.f32 %v3784, 0.0
        %v3801 = vmax.f32 %v3785, 0.0
        %v3802 = vmax.f32 %v3786, 0.0
        %v3803 = vmax.f32 %v3787, 0.0
        %v3804 = vmax.f32 %v3788, 0.0
        %v3805 = vmax.f32 %v3789, 0.0
        %v3806 = vmax.f32 %v3790, 0.0
        %v3807 = vmax.f32 %v3791, 0.0
        %v3808 = vmax.f32 %v3792, 0.0
        %v3809 = vmax.f32 %v3793, 0.0
        %v3810 = vmax.f32 %v3794, 0.0
        %v3811 = vmax.f32 %v3795, 0.0
        %v3812 = vmax.f32 %v3796, 0.0
        %v3813 = vmax.f32 %v3797, 0.0
        %v3814 = vmul.f32 %v3798, %v3749
        %v3815 = vmul.f32 %v3799, %v3750
        %v3816 = vmul.f32 %v3800, %v3751
        %v3817 = vmul.f32 %v3801, %v3752
        %v3818 = vmul.f32 %v3802, %v3753
        %v3819 = vmul.f32 %v3803, %v3754
        %v3820 = vmul.f32 %v3804, %v3755
        %v3821 = vmul.f32 %v3805, %v3756
        %v3822 = vmul.f32 %v3806, %v3757
        %v3823 = vmul.f32 %v3807, %v3758
        %v3824 = vmul.f32 %v3808, %v3759
        %v3825 = vmul.f32 %v3809, %v3760
        %v3826 = vmul.f32 %v3810, %v3761
        %v3827 = vmul.f32 %v3811, %v3762
        %v3828 = vmul.f32 %v3812, %v3763
        %v3829 = vmul.f32 %v3813, %v3764
        %v3830 = vmul.f32 %v3652, %v3814
        %v3831 = vmul.f32 %v3653, %v3815
        %v3832 = vmul.f32 %v3654, %v3816
        %v3833 = vmul.f32 %v3655, %v3817
        %v3834 = vmul.f32 %v3656, %v3818
        %v3835 = vmul.f32 %v3657, %v3819
        %v3836 = vmul.f32 %v3658, %v3820
        %v3837 = vmul.f32 %v3659, %v3821
        %v3838 = vmul.f32 %v3660, %v3822
        %v3839 = vmul.f32 %v3661, %v3823
        %v3840 = vmul.f32 %v3662, %v3824
        %v3841 = vmul.f32 %v3663, %v3825
        %v3842 = vmul.f32 %v3664, %v3826
        %v3843 = vmul.f32 %v3665, %v3827
        %v3844 = vmul.f32 %v3666, %v3828
        %v3845 = vmul.f32 %v3667, %v3829
        %v3846 = vmul.f32 %v3668, %v3814
        %v3847 = vmul.f32 %v3669, %v3815
        %v3848 = vmul.f32 %v3670, %v3816
        %v3849 = vmul.f32 %v3671, %v3817
        %v3850 = vmul.f32 %v3672, %v3818
        %v3851 = vmul.f32 %v3673, %v3819
        %v3852 = vmul.f32 %v3674, %v3820
        %v3853 = vmul.f32 %v3675, %v3821
        %v3854 = vmul.f32 %v3676, %v3822
        %v3855 = vmul.f32 %v3677, %v3823
        %v3856 = vmul.f32 %v3678, %v3824
        %v3857 = vmul.f32 %v3679, %v3825
        %v3858 = vmul.f32 %v3680, %v3826
        %v3859 = vmul.f32 %v3681, %v3827
        %v3860 = vmul.f32 %v3682, %v3828
        %v3861 = vmul.f32 %v3683, %v3829
        %s3862 = scalar_lea.vmem %s2, 256
        %v3863 = vld [vmem:[%s3862] sm:$0xff]
        %v3864 = vld [vmem:[%s3862 + $0x8] sm:$0xff]
        %v3865 = vld [vmem:[%s3862 + $0x10] sm:$0xff]
        %v3866 = vld [vmem:[%s3862 + $0x18] sm:$0xff]
        %v3867 = vld [vmem:[%s3862 + $0x20] sm:$0xff]
        %v3868 = vld [vmem:[%s3862 + $0x28] sm:$0xff]
        %v3869 = vld [vmem:[%s3862 + $0x30] sm:$0xff]
        %v3870 = vld [vmem:[%s3862 + $0x38] sm:$0xff]
        %v3872 = vsel %vm323, %v3863, 0
        %v3875 = vsel %vm323, %v3864, 0
        %v3878 = vsel %vm323, %v3865, 0
        %v3881 = vsel %vm323, %v3866, 0
        %v3884 = vsel %vm323, %v3867, 0
        %v3887 = vsel %vm323, %v3868, 0
        %v3890 = vsel %vm323, %v3869, 0
        %v3893 = vsel %vm323, %v3870, 0
        %3895 = vmatprep.subr.mxu0 0.0
        %3896 = vmatpush1.msra.mxu0 0.0
        %3897 = vmatprep.subr.mxu0 0.0
        %3898 = vmatpush1.msra.mxu0 0.0
        %3899 = vmatprep.subr.mxu0 0.0
        %3900 = vmatpush1.msra.mxu0 0.0
        %3901 = vmatprep.subr.mxu0 0.0
        %3902 = vmatpush1.msra.mxu0 0.0
        %3903 = vmatprep.subr.mxu0 0.0
        %3904 = vmatpush1.msra.mxu0 0.0
        %3905 = vmatprep.subr.mxu0 0.0
        %3906 = vmatpush1.msra.mxu0 0.0
        %3907 = vmatprep.subr.mxu0 0.0
        %3908 = vmatpush1.msra.mxu0 0.0
        %3909 = vmatprep.subr.mxu0 0.0
        %3910 = vmatpush1.msra.mxu0 0.0
        %3911 = vmatprep.subr.mxu0 %v3859
        %3912 = vmatpush1.msra.mxu0 %v3858
        %3913 = vmatprep.subr.mxu0 %v3855
        %3914 = vmatpush1.msra.mxu0 %v3854
        %3915 = vmatprep.subr.mxu0 %v3851
        %3916 = vmatpush1.msra.mxu0 %v3850
        %3917 = vmatprep.subr.mxu0 %v3847
        %3918 = vmatpush1.msra.mxu0 %v3846
        %3919 = vmatprep.subr.mxu0 %v3843
        %3920 = vmatpush1.msra.mxu0 %v3842
        %3921 = vmatprep.subr.mxu0 %v3839
        %3922 = vmatpush1.msra.mxu0 %v3838
        %3923 = vmatprep.subr.mxu0 %v3835
        %3924 = vmatpush1.msra.mxu0 %v3834
        %3925 = vmatprep.subr.mxu0 %v3831
        %3926 = vmatpush1.msra.mxu0 %v3830
        %3927 = vmatprep.subr.mxu0 0.0
        %3928 = vmatpush2.msra.mxu0 0.0
        %3929 = vmatprep.subr.mxu0 0.0
        %3930 = vmatpush2.msra.mxu0 0.0
        %3931 = vmatprep.subr.mxu0 0.0
        %3932 = vmatpush2.msra.mxu0 0.0
        %3933 = vmatprep.subr.mxu0 0.0
        %3934 = vmatpush2.msra.mxu0 0.0
        %3935 = vmatprep.subr.mxu0 0.0
        %3936 = vmatpush2.msra.mxu0 0.0
        %3937 = vmatprep.subr.mxu0 0.0
        %3938 = vmatpush2.msra.mxu0 0.0
        %3939 = vmatprep.subr.mxu0 0.0
        %3940 = vmatpush2.msra.mxu0 0.0
        %3941 = vmatprep.subr.mxu0 0.0
        %3942 = vmatpush2.msra.mxu0 0.0
        %3943 = vmatprep.subr.mxu0 0.0
        %3944 = vmatpush2.msra.mxu0 0.0
        %3945 = vmatprep.subr.mxu0 0.0
        %3946 = vmatpush2.msra.mxu0 0.0
        %3947 = vmatprep.subr.mxu0 0.0
        %3948 = vmatpush2.msra.mxu0 0.0
        %3949 = vmatprep.subr.mxu0 0.0
        %3950 = vmatpush2.msra.mxu0 0.0
        %3951 = vmatprep.subr.mxu0 0.0
        %3952 = vmatpush2.msra.mxu0 0.0
        %3953 = vmatprep.subr.mxu0 0.0
        %3954 = vmatpush2.msra.mxu0 0.0
        %3955 = vmatprep.subr.mxu0 0.0
        %3956 = vmatpush2.msra.mxu0 0.0
        %3957 = vmatprep.subr.mxu0 0.0
        %3958 = vmatpush2.msra.mxu0 0.0
        %3959 = vmatprep.mubr.f32.mxu0 0.0
        %3960 = vmatmul.mubr.f32.gmra.mxu0 %v3872
        %v3961 = vpop.f32.mrf.mxu0
        %v3962 = vadd.f32 0.0, %v3961
        %v3963 = vpop.f32.mrf.mxu0
        %v3964 = vadd.f32 0.0, %v3963
        %3965 = vmatprep.mubr.f32.mxu0 0.0
        %3966 = vmatmul.mubr.f32.gmra.mxu0 %v3875
        %v3967 = vpop.f32.mrf.mxu0
        %v3968 = vadd.f32 0.0, %v3967
        %v3969 = vpop.f32.mrf.mxu0
        %v3970 = vadd.f32 0.0, %v3969
        %3971 = vmatprep.mubr.f32.mxu0 0.0
        %3972 = vmatmul.mubr.f32.gmra.mxu0 %v3878
        %v3973 = vpop.f32.mrf.mxu0
        %v3974 = vadd.f32 0.0, %v3973
        %v3975 = vpop.f32.mrf.mxu0
        %v3976 = vadd.f32 0.0, %v3975
        %3977 = vmatprep.mubr.f32.mxu0 0.0
        %3978 = vmatmul.mubr.f32.gmra.mxu0 %v3881
        %v3979 = vpop.f32.mrf.mxu0
        %v3980 = vadd.f32 0.0, %v3979
        %v3981 = vpop.f32.mrf.mxu0
        %v3982 = vadd.f32 0.0, %v3981
        %3983 = vmatprep.mubr.f32.mxu0 0.0
        %3984 = vmatmul.mubr.f32.gmra.mxu0 %v3884
        %v3985 = vpop.f32.mrf.mxu0
        %v3986 = vadd.f32 0.0, %v3985
        %v3987 = vpop.f32.mrf.mxu0
        %v3988 = vadd.f32 0.0, %v3987
        %3989 = vmatprep.mubr.f32.mxu0 0.0
        %3990 = vmatmul.mubr.f32.gmra.mxu0 %v3887
        %v3991 = vpop.f32.mrf.mxu0
        %v3992 = vadd.f32 0.0, %v3991
        %v3993 = vpop.f32.mrf.mxu0
        %v3994 = vadd.f32 0.0, %v3993
        %3995 = vmatprep.mubr.f32.mxu0 0.0
        %3996 = vmatmul.mubr.f32.gmra.mxu0 %v3890
        %v3997 = vpop.f32.mrf.mxu0
        %v3998 = vadd.f32 0.0, %v3997
        %v3999 = vpop.f32.mrf.mxu0
        %v4000 = vadd.f32 0.0, %v3999
        %4001 = vmatprep.mubr.f32.mxu0 0.0
        %4002 = vmatmul.mubr.f32.gmra.mxu0 %v3893
        %v4003 = vpop.f32.mrf.mxu0
        %v4004 = vadd.f32 0.0, %v4003
        %v4005 = vpop.f32.mrf.mxu0
        %v4006 = vadd.f32 0.0, %v4005
        %4007 = vdwg.mxu0
        %4008 = vmatprep.subr.mxu0 0.0
        %4009 = vmatpush1.msra.mxu0 0.0
        %4010 = vmatprep.subr.mxu0 0.0
        %4011 = vmatpush1.msra.mxu0 0.0
        %4012 = vmatprep.subr.mxu0 0.0
        %4013 = vmatpush1.msra.mxu0 0.0
        %4014 = vmatprep.subr.mxu0 0.0
        %4015 = vmatpush1.msra.mxu0 0.0
        %4016 = vmatprep.subr.mxu0 0.0
        %4017 = vmatpush1.msra.mxu0 0.0
        %4018 = vmatprep.subr.mxu0 0.0
        %4019 = vmatpush1.msra.mxu0 0.0
        %4020 = vmatprep.subr.mxu0 0.0
        %4021 = vmatpush1.msra.mxu0 0.0
        %4022 = vmatprep.subr.mxu0 0.0
        %4023 = vmatpush1.msra.mxu0 0.0
        %4024 = vmatprep.subr.mxu0 %v3861
        %4025 = vmatpush1.msra.mxu0 %v3860
        %4026 = vmatprep.subr.mxu0 %v3857
        %4027 = vmatpush1.msra.mxu0 %v3856
        %4028 = vmatprep.subr.mxu0 %v3853
        %4029 = vmatpush1.msra.mxu0 %v3852
        %4030 = vmatprep.subr.mxu0 %v3849
        %4031 = vmatpush1.msra.mxu0 %v3848
        %4032 = vmatprep.subr.mxu0 %v3845
        %4033 = vmatpush1.msra.mxu0 %v3844
        %4034 = vmatprep.subr.mxu0 %v3841
        %4035 = vmatpush1.msra.mxu0 %v3840
        %4036 = vmatprep.subr.mxu0 %v3837
        %4037 = vmatpush1.msra.mxu0 %v3836
        %4038 = vmatprep.subr.mxu0 %v3833
        %4039 = vmatpush1.msra.mxu0 %v3832
        %4040 = vmatprep.subr.mxu0 0.0
        %4041 = vmatpush2.msra.mxu0 0.0
        %4042 = vmatprep.subr.mxu0 0.0
        %4043 = vmatpush2.msra.mxu0 0.0
        %4044 = vmatprep.subr.mxu0 0.0
        %4045 = vmatpush2.msra.mxu0 0.0
        %4046 = vmatprep.subr.mxu0 0.0
        %4047 = vmatpush2.msra.mxu0 0.0
        %4048 = vmatprep.subr.mxu0 0.0
        %4049 = vmatpush2.msra.mxu0 0.0
        %4050 = vmatprep.subr.mxu0 0.0
        %4051 = vmatpush2.msra.mxu0 0.0
        %4052 = vmatprep.subr.mxu0 0.0
        %4053 = vmatpush2.msra.mxu0 0.0
        %4054 = vmatprep.subr.mxu0 0.0
        %4055 = vmatpush2.msra.mxu0 0.0
        %4056 = vmatprep.subr.mxu0 0.0
        %4057 = vmatpush2.msra.mxu0 0.0
        %4058 = vmatprep.subr.mxu0 0.0
        %4059 = vmatpush2.msra.mxu0 0.0
        %4060 = vmatprep.subr.mxu0 0.0
        %4061 = vmatpush2.msra.mxu0 0.0
        %4062 = vmatprep.subr.mxu0 0.0
        %4063 = vmatpush2.msra.mxu0 0.0
        %4064 = vmatprep.subr.mxu0 0.0
        %4065 = vmatpush2.msra.mxu0 0.0
        %4066 = vmatprep.subr.mxu0 0.0
        %4067 = vmatpush2.msra.mxu0 0.0
        %4068 = vmatprep.subr.mxu0 0.0
        %4069 = vmatpush2.msra.mxu0 0.0
        %4070 = vmatprep.subr.mxu0 0.0
        %4071 = vmatpush2.msra.mxu0 0.0
        %4072 = vmatprep.mubr.f32.mxu0 0.0
        %4073 = vmatmul.mubr.f32.gmra.mxu0 %v3872
        %v4074 = vpop.f32.mrf.mxu0
        %v4075 = vadd.f32 0.0, %v4074
        %v4076 = vpop.f32.mrf.mxu0
        %v4077 = vadd.f32 0.0, %v4076
        %4078 = vmatprep.mubr.f32.mxu0 0.0
        %4079 = vmatmul.mubr.f32.gmra.mxu0 %v3875
        %v4080 = vpop.f32.mrf.mxu0
        %v4081 = vadd.f32 0.0, %v4080
        %v4082 = vpop.f32.mrf.mxu0
        %v4083 = vadd.f32 0.0, %v4082
        %4084 = vmatprep.mubr.f32.mxu0 0.0
        %4085 = vmatmul.mubr.f32.gmra.mxu0 %v3878
        %v4086 = vpop.f32.mrf.mxu0
        %v4087 = vadd.f32 0.0, %v4086
        %v4088 = vpop.f32.mrf.mxu0
        %v4089 = vadd.f32 0.0, %v4088
        %4090 = vmatprep.mubr.f32.mxu0 0.0
        %4091 = vmatmul.mubr.f32.gmra.mxu0 %v3881
        %v4092 = vpop.f32.mrf.mxu0
        %v4093 = vadd.f32 0.0, %v4092
        %v4094 = vpop.f32.mrf.mxu0
        %v4095 = vadd.f32 0.0, %v4094
        %4096 = vmatprep.mubr.f32.mxu0 0.0
        %4097 = vmatmul.mubr.f32.gmra.mxu0 %v3884
        %v4098 = vpop.f32.mrf.mxu0
        %v4099 = vadd.f32 0.0, %v4098
        %v4100 = vpop.f32.mrf.mxu0
        %v4101 = vadd.f32 0.0, %v4100
        %4102 = vmatprep.mubr.f32.mxu0 0.0
        %4103 = vmatmul.mubr.f32.gmra.mxu0 %v3887
        %v4104 = vpop.f32.mrf.mxu0
        %v4105 = vadd.f32 0.0, %v4104
        %v4106 = vpop.f32.mrf.mxu0
        %v4107 = vadd.f32 0.0, %v4106
        %4108 = vmatprep.mubr.f32.mxu0 0.0
        %4109 = vmatmul.mubr.f32.gmra.mxu0 %v3890
        %v4110 = vpop.f32.mrf.mxu0
        %v4111 = vadd.f32 0.0, %v4110
        %v4112 = vpop.f32.mrf.mxu0
        %v4113 = vadd.f32 0.0, %v4112
        %4114 = vmatprep.mubr.f32.mxu0 0.0
        %4115 = vmatmul.mubr.f32.gmra.mxu0 %v3893
        %v4116 = vpop.f32.mrf.mxu0
        %v4117 = vadd.f32 0.0, %v4116
        %v4118 = vpop.f32.mrf.mxu0
        %v4119 = vadd.f32 0.0, %v4118
        %4120 = vdwg.mxu0
        %s4121 = scalar_lea.vmem %s3, 256
        %v4122 = vld [vmem:[%s4121] sm:$0xff]
        %v4123 = vld [vmem:[%s4121 + $0x8] sm:$0xff]
        %v4124 = vld [vmem:[%s4121 + $0x10] sm:$0xff]
        %v4125 = vld [vmem:[%s4121 + $0x18] sm:$0xff]
        %v4126 = vld [vmem:[%s4121 + $0x20] sm:$0xff]
        %v4127 = vld [vmem:[%s4121 + $0x28] sm:$0xff]
        %v4128 = vld [vmem:[%s4121 + $0x30] sm:$0xff]
        %v4129 = vld [vmem:[%s4121 + $0x38] sm:$0xff]
        %s4130 = scalar_lea.vmem %s4, 256
        %v4131 = vld [vmem:[%s4130] sm:$0xff]
        %v4132 = vld [vmem:[%s4130 + $0x8] sm:$0xff]
        %v4133 = vld [vmem:[%s4130 + $0x10] sm:$0xff]
        %v4134 = vld [vmem:[%s4130 + $0x18] sm:$0xff]
        %v4135 = vld [vmem:[%s4130 + $0x20] sm:$0xff]
        %v4136 = vld [vmem:[%s4130 + $0x28] sm:$0xff]
        %v4137 = vld [vmem:[%s4130 + $0x30] sm:$0xff]
        %v4138 = vld [vmem:[%s4130 + $0x38] sm:$0xff]
        %v4139 = vadd.f32 %v3962, %v3968
        %v4140 = vadd.f32 %v4139, %v3974
        %v4141 = vadd.f32 %v4140, %v3980
        %v4142 = vrot.slane %v4141, 4
        %v4143 = vadd.f32 %v4141, %v4142
        %v4144 = vrot.slane %v4143, 2
        %v4145 = vadd.f32 %v4143, %v4144
        %v4146 = vrot.slane %v4145, 1
        %v4147 = vadd.f32 %v4145, %v4146
        %v4148 = vadd.f32 %v3964, %v3970
        %v4149 = vadd.f32 %v4148, %v3976
        %v4150 = vadd.f32 %v4149, %v3982
        %v4151 = vrot.slane %v4150, 4
        %v4152 = vadd.f32 %v4150, %v4151
        %v4153 = vrot.slane %v4152, 2
        %v4154 = vadd.f32 %v4152, %v4153
        %v4155 = vrot.slane %v4154, 1
        %v4156 = vadd.f32 %v4154, %v4155
        %v4157 = vadd.f32 %v4075, %v4081
        %v4158 = vadd.f32 %v4157, %v4087
        %v4159 = vadd.f32 %v4158, %v4093
        %v4160 = vrot.slane %v4159, 4
        %v4161 = vadd.f32 %v4159, %v4160
        %v4162 = vrot.slane %v4161, 2
        %v4163 = vadd.f32 %v4161, %v4162
        %v4164 = vrot.slane %v4163, 1
        %v4165 = vadd.f32 %v4163, %v4164
        %v4166 = vadd.f32 %v4077, %v4083
        %v4167 = vadd.f32 %v4166, %v4089
        %v4168 = vadd.f32 %v4167, %v4095
        %v4169 = vrot.slane %v4168, 4
        %v4170 = vadd.f32 %v4168, %v4169
        %v4171 = vrot.slane %v4170, 2
        %v4172 = vadd.f32 %v4170, %v4171
        %v4173 = vrot.slane %v4172, 1
        %v4174 = vadd.f32 %v4172, %v4173
        %v4175 = vmul.f32 %v4147, %v626
        %v4176 = vmul.f32 %v4156, %v626
        %v4177 = vmul.f32 %v4165, %v626
        %v4178 = vmul.f32 %v4174, %v626
        %v4179 = vsub.f32 %v3962, %v4175
        %v4180 = vsub.f32 %v3964, %v4176
        %v4181 = vsub.f32 %v4075, %v4177
        %v4182 = vsub.f32 %v4077, %v4178
        %v4183 = vsub.f32 %v3968, %v4175
        %v4184 = vsub.f32 %v3970, %v4176
        %v4185 = vsub.f32 %v4081, %v4177
        %v4186 = vsub.f32 %v4083, %v4178
        %v4187 = vsub.f32 %v3974, %v4175
        %v4188 = vsub.f32 %v3976, %v4176
        %v4189 = vsub.f32 %v4087, %v4177
        %v4190 = vsub.f32 %v4089, %v4178
        %v4191 = vsub.f32 %v3980, %v4175
        %v4192 = vsub.f32 %v3982, %v4176
        %v4193 = vsub.f32 %v4093, %v4177
        %v4194 = vsub.f32 %v4095, %v4178
        %v4195 = vmul.f32 %v4179, %v4179
        %v4196 = vmul.f32 %v4180, %v4180
        %v4197 = vmul.f32 %v4181, %v4181
        %v4198 = vmul.f32 %v4182, %v4182
        %v4199 = vmul.f32 %v4183, %v4183
        %v4200 = vmul.f32 %v4184, %v4184
        %v4201 = vmul.f32 %v4185, %v4185
        %v4202 = vmul.f32 %v4186, %v4186
        %v4203 = vmul.f32 %v4187, %v4187
        %v4204 = vmul.f32 %v4188, %v4188
        %v4205 = vmul.f32 %v4189, %v4189
        %v4206 = vmul.f32 %v4190, %v4190
        %v4207 = vmul.f32 %v4191, %v4191
        %v4208 = vmul.f32 %v4192, %v4192
        %v4209 = vmul.f32 %v4193, %v4193
        %v4210 = vmul.f32 %v4194, %v4194
        %v4211 = vadd.f32 %v4195, %v4199
        %v4212 = vadd.f32 %v4211, %v4203
        %v4213 = vadd.f32 %v4212, %v4207
        %v4214 = vrot.slane %v4213, 4
        %v4215 = vadd.f32 %v4213, %v4214
        %v4216 = vrot.slane %v4215, 2
        %v4217 = vadd.f32 %v4215, %v4216
        %v4218 = vrot.slane %v4217, 1
        %v4219 = vadd.f32 %v4217, %v4218
        %v4220 = vadd.f32 %v4196, %v4200
        %v4221 = vadd.f32 %v4220, %v4204
        %v4222 = vadd.f32 %v4221, %v4208
        %v4223 = vrot.slane %v4222, 4
        %v4224 = vadd.f32 %v4222, %v4223
        %v4225 = vrot.slane %v4224, 2
        %v4226 = vadd.f32 %v4224, %v4225
        %v4227 = vrot.slane %v4226, 1
        %v4228 = vadd.f32 %v4226, %v4227
        %v4229 = vadd.f32 %v4197, %v4201
        %v4230 = vadd.f32 %v4229, %v4205
        %v4231 = vadd.f32 %v4230, %v4209
        %v4232 = vrot.slane %v4231, 4
        %v4233 = vadd.f32 %v4231, %v4232
        %v4234 = vrot.slane %v4233, 2
        %v4235 = vadd.f32 %v4233, %v4234
        %v4236 = vrot.slane %v4235, 1
        %v4237 = vadd.f32 %v4235, %v4236
        %v4238 = vadd.f32 %v4198, %v4202
        %v4239 = vadd.f32 %v4238, %v4206
        %v4240 = vadd.f32 %v4239, %v4210
        %v4241 = vrot.slane %v4240, 4
        %v4242 = vadd.f32 %v4240, %v4241
        %v4243 = vrot.slane %v4242, 2
        %v4244 = vadd.f32 %v4242, %v4243
        %v4245 = vrot.slane %v4244, 1
        %v4246 = vadd.f32 %v4244, %v4245
        %v4247 = vmul.f32 %v4219, %v626
        %v4248 = vmul.f32 %v4228, %v626
        %v4249 = vmul.f32 %v4237, %v626
        %v4250 = vmul.f32 %v4246, %v626
        %v4251 = vadd.f32 %v4247, 1e-05
        %v4252 = vadd.f32 %v4248, 1e-05
        %v4253 = vadd.f32 %v4249, 1e-05
        %v4254 = vadd.f32 %v4250, 1e-05
        %v4255 = vrsqrt.pop %v4251
        %v4256 = vrsqrt.pop %v4252
        %v4257 = vrsqrt.pop %v4253
        %v4258 = vrsqrt.pop %v4254
        %v4259 = vmul.f32 %v4179, %v4255
        %v4260 = vmul.f32 %v4180, %v4256
        %v4261 = vmul.f32 %v4181, %v4257
        %v4262 = vmul.f32 %v4182, %v4258
        %v4263 = vmul.f32 %v4183, %v4255
        %v4264 = vmul.f32 %v4184, %v4256
        %v4265 = vmul.f32 %v4185, %v4257
        %v4266 = vmul.f32 %v4186, %v4258
        %v4267 = vmul.f32 %v4187, %v4255
        %v4268 = vmul.f32 %v4188, %v4256
        %v4269 = vmul.f32 %v4189, %v4257
        %v4270 = vmul.f32 %v4190, %v4258
        %v4271 = vmul.f32 %v4191, %v4255
        %v4272 = vmul.f32 %v4192, %v4256
        %v4273 = vmul.f32 %v4193, %v4257
        %v4274 = vmul.f32 %v4194, %v4258
        %v4275 = vadd.f32 %v3986, %v3992
        %v4276 = vadd.f32 %v4275, %v3998
        %v4277 = vadd.f32 %v4276, %v4004
        %v4278 = vrot.slane %v4277, 4
        %v4279 = vadd.f32 %v4277, %v4278
        %v4280 = vrot.slane %v4279, 2
        %v4281 = vadd.f32 %v4279, %v4280
        %v4282 = vrot.slane %v4281, 1
        %v4283 = vadd.f32 %v4281, %v4282
        %v4284 = vadd.f32 %v3988, %v3994
        %v4285 = vadd.f32 %v4284, %v4000
        %v4286 = vadd.f32 %v4285, %v4006
        %v4287 = vrot.slane %v4286, 4
        %v4288 = vadd.f32 %v4286, %v4287
        %v4289 = vrot.slane %v4288, 2
        %v4290 = vadd.f32 %v4288, %v4289
        %v4291 = vrot.slane %v4290, 1
        %v4292 = vadd.f32 %v4290, %v4291
        %v4293 = vadd.f32 %v4099, %v4105
        %v4294 = vadd.f32 %v4293, %v4111
        %v4295 = vadd.f32 %v4294, %v4117
        %v4296 = vrot.slane %v4295, 4
        %v4297 = vadd.f32 %v4295, %v4296
        %v4298 = vrot.slane %v4297, 2
        %v4299 = vadd.f32 %v4297, %v4298
        %v4300 = vrot.slane %v4299, 1
        %v4301 = vadd.f32 %v4299, %v4300
        %v4302 = vadd.f32 %v4101, %v4107
        %v4303 = vadd.f32 %v4302, %v4113
        %v4304 = vadd.f32 %v4303, %v4119
        %v4305 = vrot.slane %v4304, 4
        %v4306 = vadd.f32 %v4304, %v4305
        %v4307 = vrot.slane %v4306, 2
        %v4308 = vadd.f32 %v4306, %v4307
        %v4309 = vrot.slane %v4308, 1
        %v4310 = vadd.f32 %v4308, %v4309
        %v4311 = vmul.f32 %v4283, %v626
        %v4312 = vmul.f32 %v4292, %v626
        %v4313 = vmul.f32 %v4301, %v626
        %v4314 = vmul.f32 %v4310, %v626
        %v4315 = vsub.f32 %v3986, %v4311
        %v4316 = vsub.f32 %v3988, %v4312
        %v4317 = vsub.f32 %v4099, %v4313
        %v4318 = vsub.f32 %v4101, %v4314
        %v4319 = vsub.f32 %v3992, %v4311
        %v4320 = vsub.f32 %v3994, %v4312
        %v4321 = vsub.f32 %v4105, %v4313
        %v4322 = vsub.f32 %v4107, %v4314
        %v4323 = vsub.f32 %v3998, %v4311
        %v4324 = vsub.f32 %v4000, %v4312
        %v4325 = vsub.f32 %v4111, %v4313
        %v4326 = vsub.f32 %v4113, %v4314
        %v4327 = vsub.f32 %v4004, %v4311
        %v4328 = vsub.f32 %v4006, %v4312
        %v4329 = vsub.f32 %v4117, %v4313
        %v4330 = vsub.f32 %v4119, %v4314
        %v4331 = vmul.f32 %v4315, %v4315
        %v4332 = vmul.f32 %v4316, %v4316
        %v4333 = vmul.f32 %v4317, %v4317
        %v4334 = vmul.f32 %v4318, %v4318
        %v4335 = vmul.f32 %v4319, %v4319
        %v4336 = vmul.f32 %v4320, %v4320
        %v4337 = vmul.f32 %v4321, %v4321
        %v4338 = vmul.f32 %v4322, %v4322
        %v4339 = vmul.f32 %v4323, %v4323
        %v4340 = vmul.f32 %v4324, %v4324
        %v4341 = vmul.f32 %v4325, %v4325
        %v4342 = vmul.f32 %v4326, %v4326
        %v4343 = vmul.f32 %v4327, %v4327
        %v4344 = vmul.f32 %v4328, %v4328
        %v4345 = vmul.f32 %v4329, %v4329
        %v4346 = vmul.f32 %v4330, %v4330
        %v4347 = vadd.f32 %v4331, %v4335
        %v4348 = vadd.f32 %v4347, %v4339
        %v4349 = vadd.f32 %v4348, %v4343
        %v4350 = vrot.slane %v4349, 4
        %v4351 = vadd.f32 %v4349, %v4350
        %v4352 = vrot.slane %v4351, 2
        %v4353 = vadd.f32 %v4351, %v4352
        %v4354 = vrot.slane %v4353, 1
        %v4355 = vadd.f32 %v4353, %v4354
        %v4356 = vadd.f32 %v4332, %v4336
        %v4357 = vadd.f32 %v4356, %v4340
        %v4358 = vadd.f32 %v4357, %v4344
        %v4359 = vrot.slane %v4358, 4
        %v4360 = vadd.f32 %v4358, %v4359
        %v4361 = vrot.slane %v4360, 2
        %v4362 = vadd.f32 %v4360, %v4361
        %v4363 = vrot.slane %v4362, 1
        %v4364 = vadd.f32 %v4362, %v4363
        %v4365 = vadd.f32 %v4333, %v4337
        %v4366 = vadd.f32 %v4365, %v4341
        %v4367 = vadd.f32 %v4366, %v4345
        %v4368 = vrot.slane %v4367, 4
        %v4369 = vadd.f32 %v4367, %v4368
        %v4370 = vrot.slane %v4369, 2
        %v4371 = vadd.f32 %v4369, %v4370
        %v4372 = vrot.slane %v4371, 1
        %v4373 = vadd.f32 %v4371, %v4372
        %v4374 = vadd.f32 %v4334, %v4338
        %v4375 = vadd.f32 %v4374, %v4342
        %v4376 = vadd.f32 %v4375, %v4346
        %v4377 = vrot.slane %v4376, 4
        %v4378 = vadd.f32 %v4376, %v4377
        %v4379 = vrot.slane %v4378, 2
        %v4380 = vadd.f32 %v4378, %v4379
        %v4381 = vrot.slane %v4380, 1
        %v4382 = vadd.f32 %v4380, %v4381
        %v4383 = vmul.f32 %v4355, %v626
        %v4384 = vmul.f32 %v4364, %v626
        %v4385 = vmul.f32 %v4373, %v626
        %v4386 = vmul.f32 %v4382, %v626
        %v4387 = vadd.f32 %v4383, 1e-05
        %v4388 = vadd.f32 %v4384, 1e-05
        %v4389 = vadd.f32 %v4385, 1e-05
        %v4390 = vadd.f32 %v4386, 1e-05
        %v4391 = vrsqrt.pop %v4387
        %v4392 = vrsqrt.pop %v4388
        %v4393 = vrsqrt.pop %v4389
        %v4394 = vrsqrt.pop %v4390
        %v4395 = vmul.f32 %v4315, %v4391
        %v4396 = vmul.f32 %v4316, %v4392
        %v4397 = vmul.f32 %v4317, %v4393
        %v4398 = vmul.f32 %v4318, %v4394
        %v4399 = vmul.f32 %v4319, %v4391
        %v4400 = vmul.f32 %v4320, %v4392
        %v4401 = vmul.f32 %v4321, %v4393
        %v4402 = vmul.f32 %v4322, %v4394
        %v4403 = vmul.f32 %v4323, %v4391
        %v4404 = vmul.f32 %v4324, %v4392
        %v4405 = vmul.f32 %v4325, %v4393
        %v4406 = vmul.f32 %v4326, %v4394
        %v4407 = vmul.f32 %v4327, %v4391
        %v4408 = vmul.f32 %v4328, %v4392
        %v4409 = vmul.f32 %v4329, %v4393
        %v4410 = vmul.f32 %v4330, %v4394
        %4412 = vset.pattern.permute.xlu0 0
        %4413 = vperm.xlu0 %4412, %v4122
        %v4414 = vpop.permute.xlu0 %4413
        %4417 = vset.pattern.permute.xlu0 0
        %4418 = vperm.xlu0 %4417, %v4123
        %v4419 = vpop.permute.xlu0 %4418
        %4422 = vset.pattern.permute.xlu0 0
        %4423 = vperm.xlu0 %4422, %v4124
        %v4424 = vpop.permute.xlu0 %4423
        %4427 = vset.pattern.permute.xlu0 0
        %4428 = vperm.xlu0 %4427, %v4125
        %v4429 = vpop.permute.xlu0 %4428
        %4432 = vset.pattern.permute.xlu0 0
        %4433 = vperm.xlu0 %4432, %v4126
        %v4434 = vpop.permute.xlu0 %4433
        %4437 = vset.pattern.permute.xlu0 0
        %4438 = vperm.xlu0 %4437, %v4127
        %v4439 = vpop.permute.xlu0 %4438
        %4442 = vset.pattern.permute.xlu0 0
        %4443 = vperm.xlu0 %4442, %v4128
        %v4444 = vpop.permute.xlu0 %4443
        %4447 = vset.pattern.permute.xlu0 0
        %4448 = vperm.xlu0 %4447, %v4129
        %v4449 = vpop.permute.xlu0 %4448
        %v4451 = vmul.f32 %v4259, %v4414
        %v4452 = vmul.f32 %v4260, %v4414
        %v4453 = vmul.f32 %v4261, %v4414
        %v4454 = vmul.f32 %v4262, %v4414
        %v4455 = vmul.f32 %v4263, %v4419
        %v4456 = vmul.f32 %v4264, %v4419
        %v4457 = vmul.f32 %v4265, %v4419
        %v4458 = vmul.f32 %v4266, %v4419
        %v4459 = vmul.f32 %v4267, %v4424
        %v4460 = vmul.f32 %v4268, %v4424
        %v4461 = vmul.f32 %v4269, %v4424
        %v4462 = vmul.f32 %v4270, %v4424
        %v4463 = vmul.f32 %v4271, %v4429
        %v4464 = vmul.f32 %v4272, %v4429
        %v4465 = vmul.f32 %v4273, %v4429
        %v4466 = vmul.f32 %v4274, %v4429
        %v4467 = vmul.f32 %v4395, %v4434
        %v4468 = vmul.f32 %v4396, %v4434
        %v4469 = vmul.f32 %v4397, %v4434
        %v4470 = vmul.f32 %v4398, %v4434
        %v4471 = vmul.f32 %v4399, %v4439
        %v4472 = vmul.f32 %v4400, %v4439
        %v4473 = vmul.f32 %v4401, %v4439
        %v4474 = vmul.f32 %v4402, %v4439
        %v4475 = vmul.f32 %v4403, %v4444
        %v4476 = vmul.f32 %v4404, %v4444
        %v4477 = vmul.f32 %v4405, %v4444
        %v4478 = vmul.f32 %v4406, %v4444
        %v4479 = vmul.f32 %v4407, %v4449
        %v4480 = vmul.f32 %v4408, %v4449
        %v4481 = vmul.f32 %v4409, %v4449
        %v4482 = vmul.f32 %v4410, %v4449
        %4484 = vset.pattern.permute.xlu0 0
        %4485 = vperm.xlu0 %4484, %v4131
        %v4486 = vpop.permute.xlu0 %4485
        %4489 = vset.pattern.permute.xlu0 0
        %4490 = vperm.xlu0 %4489, %v4132
        %v4491 = vpop.permute.xlu0 %4490
        %4494 = vset.pattern.permute.xlu0 0
        %4495 = vperm.xlu0 %4494, %v4133
        %v4496 = vpop.permute.xlu0 %4495
        %4499 = vset.pattern.permute.xlu0 0
        %4500 = vperm.xlu0 %4499, %v4134
        %v4501 = vpop.permute.xlu0 %4500
        %4504 = vset.pattern.permute.xlu0 0
        %4505 = vperm.xlu0 %4504, %v4135
        %v4506 = vpop.permute.xlu0 %4505
        %4509 = vset.pattern.permute.xlu0 0
        %4510 = vperm.xlu0 %4509, %v4136
        %v4511 = vpop.permute.xlu0 %4510
        %4514 = vset.pattern.permute.xlu0 0
        %4515 = vperm.xlu0 %4514, %v4137
        %v4516 = vpop.permute.xlu0 %4515
        %4519 = vset.pattern.permute.xlu0 0
        %4520 = vperm.xlu0 %4519, %v4138
        %v4521 = vpop.permute.xlu0 %4520
        %v4523 = vadd.f32 %v4451, %v4486
        %v4524 = vadd.f32 %v4452, %v4486
        %v4525 = vadd.f32 %v4453, %v4486
        %v4526 = vadd.f32 %v4454, %v4486
        %v4527 = vadd.f32 %v4455, %v4491
        %v4528 = vadd.f32 %v4456, %v4491
        %v4529 = vadd.f32 %v4457, %v4491
        %v4530 = vadd.f32 %v4458, %v4491
        %v4531 = vadd.f32 %v4459, %v4496
        %v4532 = vadd.f32 %v4460, %v4496
        %v4533 = vadd.f32 %v4461, %v4496
        %v4534 = vadd.f32 %v4462, %v4496
        %v4535 = vadd.f32 %v4463, %v4501
        %v4536 = vadd.f32 %v4464, %v4501
        %v4537 = vadd.f32 %v4465, %v4501
        %v4538 = vadd.f32 %v4466, %v4501
        %v4539 = vadd.f32 %v4467, %v4506
        %v4540 = vadd.f32 %v4468, %v4506
        %v4541 = vadd.f32 %v4469, %v4506
        %v4542 = vadd.f32 %v4470, %v4506
        %v4543 = vadd.f32 %v4471, %v4511
        %v4544 = vadd.f32 %v4472, %v4511
        %v4545 = vadd.f32 %v4473, %v4511
        %v4546 = vadd.f32 %v4474, %v4511
        %v4547 = vadd.f32 %v4475, %v4516
        %v4548 = vadd.f32 %v4476, %v4516
        %v4549 = vadd.f32 %v4477, %v4516
        %v4550 = vadd.f32 %v4478, %v4516
        %v4551 = vadd.f32 %v4479, %v4521
        %v4552 = vadd.f32 %v4480, %v4521
        %v4553 = vadd.f32 %v4481, %v4521
        %v4554 = vadd.f32 %v4482, %v4521
        %s4555 = sld [smem:[#allocation3 + $0x100]]
        %v4556 = vmul.f32 %v4523, %v4523
        %v4557 = vmul.f32 %v4524, %v4524
        %v4558 = vmul.f32 %v4525, %v4525
        %v4559 = vmul.f32 %v4526, %v4526
        %v4560 = vmul.f32 %v4527, %v4527
        %v4561 = vmul.f32 %v4528, %v4528
        %v4562 = vmul.f32 %v4529, %v4529
        %v4563 = vmul.f32 %v4530, %v4530
        %v4564 = vmul.f32 %v4531, %v4531
        %v4565 = vmul.f32 %v4532, %v4532
        %v4566 = vmul.f32 %v4533, %v4533
        %v4567 = vmul.f32 %v4534, %v4534
        %v4568 = vmul.f32 %v4535, %v4535
        %v4569 = vmul.f32 %v4536, %v4536
        %v4570 = vmul.f32 %v4537, %v4537
        %v4571 = vmul.f32 %v4538, %v4538
        %v4572 = vmul.f32 %v4539, %v4539
        %v4573 = vmul.f32 %v4540, %v4540
        %v4574 = vmul.f32 %v4541, %v4541
        %v4575 = vmul.f32 %v4542, %v4542
        %v4576 = vmul.f32 %v4543, %v4543
        %v4577 = vmul.f32 %v4544, %v4544
        %v4578 = vmul.f32 %v4545, %v4545
        %v4579 = vmul.f32 %v4546, %v4546
        %v4580 = vmul.f32 %v4547, %v4547
        %v4581 = vmul.f32 %v4548, %v4548
        %v4582 = vmul.f32 %v4549, %v4549
        %v4583 = vmul.f32 %v4550, %v4550
        %v4584 = vmul.f32 %v4551, %v4551
        %v4585 = vmul.f32 %v4552, %v4552
        %v4586 = vmul.f32 %v4553, %v4553
        %v4587 = vmul.f32 %v4554, %v4554
        %v4588 = vadd.f32 %v4556, %v4572
        %v4589 = vadd.f32 %v4557, %v4573
        %v4590 = vadd.f32 %v4558, %v4574
        %v4591 = vadd.f32 %v4559, %v4575
        %v4592 = vadd.f32 %v4560, %v4576
        %v4593 = vadd.f32 %v4561, %v4577
        %v4594 = vadd.f32 %v4562, %v4578
        %v4595 = vadd.f32 %v4563, %v4579
        %v4596 = vadd.f32 %v4564, %v4580
        %v4597 = vadd.f32 %v4565, %v4581
        %v4598 = vadd.f32 %v4566, %v4582
        %v4599 = vadd.f32 %v4567, %v4583
        %v4600 = vadd.f32 %v4568, %v4584
        %v4601 = vadd.f32 %v4569, %v4585
        %v4602 = vadd.f32 %v4570, %v4586
        %v4603 = vadd.f32 %v4571, %v4587
        %v4604 = vadd.f32 %v4588, 1e-30
        %v4605 = vadd.f32 %v4589, 1e-30
        %v4606 = vadd.f32 %v4590, 1e-30
        %v4607 = vadd.f32 %v4591, 1e-30
        %v4608 = vadd.f32 %v4592, 1e-30
        %v4609 = vadd.f32 %v4593, 1e-30
        %v4610 = vadd.f32 %v4594, 1e-30
        %v4611 = vadd.f32 %v4595, 1e-30
        %v4612 = vadd.f32 %v4596, 1e-30
        %v4613 = vadd.f32 %v4597, 1e-30
        %v4614 = vadd.f32 %v4598, 1e-30
        %v4615 = vadd.f32 %v4599, 1e-30
        %v4616 = vadd.f32 %v4600, 1e-30
        %v4617 = vadd.f32 %v4601, 1e-30
        %v4618 = vadd.f32 %v4602, 1e-30
        %v4619 = vadd.f32 %v4603, 1e-30
        %v4620 = vrsqrt.pop %v4604
        %v4621 = vrsqrt.pop %v4605
        %v4622 = vrsqrt.pop %v4606
        %v4623 = vrsqrt.pop %v4607
        %v4624 = vrsqrt.pop %v4608
        %v4625 = vrsqrt.pop %v4609
        %v4626 = vrsqrt.pop %v4610
        %v4627 = vrsqrt.pop %v4611
        %v4628 = vrsqrt.pop %v4612
        %v4629 = vrsqrt.pop %v4613
        %v4630 = vrsqrt.pop %v4614
        %v4631 = vrsqrt.pop %v4615
        %v4632 = vrsqrt.pop %v4616
        %v4633 = vrsqrt.pop %v4617
        %v4634 = vrsqrt.pop %v4618
        %v4635 = vrsqrt.pop %v4619
        %v4636 = vmul.f32 %v4588, %v4620
        %v4637 = vmul.f32 %v4589, %v4621
        %v4638 = vmul.f32 %v4590, %v4622
        %v4639 = vmul.f32 %v4591, %v4623
        %v4640 = vmul.f32 %v4592, %v4624
        %v4641 = vmul.f32 %v4593, %v4625
        %v4642 = vmul.f32 %v4594, %v4626
        %v4643 = vmul.f32 %v4595, %v4627
        %v4644 = vmul.f32 %v4596, %v4628
        %v4645 = vmul.f32 %v4597, %v4629
        %v4646 = vmul.f32 %v4598, %v4630
        %v4647 = vmul.f32 %v4599, %v4631
        %v4648 = vmul.f32 %v4600, %v4632
        %v4649 = vmul.f32 %v4601, %v4633
        %v4650 = vmul.f32 %v4602, %v4634
        %v4651 = vmul.f32 %v4603, %v4635
        %v4652 = vstv %s4555
        %v4653 = vsub.f32 %v4636, %v4652
        %v4654 = vsub.f32 %v4637, %v4652
        %v4655 = vsub.f32 %v4638, %v4652
        %v4656 = vsub.f32 %v4639, %v4652
        %v4657 = vsub.f32 %v4640, %v4652
        %v4658 = vsub.f32 %v4641, %v4652
        %v4659 = vsub.f32 %v4642, %v4652
        %v4660 = vsub.f32 %v4643, %v4652
        %v4661 = vsub.f32 %v4644, %v4652
        %v4662 = vsub.f32 %v4645, %v4652
        %v4663 = vsub.f32 %v4646, %v4652
        %v4664 = vsub.f32 %v4647, %v4652
        %v4665 = vsub.f32 %v4648, %v4652
        %v4666 = vsub.f32 %v4649, %v4652
        %v4667 = vsub.f32 %v4650, %v4652
        %v4668 = vsub.f32 %v4651, %v4652
        %v4669 = vmax.f32 %v4653, 0.0
        %v4670 = vmax.f32 %v4654, 0.0
        %v4671 = vmax.f32 %v4655, 0.0
        %v4672 = vmax.f32 %v4656, 0.0
        %v4673 = vmax.f32 %v4657, 0.0
        %v4674 = vmax.f32 %v4658, 0.0
        %v4675 = vmax.f32 %v4659, 0.0
        %v4676 = vmax.f32 %v4660, 0.0
        %v4677 = vmax.f32 %v4661, 0.0
        %v4678 = vmax.f32 %v4662, 0.0
        %v4679 = vmax.f32 %v4663, 0.0
        %v4680 = vmax.f32 %v4664, 0.0
        %v4681 = vmax.f32 %v4665, 0.0
        %v4682 = vmax.f32 %v4666, 0.0
        %v4683 = vmax.f32 %v4667, 0.0
        %v4684 = vmax.f32 %v4668, 0.0
        %v4685 = vmul.f32 %v4669, %v4620
        %v4686 = vmul.f32 %v4670, %v4621
        %v4687 = vmul.f32 %v4671, %v4622
        %v4688 = vmul.f32 %v4672, %v4623
        %v4689 = vmul.f32 %v4673, %v4624
        %v4690 = vmul.f32 %v4674, %v4625
        %v4691 = vmul.f32 %v4675, %v4626
        %v4692 = vmul.f32 %v4676, %v4627
        %v4693 = vmul.f32 %v4677, %v4628
        %v4694 = vmul.f32 %v4678, %v4629
        %v4695 = vmul.f32 %v4679, %v4630
        %v4696 = vmul.f32 %v4680, %v4631
        %v4697 = vmul.f32 %v4681, %v4632
        %v4698 = vmul.f32 %v4682, %v4633
        %v4699 = vmul.f32 %v4683, %v4634
        %v4700 = vmul.f32 %v4684, %v4635
        %v4701 = vmul.f32 %v4523, %v4685
        %v4702 = vmul.f32 %v4524, %v4686
        %v4703 = vmul.f32 %v4525, %v4687
        %v4704 = vmul.f32 %v4526, %v4688
        %v4705 = vmul.f32 %v4527, %v4689
        %v4706 = vmul.f32 %v4528, %v4690
        %v4707 = vmul.f32 %v4529, %v4691
        %v4708 = vmul.f32 %v4530, %v4692
        %v4709 = vmul.f32 %v4531, %v4693
        %v4710 = vmul.f32 %v4532, %v4694
        %v4711 = vmul.f32 %v4533, %v4695
        %v4712 = vmul.f32 %v4534, %v4696
        %v4713 = vmul.f32 %v4535, %v4697
        %v4714 = vmul.f32 %v4536, %v4698
        %v4715 = vmul.f32 %v4537, %v4699
        %v4716 = vmul.f32 %v4538, %v4700
        %v4717 = vmul.f32 %v4539, %v4685
        %v4718 = vmul.f32 %v4540, %v4686
        %v4719 = vmul.f32 %v4541, %v4687
        %v4720 = vmul.f32 %v4542, %v4688
        %v4721 = vmul.f32 %v4543, %v4689
        %v4722 = vmul.f32 %v4544, %v4690
        %v4723 = vmul.f32 %v4545, %v4691
        %v4724 = vmul.f32 %v4546, %v4692
        %v4725 = vmul.f32 %v4547, %v4693
        %v4726 = vmul.f32 %v4548, %v4694
        %v4727 = vmul.f32 %v4549, %v4695
        %v4728 = vmul.f32 %v4550, %v4696
        %v4729 = vmul.f32 %v4551, %v4697
        %v4730 = vmul.f32 %v4552, %v4698
        %v4731 = vmul.f32 %v4553, %v4699
        %v4732 = vmul.f32 %v4554, %v4700
        %s4733 = scalar_lea.vmem %s2, 320
        %v4734 = vld [vmem:[%s4733] sm:$0xff]
        %v4735 = vld [vmem:[%s4733 + $0x8] sm:$0xff]
        %v4736 = vld [vmem:[%s4733 + $0x10] sm:$0xff]
        %v4737 = vld [vmem:[%s4733 + $0x18] sm:$0xff]
        %v4738 = vld [vmem:[%s4733 + $0x20] sm:$0xff]
        %v4739 = vld [vmem:[%s4733 + $0x28] sm:$0xff]
        %v4740 = vld [vmem:[%s4733 + $0x30] sm:$0xff]
        %v4741 = vld [vmem:[%s4733 + $0x38] sm:$0xff]
        %v4743 = vsel %vm323, %v4734, 0
        %v4746 = vsel %vm323, %v4735, 0
        %v4749 = vsel %vm323, %v4736, 0
        %v4752 = vsel %vm323, %v4737, 0
        %v4755 = vsel %vm323, %v4738, 0
        %v4758 = vsel %vm323, %v4739, 0
        %v4761 = vsel %vm323, %v4740, 0
        %v4764 = vsel %vm323, %v4741, 0
        %4766 = vmatprep.subr.mxu0 0.0
        %4767 = vmatpush1.msra.mxu0 0.0
        %4768 = vmatprep.subr.mxu0 0.0
        %4769 = vmatpush1.msra.mxu0 0.0
        %4770 = vmatprep.subr.mxu0 0.0
        %4771 = vmatpush1.msra.mxu0 0.0
        %4772 = vmatprep.subr.mxu0 0.0
        %4773 = vmatpush1.msra.mxu0 0.0
        %4774 = vmatprep.subr.mxu0 0.0
        %4775 = vmatpush1.msra.mxu0 0.0
        %4776 = vmatprep.subr.mxu0 0.0
        %4777 = vmatpush1.msra.mxu0 0.0
        %4778 = vmatprep.subr.mxu0 0.0
        %4779 = vmatpush1.msra.mxu0 0.0
        %4780 = vmatprep.subr.mxu0 0.0
        %4781 = vmatpush1.msra.mxu0 0.0
        %4782 = vmatprep.subr.mxu0 %v4730
        %4783 = vmatpush1.msra.mxu0 %v4729
        %4784 = vmatprep.subr.mxu0 %v4726
        %4785 = vmatpush1.msra.mxu0 %v4725
        %4786 = vmatprep.subr.mxu0 %v4722
        %4787 = vmatpush1.msra.mxu0 %v4721
        %4788 = vmatprep.subr.mxu0 %v4718
        %4789 = vmatpush1.msra.mxu0 %v4717
        %4790 = vmatprep.subr.mxu0 %v4714
        %4791 = vmatpush1.msra.mxu0 %v4713
        %4792 = vmatprep.subr.mxu0 %v4710
        %4793 = vmatpush1.msra.mxu0 %v4709
        %4794 = vmatprep.subr.mxu0 %v4706
        %4795 = vmatpush1.msra.mxu0 %v4705
        %4796 = vmatprep.subr.mxu0 %v4702
        %4797 = vmatpush1.msra.mxu0 %v4701
        %4798 = vmatprep.subr.mxu0 0.0
        %4799 = vmatpush2.msra.mxu0 0.0
        %4800 = vmatprep.subr.mxu0 0.0
        %4801 = vmatpush2.msra.mxu0 0.0
        %4802 = vmatprep.subr.mxu0 0.0
        %4803 = vmatpush2.msra.mxu0 0.0
        %4804 = vmatprep.subr.mxu0 0.0
        %4805 = vmatpush2.msra.mxu0 0.0
        %4806 = vmatprep.subr.mxu0 0.0
        %4807 = vmatpush2.msra.mxu0 0.0
        %4808 = vmatprep.subr.mxu0 0.0
        %4809 = vmatpush2.msra.mxu0 0.0
        %4810 = vmatprep.subr.mxu0 0.0
        %4811 = vmatpush2.msra.mxu0 0.0
        %4812 = vmatprep.subr.mxu0 0.0
        %4813 = vmatpush2.msra.mxu0 0.0
        %4814 = vmatprep.subr.mxu0 0.0
        %4815 = vmatpush2.msra.mxu0 0.0
        %4816 = vmatprep.subr.mxu0 0.0
        %4817 = vmatpush2.msra.mxu0 0.0
        %4818 = vmatprep.subr.mxu0 0.0
        %4819 = vmatpush2.msra.mxu0 0.0
        %4820 = vmatprep.subr.mxu0 0.0
        %4821 = vmatpush2.msra.mxu0 0.0
        %4822 = vmatprep.subr.mxu0 0.0
        %4823 = vmatpush2.msra.mxu0 0.0
        %4824 = vmatprep.subr.mxu0 0.0
        %4825 = vmatpush2.msra.mxu0 0.0
        %4826 = vmatprep.subr.mxu0 0.0
        %4827 = vmatpush2.msra.mxu0 0.0
        %4828 = vmatprep.subr.mxu0 0.0
        %4829 = vmatpush2.msra.mxu0 0.0
        %4830 = vmatprep.mubr.f32.mxu0 0.0
        %4831 = vmatmul.mubr.f32.gmra.mxu0 %v4743
        %v4832 = vpop.f32.mrf.mxu0
        %v4833 = vadd.f32 0.0, %v4832
        %v4834 = vpop.f32.mrf.mxu0
        %v4835 = vadd.f32 0.0, %v4834
        %4836 = vmatprep.mubr.f32.mxu0 0.0
        %4837 = vmatmul.mubr.f32.gmra.mxu0 %v4746
        %v4838 = vpop.f32.mrf.mxu0
        %v4839 = vadd.f32 0.0, %v4838
        %v4840 = vpop.f32.mrf.mxu0
        %v4841 = vadd.f32 0.0, %v4840
        %4842 = vmatprep.mubr.f32.mxu0 0.0
        %4843 = vmatmul.mubr.f32.gmra.mxu0 %v4749
        %v4844 = vpop.f32.mrf.mxu0
        %v4845 = vadd.f32 0.0, %v4844
        %v4846 = vpop.f32.mrf.mxu0
        %v4847 = vadd.f32 0.0, %v4846
        %4848 = vmatprep.mubr.f32.mxu0 0.0
        %4849 = vmatmul.mubr.f32.gmra.mxu0 %v4752
        %v4850 = vpop.f32.mrf.mxu0
        %v4851 = vadd.f32 0.0, %v4850
        %v4852 = vpop.f32.mrf.mxu0
        %v4853 = vadd.f32 0.0, %v4852
        %4854 = vmatprep.mubr.f32.mxu0 0.0
        %4855 = vmatmul.mubr.f32.gmra.mxu0 %v4755
        %v4856 = vpop.f32.mrf.mxu0
        %v4857 = vadd.f32 0.0, %v4856
        %v4858 = vpop.f32.mrf.mxu0
        %v4859 = vadd.f32 0.0, %v4858
        %4860 = vmatprep.mubr.f32.mxu0 0.0
        %4861 = vmatmul.mubr.f32.gmra.mxu0 %v4758
        %v4862 = vpop.f32.mrf.mxu0
        %v4863 = vadd.f32 0.0, %v4862
        %v4864 = vpop.f32.mrf.mxu0
        %v4865 = vadd.f32 0.0, %v4864
        %4866 = vmatprep.mubr.f32.mxu0 0.0
        %4867 = vmatmul.mubr.f32.gmra.mxu0 %v4761
        %v4868 = vpop.f32.mrf.mxu0
        %v4869 = vadd.f32 0.0, %v4868
        %v4870 = vpop.f32.mrf.mxu0
        %v4871 = vadd.f32 0.0, %v4870
        %4872 = vmatprep.mubr.f32.mxu0 0.0
        %4873 = vmatmul.mubr.f32.gmra.mxu0 %v4764
        %v4874 = vpop.f32.mrf.mxu0
        %v4875 = vadd.f32 0.0, %v4874
        %v4876 = vpop.f32.mrf.mxu0
        %v4877 = vadd.f32 0.0, %v4876
        %4878 = vdwg.mxu0
        %4879 = vmatprep.subr.mxu0 0.0
        %4880 = vmatpush1.msra.mxu0 0.0
        %4881 = vmatprep.subr.mxu0 0.0
        %4882 = vmatpush1.msra.mxu0 0.0
        %4883 = vmatprep.subr.mxu0 0.0
        %4884 = vmatpush1.msra.mxu0 0.0
        %4885 = vmatprep.subr.mxu0 0.0
        %4886 = vmatpush1.msra.mxu0 0.0
        %4887 = vmatprep.subr.mxu0 0.0
        %4888 = vmatpush1.msra.mxu0 0.0
        %4889 = vmatprep.subr.mxu0 0.0
        %4890 = vmatpush1.msra.mxu0 0.0
        %4891 = vmatprep.subr.mxu0 0.0
        %4892 = vmatpush1.msra.mxu0 0.0
        %4893 = vmatprep.subr.mxu0 0.0
        %4894 = vmatpush1.msra.mxu0 0.0
        %4895 = vmatprep.subr.mxu0 %v4732
        %4896 = vmatpush1.msra.mxu0 %v4731
        %4897 = vmatprep.subr.mxu0 %v4728
        %4898 = vmatpush1.msra.mxu0 %v4727
        %4899 = vmatprep.subr.mxu0 %v4724
        %4900 = vmatpush1.msra.mxu0 %v4723
        %4901 = vmatprep.subr.mxu0 %v4720
        %4902 = vmatpush1.msra.mxu0 %v4719
        %4903 = vmatprep.subr.mxu0 %v4716
        %4904 = vmatpush1.msra.mxu0 %v4715
        %4905 = vmatprep.subr.mxu0 %v4712
        %4906 = vmatpush1.msra.mxu0 %v4711
        %4907 = vmatprep.subr.mxu0 %v4708
        %4908 = vmatpush1.msra.mxu0 %v4707
        %4909 = vmatprep.subr.mxu0 %v4704
        %4910 = vmatpush1.msra.mxu0 %v4703
        %4911 = vmatprep.subr.mxu0 0.0
        %4912 = vmatpush2.msra.mxu0 0.0
        %4913 = vmatprep.subr.mxu0 0.0
        %4914 = vmatpush2.msra.mxu0 0.0
        %4915 = vmatprep.subr.mxu0 0.0
        %4916 = vmatpush2.msra.mxu0 0.0
        %4917 = vmatprep.subr.mxu0 0.0
        %4918 = vmatpush2.msra.mxu0 0.0
        %4919 = vmatprep.subr.mxu0 0.0
        %4920 = vmatpush2.msra.mxu0 0.0
        %4921 = vmatprep.subr.mxu0 0.0
        %4922 = vmatpush2.msra.mxu0 0.0
        %4923 = vmatprep.subr.mxu0 0.0
        %4924 = vmatpush2.msra.mxu0 0.0
        %4925 = vmatprep.subr.mxu0 0.0
        %4926 = vmatpush2.msra.mxu0 0.0
        %4927 = vmatprep.subr.mxu0 0.0
        %4928 = vmatpush2.msra.mxu0 0.0
        %4929 = vmatprep.subr.mxu0 0.0
        %4930 = vmatpush2.msra.mxu0 0.0
        %4931 = vmatprep.subr.mxu0 0.0
        %4932 = vmatpush2.msra.mxu0 0.0
        %4933 = vmatprep.subr.mxu0 0.0
        %4934 = vmatpush2.msra.mxu0 0.0
        %4935 = vmatprep.subr.mxu0 0.0
        %4936 = vmatpush2.msra.mxu0 0.0
        %4937 = vmatprep.subr.mxu0 0.0
        %4938 = vmatpush2.msra.mxu0 0.0
        %4939 = vmatprep.subr.mxu0 0.0
        %4940 = vmatpush2.msra.mxu0 0.0
        %4941 = vmatprep.subr.mxu0 0.0
        %4942 = vmatpush2.msra.mxu0 0.0
        %4943 = vmatprep.mubr.f32.mxu0 0.0
        %4944 = vmatmul.mubr.f32.gmra.mxu0 %v4743
        %v4945 = vpop.f32.mrf.mxu0
        %v4946 = vadd.f32 0.0, %v4945
        %v4947 = vpop.f32.mrf.mxu0
        %v4948 = vadd.f32 0.0, %v4947
        %4949 = vmatprep.mubr.f32.mxu0 0.0
        %4950 = vmatmul.mubr.f32.gmra.mxu0 %v4746
        %v4951 = vpop.f32.mrf.mxu0
        %v4952 = vadd.f32 0.0, %v4951
        %v4953 = vpop.f32.mrf.mxu0
        %v4954 = vadd.f32 0.0, %v4953
        %4955 = vmatprep.mubr.f32.mxu0 0.0
        %4956 = vmatmul.mubr.f32.gmra.mxu0 %v4749
        %v4957 = vpop.f32.mrf.mxu0
        %v4958 = vadd.f32 0.0, %v4957
        %v4959 = vpop.f32.mrf.mxu0
        %v4960 = vadd.f32 0.0, %v4959
        %4961 = vmatprep.mubr.f32.mxu0 0.0
        %4962 = vmatmul.mubr.f32.gmra.mxu0 %v4752
        %v4963 = vpop.f32.mrf.mxu0
        %v4964 = vadd.f32 0.0, %v4963
        %v4965 = vpop.f32.mrf.mxu0
        %v4966 = vadd.f32 0.0, %v4965
        %4967 = vmatprep.mubr.f32.mxu0 0.0
        %4968 = vmatmul.mubr.f32.gmra.mxu0 %v4755
        %v4969 = vpop.f32.mrf.mxu0
        %v4970 = vadd.f32 0.0, %v4969
        %v4971 = vpop.f32.mrf.mxu0
        %v4972 = vadd.f32 0.0, %v4971
        %4973 = vmatprep.mubr.f32.mxu0 0.0
        %4974 = vmatmul.mubr.f32.gmra.mxu0 %v4758
        %v4975 = vpop.f32.mrf.mxu0
        %v4976 = vadd.f32 0.0, %v4975
        %v4977 = vpop.f32.mrf.mxu0
        %v4978 = vadd.f32 0.0, %v4977
        %4979 = vmatprep.mubr.f32.mxu0 0.0
        %4980 = vmatmul.mubr.f32.gmra.mxu0 %v4761
        %v4981 = vpop.f32.mrf.mxu0
        %v4982 = vadd.f32 0.0, %v4981
        %v4983 = vpop.f32.mrf.mxu0
        %v4984 = vadd.f32 0.0, %v4983
        %4985 = vmatprep.mubr.f32.mxu0 0.0
        %4986 = vmatmul.mubr.f32.gmra.mxu0 %v4764
        %v4987 = vpop.f32.mrf.mxu0
        %v4988 = vadd.f32 0.0, %v4987
        %v4989 = vpop.f32.mrf.mxu0
        %v4990 = vadd.f32 0.0, %v4989
        %4991 = vdwg.mxu0
        %s4992 = scalar_lea.vmem %s3, 320
        %v4993 = vld [vmem:[%s4992] sm:$0xff]
        %v4994 = vld [vmem:[%s4992 + $0x8] sm:$0xff]
        %v4995 = vld [vmem:[%s4992 + $0x10] sm:$0xff]
        %v4996 = vld [vmem:[%s4992 + $0x18] sm:$0xff]
        %v4997 = vld [vmem:[%s4992 + $0x20] sm:$0xff]
        %v4998 = vld [vmem:[%s4992 + $0x28] sm:$0xff]
        %v4999 = vld [vmem:[%s4992 + $0x30] sm:$0xff]
        %v5000 = vld [vmem:[%s4992 + $0x38] sm:$0xff]
        %s5001 = scalar_lea.vmem %s4, 320
        %v5002 = vld [vmem:[%s5001] sm:$0xff]
        %v5003 = vld [vmem:[%s5001 + $0x8] sm:$0xff]
        %v5004 = vld [vmem:[%s5001 + $0x10] sm:$0xff]
        %v5005 = vld [vmem:[%s5001 + $0x18] sm:$0xff]
        %v5006 = vld [vmem:[%s5001 + $0x20] sm:$0xff]
        %v5007 = vld [vmem:[%s5001 + $0x28] sm:$0xff]
        %v5008 = vld [vmem:[%s5001 + $0x30] sm:$0xff]
        %v5009 = vld [vmem:[%s5001 + $0x38] sm:$0xff]
        %v5010 = vadd.f32 %v4833, %v4839
        %v5011 = vadd.f32 %v5010, %v4845
        %v5012 = vadd.f32 %v5011, %v4851
        %v5013 = vrot.slane %v5012, 4
        %v5014 = vadd.f32 %v5012, %v5013
        %v5015 = vrot.slane %v5014, 2
        %v5016 = vadd.f32 %v5014, %v5015
        %v5017 = vrot.slane %v5016, 1
        %v5018 = vadd.f32 %v5016, %v5017
        %v5019 = vadd.f32 %v4835, %v4841
        %v5020 = vadd.f32 %v5019, %v4847
        %v5021 = vadd.f32 %v5020, %v4853
        %v5022 = vrot.slane %v5021, 4
        %v5023 = vadd.f32 %v5021, %v5022
        %v5024 = vrot.slane %v5023, 2
        %v5025 = vadd.f32 %v5023, %v5024
        %v5026 = vrot.slane %v5025, 1
        %v5027 = vadd.f32 %v5025, %v5026
        %v5028 = vadd.f32 %v4946, %v4952
        %v5029 = vadd.f32 %v5028, %v4958
        %v5030 = vadd.f32 %v5029, %v4964
        %v5031 = vrot.slane %v5030, 4
        %v5032 = vadd.f32 %v5030, %v5031
        %v5033 = vrot.slane %v5032, 2
        %v5034 = vadd.f32 %v5032, %v5033
        %v5035 = vrot.slane %v5034, 1
        %v5036 = vadd.f32 %v5034, %v5035
        %v5037 = vadd.f32 %v4948, %v4954
        %v5038 = vadd.f32 %v5037, %v4960
        %v5039 = vadd.f32 %v5038, %v4966
        %v5040 = vrot.slane %v5039, 4
        %v5041 = vadd.f32 %v5039, %v5040
        %v5042 = vrot.slane %v5041, 2
        %v5043 = vadd.f32 %v5041, %v5042
        %v5044 = vrot.slane %v5043, 1
        %v5045 = vadd.f32 %v5043, %v5044
        %v5046 = vmul.f32 %v5018, %v626
        %v5047 = vmul.f32 %v5027, %v626
        %v5048 = vmul.f32 %v5036, %v626
        %v5049 = vmul.f32 %v5045, %v626
        %v5050 = vsub.f32 %v4833, %v5046
        %v5051 = vsub.f32 %v4835, %v5047
        %v5052 = vsub.f32 %v4946, %v5048
        %v5053 = vsub.f32 %v4948, %v5049
        %v5054 = vsub.f32 %v4839, %v5046
        %v5055 = vsub.f32 %v4841, %v5047
        %v5056 = vsub.f32 %v4952, %v5048
        %v5057 = vsub.f32 %v4954, %v5049
        %v5058 = vsub.f32 %v4845, %v5046
        %v5059 = vsub.f32 %v4847, %v5047
        %v5060 = vsub.f32 %v4958, %v5048
        %v5061 = vsub.f32 %v4960, %v5049
        %v5062 = vsub.f32 %v4851, %v5046
        %v5063 = vsub.f32 %v4853, %v5047
        %v5064 = vsub.f32 %v4964, %v5048
        %v5065 = vsub.f32 %v4966, %v5049
        %v5066 = vmul.f32 %v5050, %v5050
        %v5067 = vmul.f32 %v5051, %v5051
        %v5068 = vmul.f32 %v5052, %v5052
        %v5069 = vmul.f32 %v5053, %v5053
        %v5070 = vmul.f32 %v5054, %v5054
        %v5071 = vmul.f32 %v5055, %v5055
        %v5072 = vmul.f32 %v5056, %v5056
        %v5073 = vmul.f32 %v5057, %v5057
        %v5074 = vmul.f32 %v5058, %v5058
        %v5075 = vmul.f32 %v5059, %v5059
        %v5076 = vmul.f32 %v5060, %v5060
        %v5077 = vmul.f32 %v5061, %v5061
        %v5078 = vmul.f32 %v5062, %v5062
        %v5079 = vmul.f32 %v5063, %v5063
        %v5080 = vmul.f32 %v5064, %v5064
        %v5081 = vmul.f32 %v5065, %v5065
        %v5082 = vadd.f32 %v5066, %v5070
        %v5083 = vadd.f32 %v5082, %v5074
        %v5084 = vadd.f32 %v5083, %v5078
        %v5085 = vrot.slane %v5084, 4
        %v5086 = vadd.f32 %v5084, %v5085
        %v5087 = vrot.slane %v5086, 2
        %v5088 = vadd.f32 %v5086, %v5087
        %v5089 = vrot.slane %v5088, 1
        %v5090 = vadd.f32 %v5088, %v5089
        %v5091 = vadd.f32 %v5067, %v5071
        %v5092 = vadd.f32 %v5091, %v5075
        %v5093 = vadd.f32 %v5092, %v5079
        %v5094 = vrot.slane %v5093, 4
        %v5095 = vadd.f32 %v5093, %v5094
        %v5096 = vrot.slane %v5095, 2
        %v5097 = vadd.f32 %v5095, %v5096
        %v5098 = vrot.slane %v5097, 1
        %v5099 = vadd.f32 %v5097, %v5098
        %v5100 = vadd.f32 %v5068, %v5072
        %v5101 = vadd.f32 %v5100, %v5076
        %v5102 = vadd.f32 %v5101, %v5080
        %v5103 = vrot.slane %v5102, 4
        %v5104 = vadd.f32 %v5102, %v5103
        %v5105 = vrot.slane %v5104, 2
        %v5106 = vadd.f32 %v5104, %v5105
        %v5107 = vrot.slane %v5106, 1
        %v5108 = vadd.f32 %v5106, %v5107
        %v5109 = vadd.f32 %v5069, %v5073
        %v5110 = vadd.f32 %v5109, %v5077
        %v5111 = vadd.f32 %v5110, %v5081
        %v5112 = vrot.slane %v5111, 4
        %v5113 = vadd.f32 %v5111, %v5112
        %v5114 = vrot.slane %v5113, 2
        %v5115 = vadd.f32 %v5113, %v5114
        %v5116 = vrot.slane %v5115, 1
        %v5117 = vadd.f32 %v5115, %v5116
        %v5118 = vmul.f32 %v5090, %v626
        %v5119 = vmul.f32 %v5099, %v626
        %v5120 = vmul.f32 %v5108, %v626
        %v5121 = vmul.f32 %v5117, %v626
        %v5122 = vadd.f32 %v5118, 1e-05
        %v5123 = vadd.f32 %v5119, 1e-05
        %v5124 = vadd.f32 %v5120, 1e-05
        %v5125 = vadd.f32 %v5121, 1e-05
        %v5126 = vrsqrt.pop %v5122
        %v5127 = vrsqrt.pop %v5123
        %v5128 = vrsqrt.pop %v5124
        %v5129 = vrsqrt.pop %v5125
        %v5130 = vmul.f32 %v5050, %v5126
        %v5131 = vmul.f32 %v5051, %v5127
        %v5132 = vmul.f32 %v5052, %v5128
        %v5133 = vmul.f32 %v5053, %v5129
        %v5134 = vmul.f32 %v5054, %v5126
        %v5135 = vmul.f32 %v5055, %v5127
        %v5136 = vmul.f32 %v5056, %v5128
        %v5137 = vmul.f32 %v5057, %v5129
        %v5138 = vmul.f32 %v5058, %v5126
        %v5139 = vmul.f32 %v5059, %v5127
        %v5140 = vmul.f32 %v5060, %v5128
        %v5141 = vmul.f32 %v5061, %v5129
        %v5142 = vmul.f32 %v5062, %v5126
        %v5143 = vmul.f32 %v5063, %v5127
        %v5144 = vmul.f32 %v5064, %v5128
        %v5145 = vmul.f32 %v5065, %v5129
        %v5146 = vadd.f32 %v4857, %v4863
        %v5147 = vadd.f32 %v5146, %v4869
        %v5148 = vadd.f32 %v5147, %v4875
        %v5149 = vrot.slane %v5148, 4
        %v5150 = vadd.f32 %v5148, %v5149
        %v5151 = vrot.slane %v5150, 2
        %v5152 = vadd.f32 %v5150, %v5151
        %v5153 = vrot.slane %v5152, 1
        %v5154 = vadd.f32 %v5152, %v5153
        %v5155 = vadd.f32 %v4859, %v4865
        %v5156 = vadd.f32 %v5155, %v4871
        %v5157 = vadd.f32 %v5156, %v4877
        %v5158 = vrot.slane %v5157, 4
        %v5159 = vadd.f32 %v5157, %v5158
        %v5160 = vrot.slane %v5159, 2
        %v5161 = vadd.f32 %v5159, %v5160
        %v5162 = vrot.slane %v5161, 1
        %v5163 = vadd.f32 %v5161, %v5162
        %v5164 = vadd.f32 %v4970, %v4976
        %v5165 = vadd.f32 %v5164, %v4982
        %v5166 = vadd.f32 %v5165, %v4988
        %v5167 = vrot.slane %v5166, 4
        %v5168 = vadd.f32 %v5166, %v5167
        %v5169 = vrot.slane %v5168, 2
        %v5170 = vadd.f32 %v5168, %v5169
        %v5171 = vrot.slane %v5170, 1
        %v5172 = vadd.f32 %v5170, %v5171
        %v5173 = vadd.f32 %v4972, %v4978
        %v5174 = vadd.f32 %v5173, %v4984
        %v5175 = vadd.f32 %v5174, %v4990
        %v5176 = vrot.slane %v5175, 4
        %v5177 = vadd.f32 %v5175, %v5176
        %v5178 = vrot.slane %v5177, 2
        %v5179 = vadd.f32 %v5177, %v5178
        %v5180 = vrot.slane %v5179, 1
        %v5181 = vadd.f32 %v5179, %v5180
        %v5182 = vmul.f32 %v5154, %v626
        %v5183 = vmul.f32 %v5163, %v626
        %v5184 = vmul.f32 %v5172, %v626
        %v5185 = vmul.f32 %v5181, %v626
        %v5186 = vsub.f32 %v4857, %v5182
        %v5187 = vsub.f32 %v4859, %v5183
        %v5188 = vsub.f32 %v4970, %v5184
        %v5189 = vsub.f32 %v4972, %v5185
        %v5190 = vsub.f32 %v4863, %v5182
        %v5191 = vsub.f32 %v4865, %v5183
        %v5192 = vsub.f32 %v4976, %v5184
        %v5193 = vsub.f32 %v4978, %v5185
        %v5194 = vsub.f32 %v4869, %v5182
        %v5195 = vsub.f32 %v4871, %v5183
        %v5196 = vsub.f32 %v4982, %v5184
        %v5197 = vsub.f32 %v4984, %v5185
        %v5198 = vsub.f32 %v4875, %v5182
        %v5199 = vsub.f32 %v4877, %v5183
        %v5200 = vsub.f32 %v4988, %v5184
        %v5201 = vsub.f32 %v4990, %v5185
        %v5202 = vmul.f32 %v5186, %v5186
        %v5203 = vmul.f32 %v5187, %v5187
        %v5204 = vmul.f32 %v5188, %v5188
        %v5205 = vmul.f32 %v5189, %v5189
        %v5206 = vmul.f32 %v5190, %v5190
        %v5207 = vmul.f32 %v5191, %v5191
        %v5208 = vmul.f32 %v5192, %v5192
        %v5209 = vmul.f32 %v5193, %v5193
        %v5210 = vmul.f32 %v5194, %v5194
        %v5211 = vmul.f32 %v5195, %v5195
        %v5212 = vmul.f32 %v5196, %v5196
        %v5213 = vmul.f32 %v5197, %v5197
        %v5214 = vmul.f32 %v5198, %v5198
        %v5215 = vmul.f32 %v5199, %v5199
        %v5216 = vmul.f32 %v5200, %v5200
        %v5217 = vmul.f32 %v5201, %v5201
        %v5218 = vadd.f32 %v5202, %v5206
        %v5219 = vadd.f32 %v5218, %v5210
        %v5220 = vadd.f32 %v5219, %v5214
        %v5221 = vrot.slane %v5220, 4
        %v5222 = vadd.f32 %v5220, %v5221
        %v5223 = vrot.slane %v5222, 2
        %v5224 = vadd.f32 %v5222, %v5223
        %v5225 = vrot.slane %v5224, 1
        %v5226 = vadd.f32 %v5224, %v5225
        %v5227 = vadd.f32 %v5203, %v5207
        %v5228 = vadd.f32 %v5227, %v5211
        %v5229 = vadd.f32 %v5228, %v5215
        %v5230 = vrot.slane %v5229, 4
        %v5231 = vadd.f32 %v5229, %v5230
        %v5232 = vrot.slane %v5231, 2
        %v5233 = vadd.f32 %v5231, %v5232
        %v5234 = vrot.slane %v5233, 1
        %v5235 = vadd.f32 %v5233, %v5234
        %v5236 = vadd.f32 %v5204, %v5208
        %v5237 = vadd.f32 %v5236, %v5212
        %v5238 = vadd.f32 %v5237, %v5216
        %v5239 = vrot.slane %v5238, 4
        %v5240 = vadd.f32 %v5238, %v5239
        %v5241 = vrot.slane %v5240, 2
        %v5242 = vadd.f32 %v5240, %v5241
        %v5243 = vrot.slane %v5242, 1
        %v5244 = vadd.f32 %v5242, %v5243
        %v5245 = vadd.f32 %v5205, %v5209
        %v5246 = vadd.f32 %v5245, %v5213
        %v5247 = vadd.f32 %v5246, %v5217
        %v5248 = vrot.slane %v5247, 4
        %v5249 = vadd.f32 %v5247, %v5248
        %v5250 = vrot.slane %v5249, 2
        %v5251 = vadd.f32 %v5249, %v5250
        %v5252 = vrot.slane %v5251, 1
        %v5253 = vadd.f32 %v5251, %v5252
        %v5254 = vmul.f32 %v5226, %v626
        %v5255 = vmul.f32 %v5235, %v626
        %v5256 = vmul.f32 %v5244, %v626
        %v5257 = vmul.f32 %v5253, %v626
        %v5258 = vadd.f32 %v5254, 1e-05
        %v5259 = vadd.f32 %v5255, 1e-05
        %v5260 = vadd.f32 %v5256, 1e-05
        %v5261 = vadd.f32 %v5257, 1e-05
        %v5262 = vrsqrt.pop %v5258
        %v5263 = vrsqrt.pop %v5259
        %v5264 = vrsqrt.pop %v5260
        %v5265 = vrsqrt.pop %v5261
        %v5266 = vmul.f32 %v5186, %v5262
        %v5267 = vmul.f32 %v5187, %v5263
        %v5268 = vmul.f32 %v5188, %v5264
        %v5269 = vmul.f32 %v5189, %v5265
        %v5270 = vmul.f32 %v5190, %v5262
        %v5271 = vmul.f32 %v5191, %v5263
        %v5272 = vmul.f32 %v5192, %v5264
        %v5273 = vmul.f32 %v5193, %v5265
        %v5274 = vmul.f32 %v5194, %v5262
        %v5275 = vmul.f32 %v5195, %v5263
        %v5276 = vmul.f32 %v5196, %v5264
        %v5277 = vmul.f32 %v5197, %v5265
        %v5278 = vmul.f32 %v5198, %v5262
        %v5279 = vmul.f32 %v5199, %v5263
        %v5280 = vmul.f32 %v5200, %v5264
        %v5281 = vmul.f32 %v5201, %v5265
        %5283 = vset.pattern.permute.xlu0 0
        %5284 = vperm.xlu0 %5283, %v4993
        %v5285 = vpop.permute.xlu0 %5284
        %5288 = vset.pattern.permute.xlu0 0
        %5289 = vperm.xlu0 %5288, %v4994
        %v5290 = vpop.permute.xlu0 %5289
        %5293 = vset.pattern.permute.xlu0 0
        %5294 = vperm.xlu0 %5293, %v4995
        %v5295 = vpop.permute.xlu0 %5294
        %5298 = vset.pattern.permute.xlu0 0
        %5299 = vperm.xlu0 %5298, %v4996
        %v5300 = vpop.permute.xlu0 %5299
        %5303 = vset.pattern.permute.xlu0 0
        %5304 = vperm.xlu0 %5303, %v4997
        %v5305 = vpop.permute.xlu0 %5304
        %5308 = vset.pattern.permute.xlu0 0
        %5309 = vperm.xlu0 %5308, %v4998
        %v5310 = vpop.permute.xlu0 %5309
        %5313 = vset.pattern.permute.xlu0 0
        %5314 = vperm.xlu0 %5313, %v4999
        %v5315 = vpop.permute.xlu0 %5314
        %5318 = vset.pattern.permute.xlu0 0
        %5319 = vperm.xlu0 %5318, %v5000
        %v5320 = vpop.permute.xlu0 %5319
        %v5322 = vmul.f32 %v5130, %v5285
        %v5323 = vmul.f32 %v5131, %v5285
        %v5324 = vmul.f32 %v5132, %v5285
        %v5325 = vmul.f32 %v5133, %v5285
        %v5326 = vmul.f32 %v5134, %v5290
        %v5327 = vmul.f32 %v5135, %v5290
        %v5328 = vmul.f32 %v5136, %v5290
        %v5329 = vmul.f32 %v5137, %v5290
        %v5330 = vmul.f32 %v5138, %v5295
        %v5331 = vmul.f32 %v5139, %v5295
        %v5332 = vmul.f32 %v5140, %v5295
        %v5333 = vmul.f32 %v5141, %v5295
        %v5334 = vmul.f32 %v5142, %v5300
        %v5335 = vmul.f32 %v5143, %v5300
        %v5336 = vmul.f32 %v5144, %v5300
        %v5337 = vmul.f32 %v5145, %v5300
        %v5338 = vmul.f32 %v5266, %v5305
        %v5339 = vmul.f32 %v5267, %v5305
        %v5340 = vmul.f32 %v5268, %v5305
        %v5341 = vmul.f32 %v5269, %v5305
        %v5342 = vmul.f32 %v5270, %v5310
        %v5343 = vmul.f32 %v5271, %v5310
        %v5344 = vmul.f32 %v5272, %v5310
        %v5345 = vmul.f32 %v5273, %v5310
        %v5346 = vmul.f32 %v5274, %v5315
        %v5347 = vmul.f32 %v5275, %v5315
        %v5348 = vmul.f32 %v5276, %v5315
        %v5349 = vmul.f32 %v5277, %v5315
        %v5350 = vmul.f32 %v5278, %v5320
        %v5351 = vmul.f32 %v5279, %v5320
        %v5352 = vmul.f32 %v5280, %v5320
        %v5353 = vmul.f32 %v5281, %v5320
        %5355 = vset.pattern.permute.xlu0 0
        %5356 = vperm.xlu0 %5355, %v5002
        %v5357 = vpop.permute.xlu0 %5356
        %5360 = vset.pattern.permute.xlu0 0
        %5361 = vperm.xlu0 %5360, %v5003
        %v5362 = vpop.permute.xlu0 %5361
        %5365 = vset.pattern.permute.xlu0 0
        %5366 = vperm.xlu0 %5365, %v5004
        %v5367 = vpop.permute.xlu0 %5366
        %5370 = vset.pattern.permute.xlu0 0
        %5371 = vperm.xlu0 %5370, %v5005
        %v5372 = vpop.permute.xlu0 %5371
        %5375 = vset.pattern.permute.xlu0 0
        %5376 = vperm.xlu0 %5375, %v5006
        %v5377 = vpop.permute.xlu0 %5376
        %5380 = vset.pattern.permute.xlu0 0
        %5381 = vperm.xlu0 %5380, %v5007
        %v5382 = vpop.permute.xlu0 %5381
        %5385 = vset.pattern.permute.xlu0 0
        %5386 = vperm.xlu0 %5385, %v5008
        %v5387 = vpop.permute.xlu0 %5386
        %5390 = vset.pattern.permute.xlu0 0
        %5391 = vperm.xlu0 %5390, %v5009
        %v5392 = vpop.permute.xlu0 %5391
        %v5394 = vadd.f32 %v5322, %v5357
        %v5395 = vadd.f32 %v5323, %v5357
        %v5396 = vadd.f32 %v5324, %v5357
        %v5397 = vadd.f32 %v5325, %v5357
        %v5398 = vadd.f32 %v5326, %v5362
        %v5399 = vadd.f32 %v5327, %v5362
        %v5400 = vadd.f32 %v5328, %v5362
        %v5401 = vadd.f32 %v5329, %v5362
        %v5402 = vadd.f32 %v5330, %v5367
        %v5403 = vadd.f32 %v5331, %v5367
        %v5404 = vadd.f32 %v5332, %v5367
        %v5405 = vadd.f32 %v5333, %v5367
        %v5406 = vadd.f32 %v5334, %v5372
        %v5407 = vadd.f32 %v5335, %v5372
        %v5408 = vadd.f32 %v5336, %v5372
        %v5409 = vadd.f32 %v5337, %v5372
        %v5410 = vadd.f32 %v5338, %v5377
        %v5411 = vadd.f32 %v5339, %v5377
        %v5412 = vadd.f32 %v5340, %v5377
        %v5413 = vadd.f32 %v5341, %v5377
        %v5414 = vadd.f32 %v5342, %v5382
        %v5415 = vadd.f32 %v5343, %v5382
        %v5416 = vadd.f32 %v5344, %v5382
        %v5417 = vadd.f32 %v5345, %v5382
        %v5418 = vadd.f32 %v5346, %v5387
        %v5419 = vadd.f32 %v5347, %v5387
        %v5420 = vadd.f32 %v5348, %v5387
        %v5421 = vadd.f32 %v5349, %v5387
        %v5422 = vadd.f32 %v5350, %v5392
        %v5423 = vadd.f32 %v5351, %v5392
        %v5424 = vadd.f32 %v5352, %v5392
        %v5425 = vadd.f32 %v5353, %v5392
        %v5426 = vadd.f32 %v5394, %v3830
        %v5427 = vadd.f32 %v5395, %v3831
        %v5428 = vadd.f32 %v5396, %v3832
        %v5429 = vadd.f32 %v5397, %v3833
        %v5430 = vadd.f32 %v5398, %v3834
        %v5431 = vadd.f32 %v5399, %v3835
        %v5432 = vadd.f32 %v5400, %v3836
        %v5433 = vadd.f32 %v5401, %v3837
        %v5434 = vadd.f32 %v5402, %v3838
        %v5435 = vadd.f32 %v5403, %v3839
        %v5436 = vadd.f32 %v5404, %v3840
        %v5437 = vadd.f32 %v5405, %v3841
        %v5438 = vadd.f32 %v5406, %v3842
        %v5439 = vadd.f32 %v5407, %v3843
        %v5440 = vadd.f32 %v5408, %v3844
        %v5441 = vadd.f32 %v5409, %v3845
        %v5442 = vadd.f32 %v5410, %v3846
        %v5443 = vadd.f32 %v5411, %v3847
        %v5444 = vadd.f32 %v5412, %v3848
        %v5445 = vadd.f32 %v5413, %v3849
        %v5446 = vadd.f32 %v5414, %v3850
        %v5447 = vadd.f32 %v5415, %v3851
        %v5448 = vadd.f32 %v5416, %v3852
        %v5449 = vadd.f32 %v5417, %v3853
        %v5450 = vadd.f32 %v5418, %v3854
        %v5451 = vadd.f32 %v5419, %v3855
        %v5452 = vadd.f32 %v5420, %v3856
        %v5453 = vadd.f32 %v5421, %v3857
        %v5454 = vadd.f32 %v5422, %v3858
        %v5455 = vadd.f32 %v5423, %v3859
        %v5456 = vadd.f32 %v5424, %v3860
        %v5457 = vadd.f32 %v5425, %v3861
        %s5458 = sld [smem:[#allocation3 + $0x101]]
        %v5459 = vmul.f32 %v5426, %v5426
        %v5460 = vmul.f32 %v5427, %v5427
        %v5461 = vmul.f32 %v5428, %v5428
        %v5462 = vmul.f32 %v5429, %v5429
        %v5463 = vmul.f32 %v5430, %v5430
        %v5464 = vmul.f32 %v5431, %v5431
        %v5465 = vmul.f32 %v5432, %v5432
        %v5466 = vmul.f32 %v5433, %v5433
        %v5467 = vmul.f32 %v5434, %v5434
        %v5468 = vmul.f32 %v5435, %v5435
        %v5469 = vmul.f32 %v5436, %v5436
        %v5470 = vmul.f32 %v5437, %v5437
        %v5471 = vmul.f32 %v5438, %v5438
        %v5472 = vmul.f32 %v5439, %v5439
        %v5473 = vmul.f32 %v5440, %v5440
        %v5474 = vmul.f32 %v5441, %v5441
        %v5475 = vmul.f32 %v5442, %v5442
        %v5476 = vmul.f32 %v5443, %v5443
        %v5477 = vmul.f32 %v5444, %v5444
        %v5478 = vmul.f32 %v5445, %v5445
        %v5479 = vmul.f32 %v5446, %v5446
        %v5480 = vmul.f32 %v5447, %v5447
        %v5481 = vmul.f32 %v5448, %v5448
        %v5482 = vmul.f32 %v5449, %v5449
        %v5483 = vmul.f32 %v5450, %v5450
        %v5484 = vmul.f32 %v5451, %v5451
        %v5485 = vmul.f32 %v5452, %v5452
        %v5486 = vmul.f32 %v5453, %v5453
        %v5487 = vmul.f32 %v5454, %v5454
        %v5488 = vmul.f32 %v5455, %v5455
        %v5489 = vmul.f32 %v5456, %v5456
        %v5490 = vmul.f32 %v5457, %v5457
        %v5491 = vadd.f32 %v5459, %v5475
        %v5492 = vadd.f32 %v5460, %v5476
        %v5493 = vadd.f32 %v5461, %v5477
        %v5494 = vadd.f32 %v5462, %v5478
        %v5495 = vadd.f32 %v5463, %v5479
        %v5496 = vadd.f32 %v5464, %v5480
        %v5497 = vadd.f32 %v5465, %v5481
        %v5498 = vadd.f32 %v5466, %v5482
        %v5499 = vadd.f32 %v5467, %v5483
        %v5500 = vadd.f32 %v5468, %v5484
        %v5501 = vadd.f32 %v5469, %v5485
        %v5502 = vadd.f32 %v5470, %v5486
        %v5503 = vadd.f32 %v5471, %v5487
        %v5504 = vadd.f32 %v5472, %v5488
        %v5505 = vadd.f32 %v5473, %v5489
        %v5506 = vadd.f32 %v5474, %v5490
        %v5507 = vadd.f32 %v5491, 1e-30
        %v5508 = vadd.f32 %v5492, 1e-30
        %v5509 = vadd.f32 %v5493, 1e-30
        %v5510 = vadd.f32 %v5494, 1e-30
        %v5511 = vadd.f32 %v5495, 1e-30
        %v5512 = vadd.f32 %v5496, 1e-30
        %v5513 = vadd.f32 %v5497, 1e-30
        %v5514 = vadd.f32 %v5498, 1e-30
        %v5515 = vadd.f32 %v5499, 1e-30
        %v5516 = vadd.f32 %v5500, 1e-30
        %v5517 = vadd.f32 %v5501, 1e-30
        %v5518 = vadd.f32 %v5502, 1e-30
        %v5519 = vadd.f32 %v5503, 1e-30
        %v5520 = vadd.f32 %v5504, 1e-30
        %v5521 = vadd.f32 %v5505, 1e-30
        %v5522 = vadd.f32 %v5506, 1e-30
        %v5523 = vrsqrt.pop %v5507
        %v5524 = vrsqrt.pop %v5508
        %v5525 = vrsqrt.pop %v5509
        %v5526 = vrsqrt.pop %v5510
        %v5527 = vrsqrt.pop %v5511
        %v5528 = vrsqrt.pop %v5512
        %v5529 = vrsqrt.pop %v5513
        %v5530 = vrsqrt.pop %v5514
        %v5531 = vrsqrt.pop %v5515
        %v5532 = vrsqrt.pop %v5516
        %v5533 = vrsqrt.pop %v5517
        %v5534 = vrsqrt.pop %v5518
        %v5535 = vrsqrt.pop %v5519
        %v5536 = vrsqrt.pop %v5520
        %v5537 = vrsqrt.pop %v5521
        %v5538 = vrsqrt.pop %v5522
        %v5539 = vmul.f32 %v5491, %v5523
        %v5540 = vmul.f32 %v5492, %v5524
        %v5541 = vmul.f32 %v5493, %v5525
        %v5542 = vmul.f32 %v5494, %v5526
        %v5543 = vmul.f32 %v5495, %v5527
        %v5544 = vmul.f32 %v5496, %v5528
        %v5545 = vmul.f32 %v5497, %v5529
        %v5546 = vmul.f32 %v5498, %v5530
        %v5547 = vmul.f32 %v5499, %v5531
        %v5548 = vmul.f32 %v5500, %v5532
        %v5549 = vmul.f32 %v5501, %v5533
        %v5550 = vmul.f32 %v5502, %v5534
        %v5551 = vmul.f32 %v5503, %v5535
        %v5552 = vmul.f32 %v5504, %v5536
        %v5553 = vmul.f32 %v5505, %v5537
        %v5554 = vmul.f32 %v5506, %v5538
        %v5555 = vstv %s5458
        %v5556 = vsub.f32 %v5539, %v5555
        %v5557 = vsub.f32 %v5540, %v5555
        %v5558 = vsub.f32 %v5541, %v5555
        %v5559 = vsub.f32 %v5542, %v5555
        %v5560 = vsub.f32 %v5543, %v5555
        %v5561 = vsub.f32 %v5544, %v5555
        %v5562 = vsub.f32 %v5545, %v5555
        %v5563 = vsub.f32 %v5546, %v5555
        %v5564 = vsub.f32 %v5547, %v5555
        %v5565 = vsub.f32 %v5548, %v5555
        %v5566 = vsub.f32 %v5549, %v5555
        %v5567 = vsub.f32 %v5550, %v5555
        %v5568 = vsub.f32 %v5551, %v5555
        %v5569 = vsub.f32 %v5552, %v5555
        %v5570 = vsub.f32 %v5553, %v5555
        %v5571 = vsub.f32 %v5554, %v5555
        %v5572 = vmax.f32 %v5556, 0.0
        %v5573 = vmax.f32 %v5557, 0.0
        %v5574 = vmax.f32 %v5558, 0.0
        %v5575 = vmax.f32 %v5559, 0.0
        %v5576 = vmax.f32 %v5560, 0.0
        %v5577 = vmax.f32 %v5561, 0.0
        %v5578 = vmax.f32 %v5562, 0.0
        %v5579 = vmax.f32 %v5563, 0.0
        %v5580 = vmax.f32 %v5564, 0.0
        %v5581 = vmax.f32 %v5565, 0.0
        %v5582 = vmax.f32 %v5566, 0.0
        %v5583 = vmax.f32 %v5567, 0.0
        %v5584 = vmax.f32 %v5568, 0.0
        %v5585 = vmax.f32 %v5569, 0.0
        %v5586 = vmax.f32 %v5570, 0.0
        %v5587 = vmax.f32 %v5571, 0.0
        %v5588 = vmul.f32 %v5572, %v5523
        %v5589 = vmul.f32 %v5573, %v5524
        %v5590 = vmul.f32 %v5574, %v5525
        %v5591 = vmul.f32 %v5575, %v5526
        %v5592 = vmul.f32 %v5576, %v5527
        %v5593 = vmul.f32 %v5577, %v5528
        %v5594 = vmul.f32 %v5578, %v5529
        %v5595 = vmul.f32 %v5579, %v5530
        %v5596 = vmul.f32 %v5580, %v5531
        %v5597 = vmul.f32 %v5581, %v5532
        %v5598 = vmul.f32 %v5582, %v5533
        %v5599 = vmul.f32 %v5583, %v5534
        %v5600 = vmul.f32 %v5584, %v5535
        %v5601 = vmul.f32 %v5585, %v5536
        %v5602 = vmul.f32 %v5586, %v5537
        %v5603 = vmul.f32 %v5587, %v5538
        %v5604 = vmul.f32 %v5426, %v5588
        %v5605 = vmul.f32 %v5427, %v5589
        %v5606 = vmul.f32 %v5428, %v5590
        %v5607 = vmul.f32 %v5429, %v5591
        %v5608 = vmul.f32 %v5430, %v5592
        %v5609 = vmul.f32 %v5431, %v5593
        %v5610 = vmul.f32 %v5432, %v5594
        %v5611 = vmul.f32 %v5433, %v5595
        %v5612 = vmul.f32 %v5434, %v5596
        %v5613 = vmul.f32 %v5435, %v5597
        %v5614 = vmul.f32 %v5436, %v5598
        %v5615 = vmul.f32 %v5437, %v5599
        %v5616 = vmul.f32 %v5438, %v5600
        %v5617 = vmul.f32 %v5439, %v5601
        %v5618 = vmul.f32 %v5440, %v5602
        %v5619 = vmul.f32 %v5441, %v5603
        %v5620 = vmul.f32 %v5442, %v5588
        %v5621 = vmul.f32 %v5443, %v5589
        %v5622 = vmul.f32 %v5444, %v5590
        %v5623 = vmul.f32 %v5445, %v5591
        %v5624 = vmul.f32 %v5446, %v5592
        %v5625 = vmul.f32 %v5447, %v5593
        %v5626 = vmul.f32 %v5448, %v5594
        %v5627 = vmul.f32 %v5449, %v5595
        %v5628 = vmul.f32 %v5450, %v5596
        %v5629 = vmul.f32 %v5451, %v5597
        %v5630 = vmul.f32 %v5452, %v5598
        %v5631 = vmul.f32 %v5453, %v5599
        %v5632 = vmul.f32 %v5454, %v5600
        %v5633 = vmul.f32 %v5455, %v5601
        %v5634 = vmul.f32 %v5456, %v5602
        %v5635 = vmul.f32 %v5457, %v5603
        %5636 = vst [vmem:[%s280] sm:$0xff] %v5604
        %5637 = vst [vmem:[%s280 + $0x8] sm:$0xff] %v5605
        %5638 = vst [vmem:[%s280 + $0x10] sm:$0xff] %v5606
        %5639 = vst [vmem:[%s280 + $0x18] sm:$0xff] %v5607
        %5640 = vst [vmem:[%s280 + $0x20] sm:$0xff] %v5608
        %5641 = vst [vmem:[%s280 + $0x28] sm:$0xff] %v5609
        %5642 = vst [vmem:[%s280 + $0x30] sm:$0xff] %v5610
        %5643 = vst [vmem:[%s280 + $0x38] sm:$0xff] %v5611
        %5644 = vst [vmem:[%s280 + $0x40] sm:$0xff] %v5612
        %5645 = vst [vmem:[%s280 + $0x48] sm:$0xff] %v5613
        %5646 = vst [vmem:[%s280 + $0x50] sm:$0xff] %v5614
        %5647 = vst [vmem:[%s280 + $0x58] sm:$0xff] %v5615
        %5648 = vst [vmem:[%s280 + $0x60] sm:$0xff] %v5616
        %5649 = vst [vmem:[%s280 + $0x68] sm:$0xff] %v5617
        %5650 = vst [vmem:[%s280 + $0x70] sm:$0xff] %v5618
        %5651 = vst [vmem:[%s280 + $0x78] sm:$0xff] %v5619
        %5652 = vst [vmem:[%s280 + $0x80] sm:$0xff] %v5620
        %5653 = vst [vmem:[%s280 + $0x88] sm:$0xff] %v5621
        %5654 = vst [vmem:[%s280 + $0x90] sm:$0xff] %v5622
        %5655 = vst [vmem:[%s280 + $0x98] sm:$0xff] %v5623
        %5656 = vst [vmem:[%s280 + $0xa0] sm:$0xff] %v5624
        %5657 = vst [vmem:[%s280 + $0xa8] sm:$0xff] %v5625
        %5658 = vst [vmem:[%s280 + $0xb0] sm:$0xff] %v5626
        %5659 = vst [vmem:[%s280 + $0xb8] sm:$0xff] %v5627
        %5660 = vst [vmem:[%s280 + $0xc0] sm:$0xff] %v5628
        %5661 = vst [vmem:[%s280 + $0xc8] sm:$0xff] %v5629
        %5662 = vst [vmem:[%s280 + $0xd0] sm:$0xff] %v5630
        %5663 = vst [vmem:[%s280 + $0xd8] sm:$0xff] %v5631
        %5664 = vst [vmem:[%s280 + $0xe0] sm:$0xff] %v5632
        %5665 = vst [vmem:[%s280 + $0xe8] sm:$0xff] %v5633
        %5666 = vst [vmem:[%s280 + $0xf0] sm:$0xff] %v5634
        %5667 = vst [vmem:[%s280 + $0xf8] sm:$0xff] %v5635
        %s5668 = sand.u32 %s119, 1
        %s5669 = sand.u32 %s119, 1
        %s5670 = smul.addr %s5669, 256
        %s5671 = scalar_lea.vmem [#allocation5], %s5670
        // Predicated region
        $region60: #{cv_resblock_stack_pallas.1} parent=54 // pred_check
          %p5672 = pneg %p129
        $region61: #{cv_resblock_stack_pallas.1} parent=54 // pred_check_branch
          %5674 = sbr.rel (%p5672) target = $region63
        $region62: #{cv_resblock_stack_pallas.1} parent=54 // pred_region
          %s5675 = smul.u32 4, %s22
          %s5676 = smul.addr %s5675, 8
          %s5677 = scalar_lea.vmem %s5, %s5676
          // Predicated region
          $region64: #{cv_resblock_stack_pallas.1} parent=62 // pred_check
            _
          $region65: #{cv_resblock_stack_pallas.1} parent=62 // pred_check_branch
            %5679 = sbr.rel (0) target = $region67
          $region66: #{cv_resblock_stack_pallas.1} parent=62 // pred_region
            // Predicated region
            $region68: #{cv_resblock_stack_pallas.1} parent=66 // pred_check
              _
            $region69: #{cv_resblock_stack_pallas.1} parent=66 // pred_check_branch
              %5681 = sbr.rel (0) target = $region71
            $region70: #{cv_resblock_stack_pallas.1} parent=66 // pred_region
              loop: start=0, step=1, limit=1
              $region72: #{cv_resblock_stack_pallas.1} parent=70 // loop_pre_header
                _
              $region73: #{cv_resblock_stack_pallas.1} parent=70 // loop_header
                %s5683 = sphi 0, %s5687
                %p5684 = scmp.ge.s32.totalorder %s5683, 1
                %s5688 = sphi %s5671, %s5671
                %s5689 = sphi %s5677, %s5677
              $region74: #{cv_resblock_stack_pallas.1} parent=70 // loop_header_branch
                %5686 = sbr.rel (%p5684) target = $region78
              $region75: #{cv_resblock_stack_pallas.1} parent=70 // loop_body
                %v5690 = vld [vmem:[%s5688] sm:$0xff]
                %5691 = vst [vmem:[%s5689] sm:$0xff] %v5690
                %v5692 = vld [vmem:[%s5688 + $0x8] sm:$0xff]
                %5693 = vst [vmem:[%s5689 + $0x8] sm:$0xff] %v5692
                %v5694 = vld [vmem:[%s5688 + $0x10] sm:$0xff]
                %5695 = vst [vmem:[%s5689 + $0x10] sm:$0xff] %v5694
                %v5696 = vld [vmem:[%s5688 + $0x18] sm:$0xff]
                %5697 = vst [vmem:[%s5689 + $0x18] sm:$0xff] %v5696
                %v5698 = vld [vmem:[%s5688 + $0x20] sm:$0xff]
                %5699 = vst [vmem:[%s5689 + $0x40] sm:$0xff] %v5698
                %v5700 = vld [vmem:[%s5688 + $0x28] sm:$0xff]
                %5701 = vst [vmem:[%s5689 + $0x48] sm:$0xff] %v5700
                %v5702 = vld [vmem:[%s5688 + $0x30] sm:$0xff]
                %5703 = vst [vmem:[%s5689 + $0x50] sm:$0xff] %v5702
                %v5704 = vld [vmem:[%s5688 + $0x38] sm:$0xff]
                %5705 = vst [vmem:[%s5689 + $0x58] sm:$0xff] %v5704
                %v5706 = vld [vmem:[%s5688 + $0x40] sm:$0xff]
                %5707 = vst [vmem:[%s5689 + $0x80] sm:$0xff] %v5706
                %v5708 = vld [vmem:[%s5688 + $0x48] sm:$0xff]
                %5709 = vst [vmem:[%s5689 + $0x88] sm:$0xff] %v5708
                %v5710 = vld [vmem:[%s5688 + $0x50] sm:$0xff]
                %5711 = vst [vmem:[%s5689 + $0x90] sm:$0xff] %v5710
                %v5712 = vld [vmem:[%s5688 + $0x58] sm:$0xff]
                %5713 = vst [vmem:[%s5689 + $0x98] sm:$0xff] %v5712
                %v5714 = vld [vmem:[%s5688 + $0x60] sm:$0xff]
                %5715 = vst [vmem:[%s5689 + $0xc0] sm:$0xff] %v5714
                %v5716 = vld [vmem:[%s5688 + $0x68] sm:$0xff]
                %5717 = vst [vmem:[%s5689 + $0xc8] sm:$0xff] %v5716
                %v5718 = vld [vmem:[%s5688 + $0x70] sm:$0xff]
                %5719 = vst [vmem:[%s5689 + $0xd0] sm:$0xff] %v5718
                %v5720 = vld [vmem:[%s5688 + $0x78] sm:$0xff]
                %5721 = vst [vmem:[%s5689 + $0xd8] sm:$0xff] %v5720
                %v5722 = vld [vmem:[%s5688 + $0x80] sm:$0xff]
                %5723 = vst [vmem:[%s5689 + $0x100] sm:$0xff] %v5722
                %v5724 = vld [vmem:[%s5688 + $0x88] sm:$0xff]
                %5725 = vst [vmem:[%s5689 + $0x108] sm:$0xff] %v5724
                %v5726 = vld [vmem:[%s5688 + $0x90] sm:$0xff]
                %5727 = vst [vmem:[%s5689 + $0x110] sm:$0xff] %v5726
                %v5728 = vld [vmem:[%s5688 + $0x98] sm:$0xff]
                %5729 = vst [vmem:[%s5689 + $0x118] sm:$0xff] %v5728
                %v5730 = vld [vmem:[%s5688 + $0xa0] sm:$0xff]
                %5731 = vst [vmem:[%s5689 + $0x140] sm:$0xff] %v5730
                %v5732 = vld [vmem:[%s5688 + $0xa8] sm:$0xff]
                %5733 = vst [vmem:[%s5689 + $0x148] sm:$0xff] %v5732
                %v5734 = vld [vmem:[%s5688 + $0xb0] sm:$0xff]
                %5735 = vst [vmem:[%s5689 + $0x150] sm:$0xff] %v5734
                %v5736 = vld [vmem:[%s5688 + $0xb8] sm:$0xff]
                %5737 = vst [vmem:[%s5689 + $0x158] sm:$0xff] %v5736
                %v5738 = vld [vmem:[%s5688 + $0xc0] sm:$0xff]
                %5739 = vst [vmem:[%s5689 + $0x180] sm:$0xff] %v5738
                %v5740 = vld [vmem:[%s5688 + $0xc8] sm:$0xff]
                %5741 = vst [vmem:[%s5689 + $0x188] sm:$0xff] %v5740
                %v5742 = vld [vmem:[%s5688 + $0xd0] sm:$0xff]
                %5743 = vst [vmem:[%s5689 + $0x190] sm:$0xff] %v5742
                %v5744 = vld [vmem:[%s5688 + $0xd8] sm:$0xff]
                %5745 = vst [vmem:[%s5689 + $0x198] sm:$0xff] %v5744
                %v5746 = vld [vmem:[%s5688 + $0xe0] sm:$0xff]
                %5747 = vst [vmem:[%s5689 + $0x1c0] sm:$0xff] %v5746
                %v5748 = vld [vmem:[%s5688 + $0xe8] sm:$0xff]
                %5749 = vst [vmem:[%s5689 + $0x1c8] sm:$0xff] %v5748
                %v5750 = vld [vmem:[%s5688 + $0xf0] sm:$0xff]
                %5751 = vst [vmem:[%s5689 + $0x1d0] sm:$0xff] %v5750
                %v5752 = vld [vmem:[%s5688 + $0xf8] sm:$0xff]
                %5753 = vst [vmem:[%s5689 + $0x1d8] sm:$0xff] %v5752
              $region76: #{cv_resblock_stack_pallas.1} parent=70 // loop_footer
                %s5687 = sadd.s32 1, %s5683
              $region77: #{cv_resblock_stack_pallas.1} parent=70 // loop_footer_branch
                %5682 = sbr.rel target = $region73
              $region78: #{cv_resblock_stack_pallas.1} parent=70 // loop_exit
                _
            $region71: #{cv_resblock_stack_pallas.1} parent=66 // pred_fallthru
              _
            // Predicated region
            $region79: #{cv_resblock_stack_pallas.1} parent=66 // pred_check
              _
            $region80: #{cv_resblock_stack_pallas.1} parent=66 // pred_check_branch
              %5755 = sbr.rel target = $region82
            $region81: #{cv_resblock_stack_pallas.1} parent=66 // pred_region
              _
            $region82: #{cv_resblock_stack_pallas.1} parent=66 // pred_fallthru
              _
          $region67: #{cv_resblock_stack_pallas.1} parent=62 // pred_fallthru
            _
          %5756 = vnop
        $region63: #{cv_resblock_stack_pallas.1} parent=54 // pred_fallthru
          _
      $region55: #{cv_resblock_stack_pallas.1} parent=5 // pred_fallthru
        _
      %p5757 = scmp.le.s32.totalorder 2, %s17
      // Predicated region
      $region83: #{cv_resblock_stack_pallas.1} parent=5 // pred_check
        %p5758 = pneg %p5757
      $region84: #{cv_resblock_stack_pallas.1} parent=5 // pred_check_branch
        %5760 = sbr.rel (%p5758) target = $region86
      $region85: #{cv_resblock_stack_pallas.1} parent=5 // pred_region
        %s5761 = ssub.s32 %s17, 2
        // Predicated region
        $region87: #{cv_resblock_stack_pallas.1} parent=85 // pred_check
          %p5762 = pneg %p135
        $region88: #{cv_resblock_stack_pallas.1} parent=85 // pred_check_branch
          %5764 = sbr.rel (%p5762) target = $region90
        $region89: #{cv_resblock_stack_pallas.1} parent=85 // pred_region
          %s5765 = sand.u32 %s120, 1
          %s5766 = sand.u32 %s120, 1
          %s5767 = smul.addr %s5766, 256
          %s5768 = scalar_lea.vmem [#allocation5], %s5767
        $region90: #{cv_resblock_stack_pallas.1} parent=85 // pred_fallthru
          _
      $region86: #{cv_resblock_stack_pallas.1} parent=5 // pred_fallthru
        _
    $region6: #{cv_resblock_stack_pallas.1} parent=1 // loop_footer
      %s21 = sadd.s32 1, %s17
    $region7: #{cv_resblock_stack_pallas.1} parent=1 // loop_footer_branch
      %16 = sbr.rel target = $region3
    $region8: #{cv_resblock_stack_pallas.1} parent=1 // loop_exit
      _

</llo_original>
